<compile_context>
chip_gen: v7x
topology: tpu7x:2x2x1
jax: 0.10.0
libtpu: 0.0.40
codegen_flags: <defaults>
</compile_context>

<pallas_src>
import functools

import jax
import jax.numpy as jnp
import numpy as np
from jax import lax
from jax.experimental import pallas as pl
from jax.experimental.pallas import tpu as pltpu

LEAKY_SLOPE = 0.01   # nn.LeakyReLU default
LN_EPS = 1e-5        # nn.LayerNorm default
LANE = 128           # TPU lane width
NEG_BIG = -1e30      # mask value for padded softmax columns

# Resident params + double-buffered x/out tiles must fit comfortably inside the
# scoped-VMEM default (32 MiB on v6e/v7x; v7x has only 64 MiB physical).
_VMEM_BUDGET_BYTES = 24 * 1024 * 1024


def _round_up(n, m):
    return ((n + m - 1) // m) * m


def _pad2(a, rows, cols):
    # NOTE: zero padding is a correctness invariant, not just layout plumbing:
    # the kernel's LayerNorm statistics and softmax masking rely on padded
    # weight columns / biases / gamma / beta being EXACTLY zero.
    r, c = a.shape
    return jnp.pad(a, ((0, rows - r), (0, cols - c)))


def _device_kind():
    try:
        return jax.devices()[0].device_kind.lower()
    except Exception:
        return ""


def _default_batch_tile():
    kind = _device_kind()
    if "v5" in kind:
        # v5e MXU is 4x128x128: (128,128,128) matmuls already map perfectly and
        # a 256-row tile only doubles f32 vreg pressure.
        return 128
    # v6e / v7x MXUs are 2x256x256: 256-row LHS tiles fill the array.
    return 256


def base_mlp_kernel(hidden_true, out_true, n_hidden, x_ref, *refs):
    """Fused MLP forward for one batch tile.

    refs layout (all lane-padded to multiples of 128, zero padding):
      for i in range(n_hidden): w_i (bf16), b_i, gamma_i, beta_i
      then: w_last (bf16), b_last, out_ref
    hidden_true / out_true are the TRUE (unpadded) feature widths.
    """
    del hidden_true  # true widths only enter via 1/d constants below
    out_ref = refs[-1]
    p = refs[:-1]

    h = x_ref[...]  # bf16 (tb, d_in_pad); padded cols are exactly 0

    idx = 0
    for li in range(n_hidden):
        w, b, g, be = p[idx], p[idx + 1], p[idx + 2], p[idx + 3]
        idx += 4
        d = float(_HIDDEN_TRUE_STATIC[li])
        # Linear (MXU, bf16 inputs, f32 accumulation). Padded output cols == 0
        # exactly because padded weight cols and biases are 0.
        z = jnp.dot(h, w[...], preferred_element_type=jnp.float32) + b[...]
        # Mask-free LayerNorm over the TRUE width d: padded cols contribute 0 to
        # both sum(z) and sum(z*z), so no iota/select is needed.
        inv_d = 1.0 / d
        mu = jnp.sum(z, axis=-1, keepdims=True) * inv_d
        ex2 = jnp.sum(z * z, axis=-1, keepdims=True) * inv_d
        var = jnp.maximum(ex2 - mu * mu, 0.0)  # guard tiny negative rounding
        hn = (z - mu) * lax.rsqrt(var + LN_EPS) * g[...] + be[...]
        # Padded cols: (0 - mu) * rsqrt * gamma(=0) + beta(=0) == 0 exactly.
        # LeakyReLU (keeps padded cols at 0).
        hf = jnp.where(hn >= 0, hn, LEAKY_SLOPE * hn)
        h = hf.astype(jnp.bfloat16)

    # Final Linear
    w, b = p[idx], p[idx + 1]
    logits = jnp.dot(h, w[...], preferred_element_type=jnp.float32) + b[...]

    # Softmax over the TRUE output width only (dim=1 of the 2-D input).
    col = lax.broadcasted_iota(jnp.int32, logits.shape, 1)
    logits = jnp.where(col < out_true, logits, NEG_BIG)
    m = jnp.max(logits, axis=-1, keepdims=True)
    e = jnp.exp(logits - m)
    s = jnp.sum(e, axis=-1, keepdims=True)
    # Exact divide: s is only (tb, 1), so exact reciprocal is essentially free
    # and keeps rows summing to 1 within f32 rounding.
    out_ref[...] = (e / s).astype(out_ref.dtype)


# Static per-layer true widths, captured at trace time via functools.partial
# closure substitution (set in base_mlp_forward before tracing).
_HIDDEN_TRUE_STATIC = ()


def base_mlp_forward(x, params, *, batch_tile=None):
    """x: (B, layer_sizes[0]) float32.  params: flat list matching kernel order
    ([w, b, gamma, beta] per hidden layer, then [w, b]).  Returns (B, out_dim) f32.
    """
    global _HIDDEN_TRUE_STATIC
    B, d_in = x.shape
    n_linear = (len(params) - 2) // 4 + 1
    n_hidden = n_linear - 1

    # --- lane-pad parameters (zeros) and cast weights to bf16 once ---
    hidden_true = []
    padded = []
    d_prev_p = _round_up(d_in, LANE)
    idx = 0
    for _ in range(n_hidden):
        w, b, g, be = params[idx:idx + 4]
        idx += 4
        d_out = w.shape[1]
        d_out_p = _round_up(d_out, LANE)
        padded += [
            _pad2(w, d_prev_p, d_out_p).astype(jnp.bfloat16),
            _pad2(b, 1, d_out_p),
            _pad2(g, 1, d_out_p),
            _pad2(be, 1, d_out_p),
        ]
        hidden_true.append(d_out)
        d_prev_p = d_out_p
    w, b = params[idx], params[idx + 1]
    out_true = w.shape[1]
    out_p = _round_up(out_true, LANE)
    padded += [_pad2(w, d_prev_p, out_p).astype(jnp.bfloat16), _pad2(b, 1, out_p)]

    # --- generation-aware batch tile / grid selection ---
    kind = _device_kind()
    tb = batch_tile if batch_tile is not None else _default_batch_tile()
    tb = min(tb, max(LANE, _round_up(B, LANE)))   # don't over-pad tiny batches
    B_pad = _round_up(B, tb)
    if "v7" in kind and B_pad // tb == 1 and tb >= 2 * LANE:
        # v7x has 2 TensorCores: keep >= 2 "parallel" grid steps so the batch
        # axis shards across both cores instead of serializing on one.
        tb //= 2
        B_pad = _round_up(B, tb)
    grid = (B_pad // tb,)

    # --- VMEM budget check for the resident-weight scheme ---
    d_in_p = _round_up(d_in, LANE)
    resident_bytes = sum(int(np.prod(a.shape)) * a.dtype.itemsize for a in padded)
    stream_bytes = 2 * (tb * d_in_p * 2 + tb * out_p * 4)   # double-buffered x/out
    if resident_bytes + stream_bytes > _VMEM_BUDGET_BYTES:
        # TODO(synk): for large hidden dims, tile the big layers over a K/N
        # "arbitrary" grid axis with an f32 accumulator scratch instead of
        # holding every weight matrix resident in VMEM (v7x has only 64 MiB).
        raise ValueError(
            f"Resident params ({resident_bytes/2**20:.1f} MiB) + streaming tiles "
            f"exceed the {_VMEM_BUDGET_BYTES/2**20:.0f} MiB VMEM budget; "
            "shrink batch_tile or tile the weight matrices.")

    # --- pad batch up to a tile multiple (handles ragged B) and cast x to bf16.
    # The pad and the bf16 cast fuse into a single XLA op; padded rows are zero
    # and are sliced away below.  (Negligible at this batch size.) ---
    x_p = jnp.pad(x, ((0, B_pad - B), (0, d_in_p - d_in))).astype(jnp.bfloat16)

    # --- BlockSpecs ---
    in_specs = [pl.BlockSpec((tb, d_in_p), lambda i: (i, 0))]
    for arr in padded:
        # Constant block index across the grid -> resident; single-buffer it.
        in_specs.append(
            pl.BlockSpec(arr.shape, lambda i: (0, 0), pipeline_mode=pl.Buffered(1)))
    out_specs = pl.BlockSpec((tb, out_p), lambda i: (i, 0))

    _HIDDEN_TRUE_STATIC = tuple(hidden_true)
    kernel = functools.partial(base_mlp_kernel, tuple(hidden_true), out_true, n_hidden)
    out_full = pl.pallas_call(
        kernel,
        out_shape=jax.ShapeDtypeStruct((B_pad, out_p), jnp.float32),
        grid_spec=pltpu.PrefetchScalarGridSpec(
            num_scalar_prefetch=0,
            grid=grid,
            in_specs=in_specs,
            out_specs=out_specs,
        ),
        compiler_params=pltpu.CompilerParams(
            dimension_semantics=("parallel",)),
    )(x_p, *padded)

    return out_full[:B, :out_true]


def init_params(key, layer_sizes):
    """Deterministic synthetic init. Kaiming-uniform-like for Linear; random
    (rather than 1/0) LayerNorm affine so the kernel path is non-trivial.
    Weights stored (d_in, d_out); biases/gamma/beta stored as (1, d) rows."""
    params = []
    n = len(layer_sizes) - 1
    for i in range(n):
        d_in, d_out = layer_sizes[i], layer_sizes[i + 1]
        key, kw, kb, kg, kbe = jax.random.split(key, 5)
        bound = 1.0 / np.sqrt(d_in)
        w = jax.random.uniform(kw, (d_in, d_out), jnp.float32, -bound, bound)
        b = jax.random.uniform(kb, (1, d_out), jnp.float32, -bound, bound)
        params += [w, b]
        if i < n - 1:
            g = 1.0 + 0.1 * jax.random.normal(kg, (1, d_out), jnp.float32)
            be = 0.1 * jax.random.normal(kbe, (1, d_out), jnp.float32)
            params += [g, be]
    return params


def reference_forward(x, params, n_linear):
    """Pure f32 JAX reference matching the PyTorch module."""
    h = x
    idx = 0
    for _ in range(n_linear - 1):
        w, b, g, be = params[idx], params[idx + 1], params[idx + 2], params[idx + 3]
        idx += 4
        h = h @ w + b
        mu = jnp.mean(h, axis=-1, keepdims=True)
        var = jnp.mean((h - mu) ** 2, axis=-1, keepdims=True)
        h = (h - mu) / jnp.sqrt(var + LN_EPS) * g + be
        h = jnp.where(h >= 0, h, LEAKY_SLOPE * h)
    w, b = params[idx], params[idx + 1]
    logits = h @ w + b
    return jax.nn.softmax(logits, axis=1)


if __name__ == "__main__":
    # TODO(synk): str_to_label / predict() are host-side Python (dict lookups,
    # argmax over a row) and are intentionally not part of the kernel.
    layer_sizes = [32, 64, 48, 16]   # BaseMLP([32, 64, 48, 16])
    batch = 500                      # non-multiple of the tile on purpose

    key = jax.random.PRNGKey(0)
    key, kx = jax.random.split(key)
    x = jax.random.normal(kx, (batch, layer_sizes[0]), jnp.float32)
    params = init_params(key, layer_sizes)

    out = base_mlp_forward(x, params)        # generation-aware tile selection
    out = jax.block_until_ready(out)
    assert out.shape == (batch, layer_sizes[-1])

    ref = reference_forward(x, params, len(layer_sizes) - 1)
    # bf16 matmul inputs -> loosened tolerance vs the f32 reference.
    np.testing.assert_allclose(np.asarray(out), np.asarray(ref), rtol=5e-2, atol=1e-2)
    # rows of a softmax must sum to 1 (exact divide in the kernel -> f32 rounding)
    np.testing.assert_allclose(np.asarray(out).sum(axis=1), np.ones(batch),
                               rtol=0, atol=1e-5)

    print("KERNEL_OK")
</pallas_src>

<mosaic_0001>
module attributes {stable_mosaic.version = 11 : i64} {
  func.func @base_mlp_kernel(%arg0: i32, %arg1: memref<256x128xbf16, #tpu.memory_space<vmem>>, %arg2: memref<128x128xbf16, #tpu.memory_space<vmem>>, %arg3: memref<1x128xf32, #tpu.memory_space<vmem>>, %arg4: memref<1x128xf32, #tpu.memory_space<vmem>>, %arg5: memref<1x128xf32, #tpu.memory_space<vmem>>, %arg6: memref<128x128xbf16, #tpu.memory_space<vmem>>, %arg7: memref<1x128xf32, #tpu.memory_space<vmem>>, %arg8: memref<1x128xf32, #tpu.memory_space<vmem>>, %arg9: memref<1x128xf32, #tpu.memory_space<vmem>>, %arg10: memref<128x128xbf16, #tpu.memory_space<vmem>>, %arg11: memref<1x128xf32, #tpu.memory_space<vmem>>, %arg12: memref<256x128xf32, #tpu.memory_space<vmem>>) attributes {dimension_semantics = [#tpu.dimension_semantics<parallel>], iteration_bounds = array<i64: 2>, scalar_prefetch = 0 : i64, scratch_operands = 0 : i64, tpu.core_type = #tpu.core_type<tc>, window_params = [{transform_indices = @transform_0, window_bounds = array<i64: 256, 128>}, {pipeline_mode = #tpu.pipeline_mode<synchronous>, transform_indices = @transform_1, window_bounds = array<i64: 128, 128>}, {pipeline_mode = #tpu.pipeline_mode<synchronous>, transform_indices = @transform_2, window_bounds = array<i64: 1, 128>}, {pipeline_mode = #tpu.pipeline_mode<synchronous>, transform_indices = @transform_3, window_bounds = array<i64: 1, 128>}, {pipeline_mode = #tpu.pipeline_mode<synchronous>, transform_indices = @transform_4, window_bounds = array<i64: 1, 128>}, {pipeline_mode = #tpu.pipeline_mode<synchronous>, transform_indices = @transform_5, window_bounds = array<i64: 128, 128>}, {pipeline_mode = #tpu.pipeline_mode<synchronous>, transform_indices = @transform_6, window_bounds = array<i64: 1, 128>}, {pipeline_mode = #tpu.pipeline_mode<synchronous>, transform_indices = @transform_7, window_bounds = array<i64: 1, 128>}, {pipeline_mode = #tpu.pipeline_mode<synchronous>, transform_indices = @transform_8, window_bounds = array<i64: 1, 128>}, {pipeline_mode = #tpu.pipeline_mode<synchronous>, transform_indices = @transform_9, window_bounds = array<i64: 128, 128>}, {pipeline_mode = #tpu.pipeline_mode<synchronous>, transform_indices = @transform_10, window_bounds = array<i64: 1, 128>}, {transform_indices = @transform_11, window_bounds = array<i64: 256, 128>}]} {
    %c0 = arith.constant 0 : index
    %c0_0 = arith.constant 0 : index
    %0 = vector.load %arg1[%c0, %c0_0] : memref<256x128xbf16, #tpu.memory_space<vmem>>, vector<256x128xbf16>
    %c0_1 = arith.constant 0 : index
    %c0_2 = arith.constant 0 : index
    %1 = vector.load %arg2[%c0_1, %c0_2] : memref<128x128xbf16, #tpu.memory_space<vmem>>, vector<128x128xbf16>
    %cst = arith.constant dense<0.000000e+00> : vector<256x128xf32>
    %2 = tpu.matmul %0, %1, %cst {dimension_numbers = #tpu.dot_dimension_numbers<[1], [0], [0], [1], [0, 0, 1, 1], [], []>} : vector<256x128xbf16>, vector<128x128xbf16>, vector<256x128xf32> -> vector<256x128xf32>
    %c0_3 = arith.constant 0 : index
    %c0_4 = arith.constant 0 : index
    %3 = vector.load %arg3[%c0_3, %c0_4] : memref<1x128xf32, #tpu.memory_space<vmem>>, vector<1x128xf32>
    %4 = vector.broadcast %3 : vector<1x128xf32> to vector<256x128xf32>
    %5 = arith.addf %2, %4 : vector<256x128xf32>
    %cst_5 = arith.constant dense<0.000000e+00> : vector<256xf32>
    %6 = vector.multi_reduction <add>, %5, %cst_5 [1] : vector<256x128xf32> to vector<256xf32>
    %7 = vector.shape_cast %6 : vector<256xf32> to vector<256x1xf32>
    %cst_6 = arith.constant 1.562500e-02 : f32
    %8 = vector.broadcast %cst_6 : f32 to vector<256x1xf32>
    %9 = arith.mulf %7, %8 : vector<256x1xf32>
    %10 = arith.mulf %5, %5 : vector<256x128xf32>
    %cst_7 = arith.constant dense<0.000000e+00> : vector<256xf32>
    %11 = vector.multi_reduction <add>, %10, %cst_7 [1] : vector<256x128xf32> to vector<256xf32>
    %12 = vector.shape_cast %11 : vector<256xf32> to vector<256x1xf32>
    %cst_8 = arith.constant 1.562500e-02 : f32
    %13 = vector.broadcast %cst_8 : f32 to vector<256x1xf32>
    %14 = arith.mulf %12, %13 : vector<256x1xf32>
    %15 = arith.mulf %9, %9 : vector<256x1xf32>
    %16 = arith.subf %14, %15 : vector<256x1xf32>
    %cst_9 = arith.constant 0.000000e+00 : f32
    %17 = vector.broadcast %cst_9 : f32 to vector<256x1xf32>
    %18 = arith.maximumf %16, %17 : vector<256x1xf32>
    %19 = vector.broadcast %9 : vector<256x1xf32> to vector<256x128xf32>
    %20 = arith.subf %5, %19 : vector<256x128xf32>
    %cst_10 = arith.constant 9.99999974E-6 : f32
    %21 = vector.broadcast %cst_10 : f32 to vector<256x1xf32>
    %22 = arith.addf %18, %21 : vector<256x1xf32>
    %23 = math.rsqrt %22 : vector<256x1xf32>
    %24 = vector.broadcast %23 : vector<256x1xf32> to vector<256x128xf32>
    %25 = arith.mulf %20, %24 : vector<256x128xf32>
    %c0_11 = arith.constant 0 : index
    %c0_12 = arith.constant 0 : index
    %26 = vector.load %arg4[%c0_11, %c0_12] : memref<1x128xf32, #tpu.memory_space<vmem>>, vector<1x128xf32>
    %27 = vector.broadcast %26 : vector<1x128xf32> to vector<256x128xf32>
    %28 = arith.mulf %25, %27 : vector<256x128xf32>
    %c0_13 = arith.constant 0 : index
    %c0_14 = arith.constant 0 : index
    %29 = vector.load %arg5[%c0_13, %c0_14] : memref<1x128xf32, #tpu.memory_space<vmem>>, vector<1x128xf32>
    %30 = vector.broadcast %29 : vector<1x128xf32> to vector<256x128xf32>
    %31 = arith.addf %28, %30 : vector<256x128xf32>
    %cst_15 = arith.constant 0.000000e+00 : f32
    %32 = vector.broadcast %cst_15 : f32 to vector<256x128xf32>
    %33 = arith.cmpf oge, %31, %32 : vector<256x128xf32>
    %cst_16 = arith.constant 0.00999999977 : f32
    %34 = vector.broadcast %cst_16 : f32 to vector<256x128xf32>
    %35 = arith.mulf %34, %31 : vector<256x128xf32>
    %36 = arith.select %33, %31, %35 : vector<256x128xi1>, vector<256x128xf32>
    %37 = arith.truncf %36 : vector<256x128xf32> to vector<256x128xbf16>
    %c0_17 = arith.constant 0 : index
    %c0_18 = arith.constant 0 : index
    %38 = vector.load %arg6[%c0_17, %c0_18] : memref<128x128xbf16, #tpu.memory_space<vmem>>, vector<128x128xbf16>
    %cst_19 = arith.constant dense<0.000000e+00> : vector<256x128xf32>
    %39 = tpu.matmul %37, %38, %cst_19 {dimension_numbers = #tpu.dot_dimension_numbers<[1], [0], [0], [1], [0, 0, 1, 1], [], []>} : vector<256x128xbf16>, vector<128x128xbf16>, vector<256x128xf32> -> vector<256x128xf32>
    %c0_20 = arith.constant 0 : index
    %c0_21 = arith.constant 0 : index
    %40 = vector.load %arg7[%c0_20, %c0_21] : memref<1x128xf32, #tpu.memory_space<vmem>>, vector<1x128xf32>
    %41 = vector.broadcast %40 : vector<1x128xf32> to vector<256x128xf32>
    %42 = arith.addf %39, %41 : vector<256x128xf32>
    %cst_22 = arith.constant dense<0.000000e+00> : vector<256xf32>
    %43 = vector.multi_reduction <add>, %42, %cst_22 [1] : vector<256x128xf32> to vector<256xf32>
    %44 = vector.shape_cast %43 : vector<256xf32> to vector<256x1xf32>
    %cst_23 = arith.constant 0.020833334 : f32
    %45 = vector.broadcast %cst_23 : f32 to vector<256x1xf32>
    %46 = arith.mulf %44, %45 : vector<256x1xf32>
    %47 = arith.mulf %42, %42 : vector<256x128xf32>
    %cst_24 = arith.constant dense<0.000000e+00> : vector<256xf32>
    %48 = vector.multi_reduction <add>, %47, %cst_24 [1] : vector<256x128xf32> to vector<256xf32>
    %49 = vector.shape_cast %48 : vector<256xf32> to vector<256x1xf32>
    %cst_25 = arith.constant 0.020833334 : f32
    %50 = vector.broadcast %cst_25 : f32 to vector<256x1xf32>
    %51 = arith.mulf %49, %50 : vector<256x1xf32>
    %52 = arith.mulf %46, %46 : vector<256x1xf32>
    %53 = arith.subf %51, %52 : vector<256x1xf32>
    %cst_26 = arith.constant 0.000000e+00 : f32
    %54 = vector.broadcast %cst_26 : f32 to vector<256x1xf32>
    %55 = arith.maximumf %53, %54 : vector<256x1xf32>
    %56 = vector.broadcast %46 : vector<256x1xf32> to vector<256x128xf32>
    %57 = arith.subf %42, %56 : vector<256x128xf32>
    %cst_27 = arith.constant 9.99999974E-6 : f32
    %58 = vector.broadcast %cst_27 : f32 to vector<256x1xf32>
    %59 = arith.addf %55, %58 : vector<256x1xf32>
    %60 = math.rsqrt %59 : vector<256x1xf32>
    %61 = vector.broadcast %60 : vector<256x1xf32> to vector<256x128xf32>
    %62 = arith.mulf %57, %61 : vector<256x128xf32>
    %c0_28 = arith.constant 0 : index
    %c0_29 = arith.constant 0 : index
    %63 = vector.load %arg8[%c0_28, %c0_29] : memref<1x128xf32, #tpu.memory_space<vmem>>, vector<1x128xf32>
    %64 = vector.broadcast %63 : vector<1x128xf32> to vector<256x128xf32>
    %65 = arith.mulf %62, %64 : vector<256x128xf32>
    %c0_30 = arith.constant 0 : index
    %c0_31 = arith.constant 0 : index
    %66 = vector.load %arg9[%c0_30, %c0_31] : memref<1x128xf32, #tpu.memory_space<vmem>>, vector<1x128xf32>
    %67 = vector.broadcast %66 : vector<1x128xf32> to vector<256x128xf32>
    %68 = arith.addf %65, %67 : vector<256x128xf32>
    %cst_32 = arith.constant 0.000000e+00 : f32
    %69 = vector.broadcast %cst_32 : f32 to vector<256x128xf32>
    %70 = arith.cmpf oge, %68, %69 : vector<256x128xf32>
    %cst_33 = arith.constant 0.00999999977 : f32
    %71 = vector.broadcast %cst_33 : f32 to vector<256x128xf32>
    %72 = arith.mulf %71, %68 : vector<256x128xf32>
    %73 = arith.select %70, %68, %72 : vector<256x128xi1>, vector<256x128xf32>
    %74 = arith.truncf %73 : vector<256x128xf32> to vector<256x128xbf16>
    %c0_34 = arith.constant 0 : index
    %c0_35 = arith.constant 0 : index
    %75 = vector.load %arg10[%c0_34, %c0_35] : memref<128x128xbf16, #tpu.memory_space<vmem>>, vector<128x128xbf16>
    %cst_36 = arith.constant dense<0.000000e+00> : vector<256x128xf32>
    %76 = tpu.matmul %74, %75, %cst_36 {dimension_numbers = #tpu.dot_dimension_numbers<[1], [0], [0], [1], [0, 0, 1, 1], [], []>} : vector<256x128xbf16>, vector<128x128xbf16>, vector<256x128xf32> -> vector<256x128xf32>
    %c0_37 = arith.constant 0 : index
    %c0_38 = arith.constant 0 : index
    %77 = vector.load %arg11[%c0_37, %c0_38] : memref<1x128xf32, #tpu.memory_space<vmem>>, vector<1x128xf32>
    %78 = vector.broadcast %77 : vector<1x128xf32> to vector<256x128xf32>
    %79 = arith.addf %76, %78 : vector<256x128xf32>
    %80 = tpu.iota {dimensions = array<i32: 1>} : vector<256x128xi32>
    %c16_i32 = arith.constant 16 : i32
    %81 = vector.broadcast %c16_i32 : i32 to vector<256x128xi32>
    %82 = arith.cmpi slt, %80, %81 : vector<256x128xi32>
    %cst_39 = arith.constant -1.000000e+30 : f32
    %83 = vector.broadcast %cst_39 : f32 to vector<256x128xf32>
    %84 = arith.select %82, %79, %83 : vector<256x128xi1>, vector<256x128xf32>
    %cst_40 = arith.constant dense<0xFF800000> : vector<256xf32>
    %85 = vector.multi_reduction <maximumf>, %84, %cst_40 [1] : vector<256x128xf32> to vector<256xf32>
    %86 = vector.shape_cast %85 : vector<256xf32> to vector<256x1xf32>
    %87 = vector.broadcast %86 : vector<256x1xf32> to vector<256x128xf32>
    %88 = arith.subf %84, %87 : vector<256x128xf32>
    %89 = math.exp %88 : vector<256x128xf32>
    %cst_41 = arith.constant dense<0.000000e+00> : vector<256xf32>
    %90 = vector.multi_reduction <add>, %89, %cst_41 [1] : vector<256x128xf32> to vector<256xf32>
    %91 = vector.shape_cast %90 : vector<256xf32> to vector<256x1xf32>
    %92 = vector.broadcast %91 : vector<256x1xf32> to vector<256x128xf32>
    %93 = arith.divf %89, %92 : vector<256x128xf32>
    %c0_42 = arith.constant 0 : index
    %c0_43 = arith.constant 0 : index
    %94 = vector.load %arg12[%c0_42, %c0_43] : memref<256x128xf32, #tpu.memory_space<vmem>>, vector<256x128xf32>
    tpu.vector_store %arg12[%c0_42, %c0_43], %93 {strides = array<i32>} : memref<256x128xf32, #tpu.memory_space<vmem>>, vector<256x128xf32>,
    return
  }
  func.func @transform_0(%arg0: i32) -> (i32, i32) {
    %c0_i32 = arith.constant 0 : i32
    %c0_i32_0 = arith.constant 0 : i32
    return %arg0, %c0_i32 : i32, i32
  }
  func.func @transform_1(%arg0: i32) -> (i32, i32) {
    %c0_i32 = arith.constant 0 : i32
    %c0_i32_0 = arith.constant 0 : i32
    %c0_i32_1 = arith.constant 0 : i32
    return %c0_i32, %c0_i32_0 : i32, i32
  }
  func.func @transform_2(%arg0: i32) -> (i32, i32) {
    %c0_i32 = arith.constant 0 : i32
    %c0_i32_0 = arith.constant 0 : i32
    %c0_i32_1 = arith.constant 0 : i32
    return %c0_i32, %c0_i32_0 : i32, i32
  }
  func.func @transform_3(%arg0: i32) -> (i32, i32) {
    %c0_i32 = arith.constant 0 : i32
    %c0_i32_0 = arith.constant 0 : i32
    %c0_i32_1 = arith.constant 0 : i32
    return %c0_i32, %c0_i32_0 : i32, i32
  }
  func.func @transform_4(%arg0: i32) -> (i32, i32) {
    %c0_i32 = arith.constant 0 : i32
    %c0_i32_0 = arith.constant 0 : i32
    %c0_i32_1 = arith.constant 0 : i32
    return %c0_i32, %c0_i32_0 : i32, i32
  }
  func.func @transform_5(%arg0: i32) -> (i32, i32) {
    %c0_i32 = arith.constant 0 : i32
    %c0_i32_0 = arith.constant 0 : i32
    %c0_i32_1 = arith.constant 0 : i32
    return %c0_i32, %c0_i32_0 : i32, i32
  }
  func.func @transform_6(%arg0: i32) -> (i32, i32) {
    %c0_i32 = arith.constant 0 : i32
    %c0_i32_0 = arith.constant 0 : i32
    %c0_i32_1 = arith.constant 0 : i32
    return %c0_i32, %c0_i32_0 : i32, i32
  }
  func.func @transform_7(%arg0: i32) -> (i32, i32) {
    %c0_i32 = arith.constant 0 : i32
    %c0_i32_0 = arith.constant 0 : i32
    %c0_i32_1 = arith.constant 0 : i32
    return %c0_i32, %c0_i32_0 : i32, i32
  }
  func.func @transform_8(%arg0: i32) -> (i32, i32) {
    %c0_i32 = arith.constant 0 : i32
    %c0_i32_0 = arith.constant 0 : i32
    %c0_i32_1 = arith.constant 0 : i32
    return %c0_i32, %c0_i32_0 : i32, i32
  }
  func.func @transform_9(%arg0: i32) -> (i32, i32) {
    %c0_i32 = arith.constant 0 : i32
    %c0_i32_0 = arith.constant 0 : i32
    %c0_i32_1 = arith.constant 0 : i32
    return %c0_i32, %c0_i32_0 : i32, i32
  }
  func.func @transform_10(%arg0: i32) -> (i32, i32) {
    %c0_i32 = arith.constant 0 : i32
    %c0_i32_0 = arith.constant 0 : i32
    %c0_i32_1 = arith.constant 0 : i32
    return %c0_i32, %c0_i32_0 : i32, i32
  }
  func.func @transform_11(%arg0: i32) -> (i32, i32) {
    %c0_i32 = arith.constant 0 : i32
    %c0_i32_0 = arith.constant 0 : i32
    return %arg0, %c0_i32 : i32, i32
  }
}

</mosaic_0001>

<llo_original>
// kernel: tpu_custom_call.1
$region0: #{tpu_custom_call.1}
  #allocation0 [shape = 'u32[]', space=smem, size = 0x4, offset = 0x4, fixed_abs, tag = 'smem constant byte address 0x4 - core index']
  #allocation1 [shape = 'u32[144,128]{1,0:T(1,128)}', space=vmem, size = 0x12000, scoped, tag = 'internal scratch']
  %s0 = inlined_call_operand.hbm [shape: bf16[512,128], index: 0, kind: input, shape index: {}]
  %s1 = inlined_call_operand.hbm [shape: bf16[128,128], index: 1, kind: input, shape index: {}]
  %s2 = inlined_call_operand.vmem [shape: f32[1,128], index: 2, kind: input, shape index: {}]
  %s3 = inlined_call_operand.vmem [shape: f32[1,128], index: 3, kind: input, shape index: {}]
  %s4 = inlined_call_operand.vmem [shape: f32[1,128], index: 4, kind: input, shape index: {}]
  %s5 = inlined_call_operand.hbm [shape: bf16[128,128], index: 5, kind: input, shape index: {}]
  %s6 = inlined_call_operand.vmem [shape: f32[1,128], index: 6, kind: input, shape index: {}]
  %s7 = inlined_call_operand.vmem [shape: f32[1,128], index: 7, kind: input, shape index: {}]
  %s8 = inlined_call_operand.vmem [shape: f32[1,128], index: 8, kind: input, shape index: {}]
  %s9 = inlined_call_operand.hbm [shape: bf16[128,128], index: 9, kind: input, shape index: {}]
  %s10 = inlined_call_operand.vmem [shape: f32[1,128], index: 10, kind: input, shape index: {}]
  %s11 = inlined_call_operand.hbm [shape: f32[512,128], index: 11, kind: output, shape index: {}]
  %s12 = sld [smem:[#allocation0]]
  $region93: #{tpu_custom_call.1} parent=0
    _
  %s14 = ssub.s32 1, %s12
  %s15 = scalar_select 0, %s14, %s12
  $region1: #{tpu_custom_call.1} parent=0
    #allocation2 [shape = 'u8[131072]{0}', space=vmem, size = 0x20000, scoped, tag = 'input window, operand 0']
    #allocation3 [shape = 's32[2]{0}', space=sflag, size = 0x8, scoped, tag = 'scoped memory for tpu_custom_call.1']
    #allocation4 [shape = 's32[2]{0}', space=sflag, size = 0x8, scoped, tag = 'scoped memory for tpu_custom_call.1']
    #allocation5 [shape = 'u8[32768]{0}', space=vmem, size = 0x8000, scoped, tag = 'input window, operand 1, single buffered']
    #allocation6 [shape = 's32[1]{0}', space=sflag, size = 0x4, scoped, tag = 'scoped memory for tpu_custom_call.1']
    #allocation7 [shape = 'u8[32768]{0}', space=vmem, size = 0x8000, scoped, tag = 'input window, operand 5, single buffered']
    #allocation8 [shape = 'u8[32768]{0}', space=vmem, size = 0x8000, scoped, tag = 'input window, operand 9, single buffered']
    #allocation9 [shape = 's32[1]{0}', space=sflag, size = 0x4, scoped, tag = 'scoped memory for tpu_custom_call.1']
    #allocation10 [shape = 'u8[262144]{0}', space=vmem, size = 0x40000, scoped, tag = 'output window, operand 0']
    %16 = vsyncpa [#allocation3], 0
    %s17 = scalar_lea.sflag [#allocation3], 1
    %18 = vsyncpa %s17, 0
    %19 = vsyncpa [#allocation6], 0
    %20 = vsyncpa [#allocation9], 0
    %21 = vsyncpa [#allocation4], 0
    %s22 = scalar_lea.sflag [#allocation4], 1
    %23 = vsyncpa %s22, 0
    loop: start=0, step=1, limit=4
    $region2: #{tpu_custom_call.1} parent=1 // loop_pre_header
      _
    $region3: #{tpu_custom_call.1} parent=1 // loop_header
      %s25 = sphi 0, %s29
      %p26 = scmp.ge.s32.totalorder %s25, 4
      %s35 = sphi 0, %s37
      %s38 = sphi 0, %s35
      %s39 = sphi 0, %s38
      %s55 = sphi 0, %s39
      %s59 = sphi 0, %s59
      %s61 = sphi 0, %s59
      %s62 = sphi 0, %s61
      %s76 = sphi 0, %s62
      %s80 = sphi 0, %s80
      %s82 = sphi 0, %s80
      %s83 = sphi 0, %s82
      %s97 = sphi 0, %s83
      %s101 = sphi 0, %s101
      %s103 = sphi 0, %s101
      %s104 = sphi 0, %s103
      %s118 = sphi 0, %s104
      %s122 = sphi 0, %s122
      %s124 = sphi 0, %s122
      %s125 = sphi 0, %s124
      %s139 = sphi 0, %s125
      %s143 = sphi 0, %s143
      %s145 = sphi 0, %s143
      %s146 = sphi 0, %s145
      %s160 = sphi 0, %s146
      %s164 = sphi 0, %s164
      %s166 = sphi 0, %s164
      %s167 = sphi 0, %s166
      %s181 = sphi 0, %s167
      %s185 = sphi 0, %s185
      %s187 = sphi 0, %s185
      %s188 = sphi 0, %s187
      %s202 = sphi 0, %s188
      %s206 = sphi 0, %s206
      %s208 = sphi 0, %s206
      %s209 = sphi 0, %s208
      %s223 = sphi 0, %s209
      %s227 = sphi 0, %s227
      %s229 = sphi 0, %s227
      %s230 = sphi 0, %s229
      %s244 = sphi 0, %s230
      %s248 = sphi 0, %s248
      %s250 = sphi 0, %s248
      %s251 = sphi 0, %s250
      %s265 = sphi 0, %s251
      %s271 = sphi 0, %s273
      %s274 = sphi 0, %s271
      %s275 = sphi 0, %s274
      %s291 = sphi 0, %s275
    $region4: #{tpu_custom_call.1} parent=1 // loop_header_branch
      %28 = sbr.rel (%p26) target = $region8
    $region5: #{tpu_custom_call.1} parent=1 // loop_body
      %s30 = ssub.s32 %s25, 1
      %s31 = ssub.s32 %s25, 2
      %s32 = sadd.s32 %s25, 1
      %s33 = ssub.s32 %s25, %s32
      %p34 = scmp.eq.s32.totalorder %s33, 0
      %s36 = sadd.s32 %s35, 1
      %s37 = scalar_select %p34, %s35, %s36
      %p40 = pneg %p34
      %p41 = scmp.eq.s32.totalorder %s25, 1
      %p42 = por %p40, %p41
      %p43 = scmp.ne.s32.totalorder %s35, %s38
      %p44 = scmp.eq.s32.totalorder %s25, 0
      %p45 = por %p43, %p44
      %p46 = scmp.ne.s32.totalorder %s35, %s38
      %p47 = scmp.eq.s32.totalorder %s30, 1
      %p48 = por %p46, %p47
      %p49 = scmp.ne.s32.totalorder %s38, %s39
      %p50 = scmp.eq.s32.totalorder %s30, 0
      %p51 = por %p49, %p50
      %p52 = scmp.ne.s32.totalorder %s38, %s39
      %p53 = scmp.eq.s32.totalorder %s31, 1
      %p54 = por %p52, %p53
      %p56 = scmp.ne.s32.totalorder %s39, %s55
      %p57 = scmp.eq.s32.totalorder %s31, 0
      %p58 = por %p56, %p57
      %s60 = sadd.s32 %s59, 1
      %p63 = scmp.eq.s32.totalorder %s25, 1
      %p64 = scmp.ne.s32.totalorder %s59, %s61
      %p65 = scmp.eq.s32.totalorder %s25, 0
      %p66 = por %p64, %p65
      %p67 = scmp.ne.s32.totalorder %s59, %s61
      %p68 = scmp.eq.s32.totalorder %s30, 1
      %p69 = por %p67, %p68
      %p70 = scmp.ne.s32.totalorder %s61, %s62
      %p71 = scmp.eq.s32.totalorder %s30, 0
      %p72 = por %p70, %p71
      %p73 = scmp.ne.s32.totalorder %s61, %s62
      %p74 = scmp.eq.s32.totalorder %s31, 1
      %p75 = por %p73, %p74
      %p77 = scmp.ne.s32.totalorder %s62, %s76
      %p78 = scmp.eq.s32.totalorder %s31, 0
      %p79 = por %p77, %p78
      %s81 = sadd.s32 %s80, 1
      %p84 = scmp.eq.s32.totalorder %s25, 1
      %p85 = scmp.ne.s32.totalorder %s80, %s82
      %p86 = scmp.eq.s32.totalorder %s25, 0
      %p87 = por %p85, %p86
      %p88 = scmp.ne.s32.totalorder %s80, %s82
      %p89 = scmp.eq.s32.totalorder %s30, 1
      %p90 = por %p88, %p89
      %p91 = scmp.ne.s32.totalorder %s82, %s83
      %p92 = scmp.eq.s32.totalorder %s30, 0
      %p93 = por %p91, %p92
      %p94 = scmp.ne.s32.totalorder %s82, %s83
      %p95 = scmp.eq.s32.totalorder %s31, 1
      %p96 = por %p94, %p95
      %p98 = scmp.ne.s32.totalorder %s83, %s97
      %p99 = scmp.eq.s32.totalorder %s31, 0
      %p100 = por %p98, %p99
      %s102 = sadd.s32 %s101, 1
      %p105 = scmp.eq.s32.totalorder %s25, 1
      %p106 = scmp.ne.s32.totalorder %s101, %s103
      %p107 = scmp.eq.s32.totalorder %s25, 0
      %p108 = por %p106, %p107
      %p109 = scmp.ne.s32.totalorder %s101, %s103
      %p110 = scmp.eq.s32.totalorder %s30, 1
      %p111 = por %p109, %p110
      %p112 = scmp.ne.s32.totalorder %s103, %s104
      %p113 = scmp.eq.s32.totalorder %s30, 0
      %p114 = por %p112, %p113
      %p115 = scmp.ne.s32.totalorder %s103, %s104
      %p116 = scmp.eq.s32.totalorder %s31, 1
      %p117 = por %p115, %p116
      %p119 = scmp.ne.s32.totalorder %s104, %s118
      %p120 = scmp.eq.s32.totalorder %s31, 0
      %p121 = por %p119, %p120
      %s123 = sadd.s32 %s122, 1
      %p126 = scmp.eq.s32.totalorder %s25, 1
      %p127 = scmp.ne.s32.totalorder %s122, %s124
      %p128 = scmp.eq.s32.totalorder %s25, 0
      %p129 = por %p127, %p128
      %p130 = scmp.ne.s32.totalorder %s122, %s124
      %p131 = scmp.eq.s32.totalorder %s30, 1
      %p132 = por %p130, %p131
      %p133 = scmp.ne.s32.totalorder %s124, %s125
      %p134 = scmp.eq.s32.totalorder %s30, 0
      %p135 = por %p133, %p134
      %p136 = scmp.ne.s32.totalorder %s124, %s125
      %p137 = scmp.eq.s32.totalorder %s31, 1
      %p138 = por %p136, %p137
      %p140 = scmp.ne.s32.totalorder %s125, %s139
      %p141 = scmp.eq.s32.totalorder %s31, 0
      %p142 = por %p140, %p141
      %s144 = sadd.s32 %s143, 1
      %p147 = scmp.eq.s32.totalorder %s25, 1
      %p148 = scmp.ne.s32.totalorder %s143, %s145
      %p149 = scmp.eq.s32.totalorder %s25, 0
      %p150 = por %p148, %p149
      %p151 = scmp.ne.s32.totalorder %s143, %s145
      %p152 = scmp.eq.s32.totalorder %s30, 1
      %p153 = por %p151, %p152
      %p154 = scmp.ne.s32.totalorder %s145, %s146
      %p155 = scmp.eq.s32.totalorder %s30, 0
      %p156 = por %p154, %p155
      %p157 = scmp.ne.s32.totalorder %s145, %s146
      %p158 = scmp.eq.s32.totalorder %s31, 1
      %p159 = por %p157, %p158
      %p161 = scmp.ne.s32.totalorder %s146, %s160
      %p162 = scmp.eq.s32.totalorder %s31, 0
      %p163 = por %p161, %p162
      %s165 = sadd.s32 %s164, 1
      %p168 = scmp.eq.s32.totalorder %s25, 1
      %p169 = scmp.ne.s32.totalorder %s164, %s166
      %p170 = scmp.eq.s32.totalorder %s25, 0
      %p171 = por %p169, %p170
      %p172 = scmp.ne.s32.totalorder %s164, %s166
      %p173 = scmp.eq.s32.totalorder %s30, 1
      %p174 = por %p172, %p173
      %p175 = scmp.ne.s32.totalorder %s166, %s167
      %p176 = scmp.eq.s32.totalorder %s30, 0
      %p177 = por %p175, %p176
      %p178 = scmp.ne.s32.totalorder %s166, %s167
      %p179 = scmp.eq.s32.totalorder %s31, 1
      %p180 = por %p178, %p179
      %p182 = scmp.ne.s32.totalorder %s167, %s181
      %p183 = scmp.eq.s32.totalorder %s31, 0
      %p184 = por %p182, %p183
      %s186 = sadd.s32 %s185, 1
      %p189 = scmp.eq.s32.totalorder %s25, 1
      %p190 = scmp.ne.s32.totalorder %s185, %s187
      %p191 = scmp.eq.s32.totalorder %s25, 0
      %p192 = por %p190, %p191
      %p193 = scmp.ne.s32.totalorder %s185, %s187
      %p194 = scmp.eq.s32.totalorder %s30, 1
      %p195 = por %p193, %p194
      %p196 = scmp.ne.s32.totalorder %s187, %s188
      %p197 = scmp.eq.s32.totalorder %s30, 0
      %p198 = por %p196, %p197
      %p199 = scmp.ne.s32.totalorder %s187, %s188
      %p200 = scmp.eq.s32.totalorder %s31, 1
      %p201 = por %p199, %p200
      %p203 = scmp.ne.s32.totalorder %s188, %s202
      %p204 = scmp.eq.s32.totalorder %s31, 0
      %p205 = por %p203, %p204
      %s207 = sadd.s32 %s206, 1
      %p210 = scmp.eq.s32.totalorder %s25, 1
      %p211 = scmp.ne.s32.totalorder %s206, %s208
      %p212 = scmp.eq.s32.totalorder %s25, 0
      %p213 = por %p211, %p212
      %p214 = scmp.ne.s32.totalorder %s206, %s208
      %p215 = scmp.eq.s32.totalorder %s30, 1
      %p216 = por %p214, %p215
      %p217 = scmp.ne.s32.totalorder %s208, %s209
      %p218 = scmp.eq.s32.totalorder %s30, 0
      %p219 = por %p217, %p218
      %p220 = scmp.ne.s32.totalorder %s208, %s209
      %p221 = scmp.eq.s32.totalorder %s31, 1
      %p222 = por %p220, %p221
      %p224 = scmp.ne.s32.totalorder %s209, %s223
      %p225 = scmp.eq.s32.totalorder %s31, 0
      %p226 = por %p224, %p225
      %s228 = sadd.s32 %s227, 1
      %p231 = scmp.eq.s32.totalorder %s25, 1
      %p232 = scmp.ne.s32.totalorder %s227, %s229
      %p233 = scmp.eq.s32.totalorder %s25, 0
      %p234 = por %p232, %p233
      %p235 = scmp.ne.s32.totalorder %s227, %s229
      %p236 = scmp.eq.s32.totalorder %s30, 1
      %p237 = por %p235, %p236
      %p238 = scmp.ne.s32.totalorder %s229, %s230
      %p239 = scmp.eq.s32.totalorder %s30, 0
      %p240 = por %p238, %p239
      %p241 = scmp.ne.s32.totalorder %s229, %s230
      %p242 = scmp.eq.s32.totalorder %s31, 1
      %p243 = por %p241, %p242
      %p245 = scmp.ne.s32.totalorder %s230, %s244
      %p246 = scmp.eq.s32.totalorder %s31, 0
      %p247 = por %p245, %p246
      %s249 = sadd.s32 %s248, 1
      %p252 = scmp.eq.s32.totalorder %s25, 1
      %p253 = scmp.ne.s32.totalorder %s248, %s250
      %p254 = scmp.eq.s32.totalorder %s25, 0
      %p255 = por %p253, %p254
      %p256 = scmp.ne.s32.totalorder %s248, %s250
      %p257 = scmp.eq.s32.totalorder %s30, 1
      %p258 = por %p256, %p257
      %p259 = scmp.ne.s32.totalorder %s250, %s251
      %p260 = scmp.eq.s32.totalorder %s30, 0
      %p261 = por %p259, %p260
      %p262 = scmp.ne.s32.totalorder %s250, %s251
      %p263 = scmp.eq.s32.totalorder %s31, 1
      %p264 = por %p262, %p263
      %p266 = scmp.ne.s32.totalorder %s251, %s265
      %p267 = scmp.eq.s32.totalorder %s31, 0
      %p268 = por %p266, %p267
      %s269 = ssub.s32 %s25, %s32
      %p270 = scmp.eq.s32.totalorder %s269, 0
      %s272 = sadd.s32 %s271, 1
      %s273 = scalar_select %p270, %s271, %s272
      %p276 = pneg %p270
      %p277 = scmp.eq.s32.totalorder %s25, 1
      %p278 = por %p276, %p277
      %p279 = scmp.ne.s32.totalorder %s271, %s274
      %p280 = scmp.eq.s32.totalorder %s25, 0
      %p281 = por %p279, %p280
      %p282 = scmp.ne.s32.totalorder %s271, %s274
      %p283 = scmp.eq.s32.totalorder %s30, 1
      %p284 = por %p282, %p283
      %p285 = scmp.ne.s32.totalorder %s274, %s275
      %p286 = scmp.eq.s32.totalorder %s30, 0
      %p287 = por %p285, %p286
      %p288 = scmp.ne.s32.totalorder %s274, %s275
      %p289 = scmp.eq.s32.totalorder %s31, 1
      %p290 = por %p288, %p289
      %p292 = scmp.ne.s32.totalorder %s275, %s291
      %p293 = scmp.eq.s32.totalorder %s31, 0
      %p294 = por %p292, %p293
      %p295 = scmp.le.s32.totalorder 1, %s25
      %p296 = scmp.lt.s32.totalorder %s25, 3
      %p297 = pnand %p295, %p296
      %p298 = pneg %p297
      // Predicated region
      $region9: #{tpu_custom_call.1} parent=5 // pred_check
        _
      $region10: #{tpu_custom_call.1} parent=5 // pred_check_branch
        %300 = sbr.rel (%p297) target = $region12
      $region11: #{tpu_custom_call.1} parent=5 // pred_region
        %s301 = ssub.s32 %s25, 1
        // Predicated region
        $region13: #{tpu_custom_call.1} parent=11 // pred_check
          %p302 = pneg %p72
        $region14: #{tpu_custom_call.1} parent=11 // pred_check_branch
          %304 = sbr.rel (%p302) target = $region16
        $region15: #{tpu_custom_call.1} parent=11 // pred_region
          %s306 = ssub.s32 1024, 1024
          %307 = vsyncadd [#allocation6], %s306
          %s308 = sshll.u32 [#allocation5], 4
          %s309 = int_to_ptr.vmem [resolvable:$true] %s308
          %314 = dma.hbm_to_vmem [thread:$0]  %s1, 1024, %s309, [#allocation6], 64, 64, 4
        $region16: #{tpu_custom_call.1} parent=11 // pred_fallthru
          _
        // Predicated region
        $region17: #{tpu_custom_call.1} parent=11 // pred_check
          %p315 = pneg %p93
        $region18: #{tpu_custom_call.1} parent=11 // pred_check_branch
          %317 = sbr.rel (%p315) target = $region20
        $region19: #{tpu_custom_call.1} parent=11 // pred_region
          _
        $region20: #{tpu_custom_call.1} parent=11 // pred_fallthru
          _
        // Predicated region
        $region21: #{tpu_custom_call.1} parent=11 // pred_check
          %p318 = pneg %p114
        $region22: #{tpu_custom_call.1} parent=11 // pred_check_branch
          %320 = sbr.rel (%p318) target = $region24
        $region23: #{tpu_custom_call.1} parent=11 // pred_region
          _
        $region24: #{tpu_custom_call.1} parent=11 // pred_fallthru
          _
        // Predicated region
        $region25: #{tpu_custom_call.1} parent=11 // pred_check
          %p321 = pneg %p135
        $region26: #{tpu_custom_call.1} parent=11 // pred_check_branch
          %323 = sbr.rel (%p321) target = $region28
        $region27: #{tpu_custom_call.1} parent=11 // pred_region
          _
        $region28: #{tpu_custom_call.1} parent=11 // pred_fallthru
          _
        // Predicated region
        $region29: #{tpu_custom_call.1} parent=11 // pred_check
          %p324 = pneg %p156
        $region30: #{tpu_custom_call.1} parent=11 // pred_check_branch
          %326 = sbr.rel (%p324) target = $region32
        $region31: #{tpu_custom_call.1} parent=11 // pred_region
          %s328 = ssub.s32 1024, 1024
          %329 = vsyncadd [#allocation6], %s328
          %s330 = sshll.u32 [#allocation7], 4
          %s331 = int_to_ptr.vmem [resolvable:$true] %s330
          %336 = dma.hbm_to_vmem [thread:$0]  %s5, 1024, %s331, [#allocation6], 64, 64, 4
        $region32: #{tpu_custom_call.1} parent=11 // pred_fallthru
          _
        // Predicated region
        $region33: #{tpu_custom_call.1} parent=11 // pred_check
          %p337 = pneg %p177
        $region34: #{tpu_custom_call.1} parent=11 // pred_check_branch
          %339 = sbr.rel (%p337) target = $region36
        $region35: #{tpu_custom_call.1} parent=11 // pred_region
          _
        $region36: #{tpu_custom_call.1} parent=11 // pred_fallthru
          _
        // Predicated region
        $region37: #{tpu_custom_call.1} parent=11 // pred_check
          %p340 = pneg %p198
        $region38: #{tpu_custom_call.1} parent=11 // pred_check_branch
          %342 = sbr.rel (%p340) target = $region40
        $region39: #{tpu_custom_call.1} parent=11 // pred_region
          _
        $region40: #{tpu_custom_call.1} parent=11 // pred_fallthru
          _
        // Predicated region
        $region41: #{tpu_custom_call.1} parent=11 // pred_check
          %p343 = pneg %p219
        $region42: #{tpu_custom_call.1} parent=11 // pred_check_branch
          %345 = sbr.rel (%p343) target = $region44
        $region43: #{tpu_custom_call.1} parent=11 // pred_region
          _
        $region44: #{tpu_custom_call.1} parent=11 // pred_fallthru
          _
        // Predicated region
        $region45: #{tpu_custom_call.1} parent=11 // pred_check
          %p346 = pneg %p240
        $region46: #{tpu_custom_call.1} parent=11 // pred_check_branch
          %348 = sbr.rel (%p346) target = $region48
        $region47: #{tpu_custom_call.1} parent=11 // pred_region
          %s350 = ssub.s32 1024, 1024
          %351 = vsyncadd [#allocation9], %s350
          %s352 = sshll.u32 [#allocation8], 4
          %s353 = int_to_ptr.vmem [resolvable:$true] %s352
          %358 = dma.hbm_to_vmem [thread:$0]  %s9, 1024, %s353, [#allocation9], 64, 64, 4
        $region48: #{tpu_custom_call.1} parent=11 // pred_fallthru
          _
        // Predicated region
        $region49: #{tpu_custom_call.1} parent=11 // pred_check
          %p359 = pneg %p261
        $region50: #{tpu_custom_call.1} parent=11 // pred_check_branch
          %361 = sbr.rel (%p359) target = $region52
        $region51: #{tpu_custom_call.1} parent=11 // pred_region
          _
        $region52: #{tpu_custom_call.1} parent=11 // pred_fallthru
          _
      $region12: #{tpu_custom_call.1} parent=5 // pred_fallthru
        _
      %p362 = scmp.lt.s32.totalorder %s25, 2
      // Predicated region
      $region53: #{tpu_custom_call.1} parent=5 // pred_check
        %p363 = pneg %p362
      $region54: #{tpu_custom_call.1} parent=5 // pred_check_branch
        %365 = sbr.rel (%p363) target = $region56
      $region55: #{tpu_custom_call.1} parent=5 // pred_region
        // Predicated region
        $region57: #{tpu_custom_call.1} parent=55 // pred_check
          %p366 = pneg %p45
        $region58: #{tpu_custom_call.1} parent=55 // pred_check_branch
          %368 = sbr.rel (%p366) target = $region60
        $region59: #{tpu_custom_call.1} parent=55 // pred_region
          %s369 = sand.u32 %s35, 1
          %s370 = scalar_lea.sflag [#allocation3], %s369
          %s371 = sand.u32 %s35, 1
          %s372 = smul.addr %s371, 128
          %s373 = scalar_lea.vmem [#allocation2], %s372
          %s374 = smul.u32 32, %s25
          %s376 = ssub.s32 2048, 2048
          %377 = vsyncadd %s370, %s376
          %s378 = smul.addr %s374, 64
          %s379 = scalar_lea.hbm %s0, %s378
          %s380 = sshll.u32 %s373, 4
          %s381 = int_to_ptr.vmem [resolvable:$true] %s380
          %386 = dma.hbm_to_vmem [thread:$0]  %s379, 2048, %s381, %s370, 64, 64, 4
        $region60: #{tpu_custom_call.1} parent=55 // pred_fallthru
          _
      $region56: #{tpu_custom_call.1} parent=5 // pred_fallthru
        _
      %p387 = scmp.le.s32.totalorder 1, %s25
      %p388 = scmp.lt.s32.totalorder %s25, 3
      %p389 = pnand %p387, %p388
      %p390 = pneg %p389
      // Predicated region
      $region61: #{tpu_custom_call.1} parent=5 // pred_check
        _
      $region62: #{tpu_custom_call.1} parent=5 // pred_check_branch
        %392 = sbr.rel (%p389) target = $region64
      $region63: #{tpu_custom_call.1} parent=5 // pred_region
        %s393 = ssub.s32 %s25, 1
        %s394 = sand.u32 %s38, 1
        %s395 = scalar_lea.sflag [#allocation3], %s394
        %s396 = sand.u32 %s38, 1
        %s397 = smul.addr %s396, 128
        %s398 = scalar_lea.vmem [#allocation2], %s397
        // Predicated region
        $region65: #{tpu_custom_call.1} parent=63 // pred_check
          %p399 = pneg %p51
        $region66: #{tpu_custom_call.1} parent=63 // pred_check_branch
          %401 = sbr.rel (%p399) target = $region68
        $region67: #{tpu_custom_call.1} parent=63 // pred_region
          %402 = dma.done %s395, 2048
        $region68: #{tpu_custom_call.1} parent=63 // pred_fallthru
          _
        // Predicated region
        $region69: #{tpu_custom_call.1} parent=63 // pred_check
          %p403 = pneg %p72
        $region70: #{tpu_custom_call.1} parent=63 // pred_check_branch
          %405 = sbr.rel (%p403) target = $region72
        $region71: #{tpu_custom_call.1} parent=63 // pred_region
          %406 = dma.done [#allocation6], 1024
        $region72: #{tpu_custom_call.1} parent=63 // pred_fallthru
          _
        // Predicated region
        $region73: #{tpu_custom_call.1} parent=63 // pred_check
          %p407 = pneg %p156
        $region74: #{tpu_custom_call.1} parent=63 // pred_check_branch
          %409 = sbr.rel (%p407) target = $region76
        $region75: #{tpu_custom_call.1} parent=63 // pred_region
          %410 = dma.done [#allocation6], 1024
        $region76: #{tpu_custom_call.1} parent=63 // pred_fallthru
          _
        // Predicated region
        $region77: #{tpu_custom_call.1} parent=63 // pred_check
          %p411 = pneg %p240
        $region78: #{tpu_custom_call.1} parent=63 // pred_check_branch
          %413 = sbr.rel (%p411) target = $region80
        $region79: #{tpu_custom_call.1} parent=63 // pred_region
          %414 = dma.done [#allocation9], 1024
        $region80: #{tpu_custom_call.1} parent=63 // pred_fallthru
          _
        %s415 = sand.u32 %s38, 1
        %s416 = scalar_lea.sflag [#allocation3], %s415
        %s417 = sand.u32 %s38, 1
        %s418 = smul.addr %s417, 128
        %s419 = scalar_lea.vmem [#allocation2], %s418
        %p420 = pneg %p51
        %p421 = pneg %p48
        %p422 = pneg %p72
        %p423 = pneg %p69
        %p424 = pneg %p93
        %p425 = pneg %p90
        %p426 = pneg %p114
        %p427 = pneg %p111
        %p428 = pneg %p135
        %p429 = pneg %p132
        %p430 = pneg %p156
        %p431 = pneg %p153
        %p432 = pneg %p177
        %p433 = pneg %p174
        %p434 = pneg %p198
        %p435 = pneg %p195
        %p436 = pneg %p219
        %p437 = pneg %p216
        %p438 = pneg %p240
        %p439 = pneg %p237
        %p440 = pneg %p261
        %p441 = pneg %p258
        %p442 = pneg %p287
        %p443 = pneg %p284
        %s444 = sand.u32 %s274, 1
        %s445 = scalar_lea.sflag [#allocation4], %s444
        %s446 = sand.u32 %s274, 1
        %s447 = smul.addr %s446, 256
        %s448 = scalar_lea.vmem [#allocation10], %s447
        %s449 = smul.u32 32, %s30
        %s450 = smul.u32 32, %s30
        %v452 = vld [vmem:[%s398] sm:$0xf]
        %v453 = vld [vmem:[%s398 + $0x4] sm:$0xf]
        %v454 = vld [vmem:[%s398 + $0x8] sm:$0xf]
        %v455 = vld [vmem:[%s398 + $0xc] sm:$0xf]
        %v456 = vld [vmem:[%s398 + $0x10] sm:$0xf]
        %v457 = vld [vmem:[%s398 + $0x14] sm:$0xf]
        %v458 = vld [vmem:[%s398 + $0x18] sm:$0xf]
        %v459 = vld [vmem:[%s398 + $0x1c] sm:$0xf]
        %v460 = vld [vmem:[%s398 + $0x20] sm:$0xf]
        %v461 = vld [vmem:[%s398 + $0x24] sm:$0xf]
        %v462 = vld [vmem:[%s398 + $0x28] sm:$0xf]
        %v463 = vld [vmem:[%s398 + $0x2c] sm:$0xf]
        %v464 = vld [vmem:[%s398 + $0x30] sm:$0xf]
        %v465 = vld [vmem:[%s398 + $0x34] sm:$0xf]
        %v466 = vld [vmem:[%s398 + $0x38] sm:$0xf]
        %v467 = vld [vmem:[%s398 + $0x3c] sm:$0xf]
        %v468 = vld [vmem:[%s398 + $0x40] sm:$0xf]
        %v469 = vld [vmem:[%s398 + $0x44] sm:$0xf]
        %v470 = vld [vmem:[%s398 + $0x48] sm:$0xf]
        %v471 = vld [vmem:[%s398 + $0x4c] sm:$0xf]
        %v472 = vld [vmem:[%s398 + $0x50] sm:$0xf]
        %v473 = vld [vmem:[%s398 + $0x54] sm:$0xf]
        %v474 = vld [vmem:[%s398 + $0x58] sm:$0xf]
        %v475 = vld [vmem:[%s398 + $0x5c] sm:$0xf]
        %v476 = vld [vmem:[%s398 + $0x60] sm:$0xf]
        %v477 = vld [vmem:[%s398 + $0x64] sm:$0xf]
        %v478 = vld [vmem:[%s398 + $0x68] sm:$0xf]
        %v479 = vld [vmem:[%s398 + $0x6c] sm:$0xf]
        %v480 = vld [vmem:[%s398 + $0x70] sm:$0xf]
        %v481 = vld [vmem:[%s398 + $0x74] sm:$0xf]
        %v482 = vld [vmem:[%s398 + $0x78] sm:$0xf]
        %v483 = vld [vmem:[%s398 + $0x7c] sm:$0xf]
        %v484 = vld [vmem:[#allocation5] sm:$0xf]
        %v485 = vld [vmem:[#allocation5 + $0x4] sm:$0xf]
        %v486 = vld [vmem:[#allocation5 + $0x8] sm:$0xf]
        %v487 = vld [vmem:[#allocation5 + $0xc] sm:$0xf]
        %v488 = vld [vmem:[#allocation5 + $0x10] sm:$0xf]
        %v489 = vld [vmem:[#allocation5 + $0x14] sm:$0xf]
        %v490 = vld [vmem:[#allocation5 + $0x18] sm:$0xf]
        %v491 = vld [vmem:[#allocation5 + $0x1c] sm:$0xf]
        %v492 = vld [vmem:[#allocation5 + $0x20] sm:$0xf]
        %v493 = vld [vmem:[#allocation5 + $0x24] sm:$0xf]
        %v494 = vld [vmem:[#allocation5 + $0x28] sm:$0xf]
        %v495 = vld [vmem:[#allocation5 + $0x2c] sm:$0xf]
        %v496 = vld [vmem:[#allocation5 + $0x30] sm:$0xf]
        %v497 = vld [vmem:[#allocation5 + $0x34] sm:$0xf]
        %v498 = vld [vmem:[#allocation5 + $0x38] sm:$0xf]
        %v499 = vld [vmem:[#allocation5 + $0x3c] sm:$0xf]
        %v500 = vld [vmem:[%s2] sm:$0x1]
        %v502 = vlaneseq
        %v503 = vshrl.u32 %v502, 7
        %v504 = vsub.s32 0, %v503
        %v505 = vrot.slane %v500, %v504
        %v539 = vunpack.c.l.b16 %v452
        %v540 = vunpack.c.l.b16 %v453
        %v541 = vunpack.c.l.b16 %v454
        %v542 = vunpack.c.l.b16 %v455
        %v543 = vunpack.c.l.b16 %v456
        %v544 = vunpack.c.l.b16 %v457
        %v545 = vunpack.c.l.b16 %v458
        %v546 = vunpack.c.l.b16 %v459
        %v547 = vunpack.c.l.b16 %v460
        %v548 = vunpack.c.l.b16 %v461
        %v549 = vunpack.c.l.b16 %v462
        %v550 = vunpack.c.l.b16 %v463
        %v551 = vunpack.c.l.b16 %v464
        %v552 = vunpack.c.l.b16 %v465
        %v553 = vunpack.c.l.b16 %v466
        %v554 = vunpack.c.l.b16 %v467
        %v555 = vunpack.c.l.b16 %v468
        %v556 = vunpack.c.l.b16 %v469
        %v557 = vunpack.c.l.b16 %v470
        %v558 = vunpack.c.l.b16 %v471
        %v559 = vunpack.c.l.b16 %v472
        %v560 = vunpack.c.l.b16 %v473
        %v561 = vunpack.c.l.b16 %v474
        %v562 = vunpack.c.l.b16 %v475
        %v563 = vunpack.c.l.b16 %v476
        %v564 = vunpack.c.l.b16 %v477
        %v565 = vunpack.c.l.b16 %v478
        %v566 = vunpack.c.l.b16 %v479
        %v567 = vunpack.c.l.b16 %v480
        %v568 = vunpack.c.l.b16 %v481
        %v569 = vunpack.c.l.b16 %v482
        %v570 = vunpack.c.l.b16 %v483
        %v571 = vpack.c.b16 %v540, %v539
        %v572 = vpack.c.b16 %v542, %v541
        %v573 = vpack.c.b16 %v544, %v543
        %v574 = vpack.c.b16 %v546, %v545
        %v575 = vpack.c.b16 %v548, %v547
        %v576 = vpack.c.b16 %v550, %v549
        %v577 = vpack.c.b16 %v552, %v551
        %v578 = vpack.c.b16 %v554, %v553
        %v579 = vpack.c.b16 %v556, %v555
        %v580 = vpack.c.b16 %v558, %v557
        %v581 = vpack.c.b16 %v560, %v559
        %v582 = vpack.c.b16 %v562, %v561
        %v583 = vpack.c.b16 %v564, %v563
        %v584 = vpack.c.b16 %v566, %v565
        %v585 = vpack.c.b16 %v568, %v567
        %v586 = vpack.c.b16 %v570, %v569
        %v619 = vunpack.c.l.b16 %v484
        %v620 = vunpack.c.l.b16 %v485
        %v621 = vunpack.c.l.b16 %v486
        %v622 = vunpack.c.l.b16 %v487
        %v623 = vunpack.c.l.b16 %v488
        %v624 = vunpack.c.l.b16 %v489
        %v625 = vunpack.c.l.b16 %v490
        %v626 = vunpack.c.l.b16 %v491
        %v627 = vunpack.c.l.b16 %v492
        %v628 = vunpack.c.l.b16 %v493
        %v629 = vunpack.c.l.b16 %v494
        %v630 = vunpack.c.l.b16 %v495
        %v631 = vunpack.c.l.b16 %v496
        %v632 = vunpack.c.l.b16 %v497
        %v633 = vunpack.c.l.b16 %v498
        %v634 = vunpack.c.l.b16 %v499
        %v635 = vpack.c.b16 %v620, %v619
        %v636 = vpack.c.b16 %v622, %v621
        %v637 = vpack.c.b16 %v624, %v623
        %v638 = vpack.c.b16 %v626, %v625
        %v639 = vpack.c.b16 %v628, %v627
        %v640 = vpack.c.b16 %v630, %v629
        %v641 = vpack.c.b16 %v632, %v631
        %v642 = vpack.c.b16 %v634, %v633
        %651 = vmatprep.subr.bf16.mxu0 0
        %652 = vmatpush1.bf16.msra.mxu0 %v635
        %653 = vmatprep.subr.bf16.mxu0 0
        %654 = vmatpush1.bf16.msra.mxu0 %v636
        %655 = vmatprep.subr.bf16.mxu0 0
        %656 = vmatpush1.bf16.msra.mxu0 %v637
        %657 = vmatprep.subr.bf16.mxu0 0
        %658 = vmatpush1.bf16.msra.mxu0 %v638
        %659 = vmatprep.subr.bf16.mxu0 0
        %660 = vmatpush1.bf16.msra.mxu0 %v639
        %661 = vmatprep.subr.bf16.mxu0 0
        %662 = vmatpush1.bf16.msra.mxu0 %v640
        %663 = vmatprep.subr.bf16.mxu0 0
        %664 = vmatpush1.bf16.msra.mxu0 %v641
        %665 = vmatprep.subr.bf16.mxu0 0
        %666 = vmatpush1.bf16.msra.mxu0 %v642
        %667 = vmatprep.subr.bf16.mxu0 0
        %668 = vmatpush1.bf16.msra.mxu0 0
        %669 = vmatprep.subr.bf16.mxu0 0
        %670 = vmatpush1.bf16.msra.mxu0 0
        %671 = vmatprep.subr.bf16.mxu0 0
        %672 = vmatpush1.bf16.msra.mxu0 0
        %673 = vmatprep.subr.bf16.mxu0 0
        %674 = vmatpush1.bf16.msra.mxu0 0
        %675 = vmatprep.subr.bf16.mxu0 0
        %676 = vmatpush1.bf16.msra.mxu0 0
        %677 = vmatprep.subr.bf16.mxu0 0
        %678 = vmatpush1.bf16.msra.mxu0 0
        %679 = vmatprep.subr.bf16.mxu0 0
        %680 = vmatpush1.bf16.msra.mxu0 0
        %681 = vmatprep.subr.bf16.mxu0 0
        %682 = vmatpush1.bf16.msra.mxu0 0
        %683 = vmatprep.mubr.bf16.mxu0 0
        %684 = vmatmul.mubr.bf16.gmra.mrb[0].mxu0 %v571
        %v685 = vpop.f32.mrb[0].mxu0
        %v686 = vadd.f32 %v505, %v685
        %v687 = vpop.f32.mrb[0].mxu0
        %v688 = vpop.f32.mrb[0].mxu0
        %v689 = vadd.f32 %v505, %v688
        %v690 = vpop.f32.mrb[0].mxu0
        %691 = vmatprep.mubr.bf16.mxu0 0
        %692 = vmatmul.mubr.bf16.gmra.mrb[0].mxu0 %v572
        %v693 = vpop.f32.mrb[0].mxu0
        %v694 = vadd.f32 %v505, %v693
        %v695 = vpop.f32.mrb[0].mxu0
        %v696 = vpop.f32.mrb[0].mxu0
        %v697 = vadd.f32 %v505, %v696
        %v698 = vpop.f32.mrb[0].mxu0
        %699 = vmatprep.mubr.bf16.mxu0 0
        %700 = vmatmul.mubr.bf16.gmra.mrb[0].mxu0 %v573
        %v701 = vpop.f32.mrb[0].mxu0
        %v702 = vadd.f32 %v505, %v701
        %v703 = vpop.f32.mrb[0].mxu0
        %v704 = vpop.f32.mrb[0].mxu0
        %v705 = vadd.f32 %v505, %v704
        %v706 = vpop.f32.mrb[0].mxu0
        %707 = vmatprep.mubr.bf16.mxu0 0
        %708 = vmatmul.mubr.bf16.gmra.mrb[0].mxu0 %v574
        %v709 = vpop.f32.mrb[0].mxu0
        %v710 = vadd.f32 %v505, %v709
        %v711 = vpop.f32.mrb[0].mxu0
        %v712 = vpop.f32.mrb[0].mxu0
        %v713 = vadd.f32 %v505, %v712
        %v714 = vpop.f32.mrb[0].mxu0
        %715 = vmatprep.mubr.bf16.mxu0 0
        %716 = vmatmul.mubr.bf16.gmra.mrb[0].mxu0 %v575
        %v717 = vpop.f32.mrb[0].mxu0
        %v718 = vadd.f32 %v505, %v717
        %v719 = vpop.f32.mrb[0].mxu0
        %v720 = vpop.f32.mrb[0].mxu0
        %v721 = vadd.f32 %v505, %v720
        %v722 = vpop.f32.mrb[0].mxu0
        %723 = vmatprep.mubr.bf16.mxu0 0
        %724 = vmatmul.mubr.bf16.gmra.mrb[0].mxu0 %v576
        %v725 = vpop.f32.mrb[0].mxu0
        %v726 = vadd.f32 %v505, %v725
        %v727 = vpop.f32.mrb[0].mxu0
        %v728 = vpop.f32.mrb[0].mxu0
        %v729 = vadd.f32 %v505, %v728
        %v730 = vpop.f32.mrb[0].mxu0
        %731 = vmatprep.mubr.bf16.mxu0 0
        %732 = vmatmul.mubr.bf16.gmra.mrb[0].mxu0 %v577
        %v733 = vpop.f32.mrb[0].mxu0
        %v734 = vadd.f32 %v505, %v733
        %v735 = vpop.f32.mrb[0].mxu0
        %v736 = vpop.f32.mrb[0].mxu0
        %v737 = vadd.f32 %v505, %v736
        %v738 = vpop.f32.mrb[0].mxu0
        %739 = vmatprep.mubr.bf16.mxu0 0
        %740 = vmatmul.mubr.bf16.gmra.mrb[0].mxu0 %v578
        %v741 = vpop.f32.mrb[0].mxu0
        %v742 = vadd.f32 %v505, %v741
        %v743 = vpop.f32.mrb[0].mxu0
        %v744 = vpop.f32.mrb[0].mxu0
        %v745 = vadd.f32 %v505, %v744
        %v746 = vpop.f32.mrb[0].mxu0
        %747 = vmatprep.mubr.bf16.mxu0 0
        %748 = vmatmul.mubr.bf16.gmra.mrb[0].mxu0 %v579
        %v749 = vpop.f32.mrb[0].mxu0
        %v750 = vadd.f32 %v505, %v749
        %v751 = vpop.f32.mrb[0].mxu0
        %v752 = vpop.f32.mrb[0].mxu0
        %v753 = vadd.f32 %v505, %v752
        %v754 = vpop.f32.mrb[0].mxu0
        %755 = vmatprep.mubr.bf16.mxu0 0
        %756 = vmatmul.mubr.bf16.gmra.mrb[0].mxu0 %v580
        %v757 = vpop.f32.mrb[0].mxu0
        %v758 = vadd.f32 %v505, %v757
        %v759 = vpop.f32.mrb[0].mxu0
        %v760 = vpop.f32.mrb[0].mxu0
        %v761 = vadd.f32 %v505, %v760
        %v762 = vpop.f32.mrb[0].mxu0
        %763 = vmatprep.mubr.bf16.mxu0 0
        %764 = vmatmul.mubr.bf16.gmra.mrb[0].mxu0 %v581
        %v765 = vpop.f32.mrb[0].mxu0
        %v766 = vadd.f32 %v505, %v765
        %v767 = vpop.f32.mrb[0].mxu0
        %v768 = vpop.f32.mrb[0].mxu0
        %v769 = vadd.f32 %v505, %v768
        %v770 = vpop.f32.mrb[0].mxu0
        %771 = vmatprep.mubr.bf16.mxu0 0
        %772 = vmatmul.mubr.bf16.gmra.mrb[0].mxu0 %v582
        %v773 = vpop.f32.mrb[0].mxu0
        %v774 = vadd.f32 %v505, %v773
        %v775 = vpop.f32.mrb[0].mxu0
        %v776 = vpop.f32.mrb[0].mxu0
        %v777 = vadd.f32 %v505, %v776
        %v778 = vpop.f32.mrb[0].mxu0
        %779 = vmatprep.mubr.bf16.mxu0 0
        %780 = vmatmul.mubr.bf16.gmra.mrb[0].mxu0 %v583
        %v781 = vpop.f32.mrb[0].mxu0
        %v782 = vadd.f32 %v505, %v781
        %v783 = vpop.f32.mrb[0].mxu0
        %v784 = vpop.f32.mrb[0].mxu0
        %v785 = vadd.f32 %v505, %v784
        %v786 = vpop.f32.mrb[0].mxu0
        %787 = vmatprep.mubr.bf16.mxu0 0
        %788 = vmatmul.mubr.bf16.gmra.mrb[0].mxu0 %v584
        %v789 = vpop.f32.mrb[0].mxu0
        %v790 = vadd.f32 %v505, %v789
        %v791 = vpop.f32.mrb[0].mxu0
        %v792 = vpop.f32.mrb[0].mxu0
        %v793 = vadd.f32 %v505, %v792
        %v794 = vpop.f32.mrb[0].mxu0
        %795 = vmatprep.mubr.bf16.mxu0 0
        %796 = vmatmul.mubr.bf16.gmra.mrb[0].mxu0 %v585
        %v797 = vpop.f32.mrb[0].mxu0
        %v798 = vadd.f32 %v505, %v797
        %v799 = vpop.f32.mrb[0].mxu0
        %v800 = vpop.f32.mrb[0].mxu0
        %v801 = vadd.f32 %v505, %v800
        %v802 = vpop.f32.mrb[0].mxu0
        %803 = vmatprep.mubr.bf16.mxu0 0
        %804 = vmatmul.mubr.bf16.gmra.mrb[0].mxu0 %v586
        %v805 = vpop.f32.mrb[0].mxu0
        %v806 = vadd.f32 %v505, %v805
        %v807 = vpop.f32.mrb[0].mxu0
        %v808 = vpop.f32.mrb[0].mxu0
        %v809 = vadd.f32 %v505, %v808
        %v810 = vpop.f32.mrb[0].mxu0
        %811 = vdwg.mxu0
        %812 = vadd.xlane.f32.xlu0 %v686
        %v813 = vpop.xlane.xlu0 %812
        %814 = vadd.xlane.f32.xlu0 %v689
        %v815 = vpop.xlane.xlu0 %814
        %816 = vadd.xlane.f32.xlu0 %v694
        %v817 = vpop.xlane.xlu0 %816
        %818 = vadd.xlane.f32.xlu0 %v697
        %v819 = vpop.xlane.xlu0 %818
        %820 = vadd.xlane.f32.xlu0 %v702
        %v821 = vpop.xlane.xlu0 %820
        %822 = vadd.xlane.f32.xlu0 %v705
        %v823 = vpop.xlane.xlu0 %822
        %824 = vadd.xlane.f32.xlu0 %v710
        %v825 = vpop.xlane.xlu0 %824
        %826 = vadd.xlane.f32.xlu0 %v713
        %v827 = vpop.xlane.xlu0 %826
        %828 = vadd.xlane.f32.xlu0 %v718
        %v829 = vpop.xlane.xlu0 %828
        %830 = vadd.xlane.f32.xlu0 %v721
        %v831 = vpop.xlane.xlu0 %830
        %832 = vadd.xlane.f32.xlu0 %v726
        %v833 = vpop.xlane.xlu0 %832
        %834 = vadd.xlane.f32.xlu0 %v729
        %v835 = vpop.xlane.xlu0 %834
        %836 = vadd.xlane.f32.xlu0 %v734
        %v837 = vpop.xlane.xlu0 %836
        %838 = vadd.xlane.f32.xlu0 %v737
        %v839 = vpop.xlane.xlu0 %838
        %840 = vadd.xlane.f32.xlu0 %v742
        %v841 = vpop.xlane.xlu0 %840
        %842 = vadd.xlane.f32.xlu0 %v745
        %v843 = vpop.xlane.xlu0 %842
        %844 = vadd.xlane.f32.xlu0 %v750
        %v845 = vpop.xlane.xlu0 %844
        %846 = vadd.xlane.f32.xlu0 %v753
        %v847 = vpop.xlane.xlu0 %846
        %848 = vadd.xlane.f32.xlu0 %v758
        %v849 = vpop.xlane.xlu0 %848
        %850 = vadd.xlane.f32.xlu0 %v761
        %v851 = vpop.xlane.xlu0 %850
        %852 = vadd.xlane.f32.xlu0 %v766
        %v853 = vpop.xlane.xlu0 %852
        %854 = vadd.xlane.f32.xlu0 %v769
        %v855 = vpop.xlane.xlu0 %854
        %856 = vadd.xlane.f32.xlu0 %v774
        %v857 = vpop.xlane.xlu0 %856
        %858 = vadd.xlane.f32.xlu0 %v777
        %v859 = vpop.xlane.xlu0 %858
        %860 = vadd.xlane.f32.xlu0 %v782
        %v861 = vpop.xlane.xlu0 %860
        %862 = vadd.xlane.f32.xlu0 %v785
        %v863 = vpop.xlane.xlu0 %862
        %864 = vadd.xlane.f32.xlu0 %v790
        %v865 = vpop.xlane.xlu0 %864
        %866 = vadd.xlane.f32.xlu0 %v793
        %v867 = vpop.xlane.xlu0 %866
        %868 = vadd.xlane.f32.xlu0 %v798
        %v869 = vpop.xlane.xlu0 %868
        %870 = vadd.xlane.f32.xlu0 %v801
        %v871 = vpop.xlane.xlu0 %870
        %872 = vadd.xlane.f32.xlu0 %v806
        %v873 = vpop.xlane.xlu0 %872
        %874 = vadd.xlane.f32.xlu0 %v809
        %v875 = vpop.xlane.xlu0 %874
        %v876 = vmul.f32 %v813, 0.015625
        %v877 = vmul.f32 %v815, 0.015625
        %v878 = vmul.f32 %v817, 0.015625
        %v879 = vmul.f32 %v819, 0.015625
        %v880 = vmul.f32 %v821, 0.015625
        %v881 = vmul.f32 %v823, 0.015625
        %v882 = vmul.f32 %v825, 0.015625
        %v883 = vmul.f32 %v827, 0.015625
        %v884 = vmul.f32 %v829, 0.015625
        %v885 = vmul.f32 %v831, 0.015625
        %v886 = vmul.f32 %v833, 0.015625
        %v887 = vmul.f32 %v835, 0.015625
        %v888 = vmul.f32 %v837, 0.015625
        %v889 = vmul.f32 %v839, 0.015625
        %v890 = vmul.f32 %v841, 0.015625
        %v891 = vmul.f32 %v843, 0.015625
        %v892 = vmul.f32 %v845, 0.015625
        %v893 = vmul.f32 %v847, 0.015625
        %v894 = vmul.f32 %v849, 0.015625
        %v895 = vmul.f32 %v851, 0.015625
        %v896 = vmul.f32 %v853, 0.015625
        %v897 = vmul.f32 %v855, 0.015625
        %v898 = vmul.f32 %v857, 0.015625
        %v899 = vmul.f32 %v859, 0.015625
        %v900 = vmul.f32 %v861, 0.015625
        %v901 = vmul.f32 %v863, 0.015625
        %v902 = vmul.f32 %v865, 0.015625
        %v903 = vmul.f32 %v867, 0.015625
        %v904 = vmul.f32 %v869, 0.015625
        %v905 = vmul.f32 %v871, 0.015625
        %v906 = vmul.f32 %v873, 0.015625
        %v907 = vmul.f32 %v875, 0.015625
        %v908 = vmul.f32 %v686, %v686
        %v909 = vmul.f32 %v689, %v689
        %v910 = vmul.f32 %v694, %v694
        %v911 = vmul.f32 %v697, %v697
        %v912 = vmul.f32 %v702, %v702
        %v913 = vmul.f32 %v705, %v705
        %v914 = vmul.f32 %v710, %v710
        %v915 = vmul.f32 %v713, %v713
        %v916 = vmul.f32 %v718, %v718
        %v917 = vmul.f32 %v721, %v721
        %v918 = vmul.f32 %v726, %v726
        %v919 = vmul.f32 %v729, %v729
        %v920 = vmul.f32 %v734, %v734
        %v921 = vmul.f32 %v737, %v737
        %v922 = vmul.f32 %v742, %v742
        %v923 = vmul.f32 %v745, %v745
        %v924 = vmul.f32 %v750, %v750
        %v925 = vmul.f32 %v753, %v753
        %v926 = vmul.f32 %v758, %v758
        %v927 = vmul.f32 %v761, %v761
        %v928 = vmul.f32 %v766, %v766
        %v929 = vmul.f32 %v769, %v769
        %v930 = vmul.f32 %v774, %v774
        %v931 = vmul.f32 %v777, %v777
        %v932 = vmul.f32 %v782, %v782
        %v933 = vmul.f32 %v785, %v785
        %v934 = vmul.f32 %v790, %v790
        %v935 = vmul.f32 %v793, %v793
        %v936 = vmul.f32 %v798, %v798
        %v937 = vmul.f32 %v801, %v801
        %v938 = vmul.f32 %v806, %v806
        %v939 = vmul.f32 %v809, %v809
        %940 = vadd.xlane.f32.xlu0 %v908
        %v941 = vpop.xlane.xlu0 %940
        %942 = vadd.xlane.f32.xlu0 %v909
        %v943 = vpop.xlane.xlu0 %942
        %944 = vadd.xlane.f32.xlu0 %v910
        %v945 = vpop.xlane.xlu0 %944
        %946 = vadd.xlane.f32.xlu0 %v911
        %v947 = vpop.xlane.xlu0 %946
        %948 = vadd.xlane.f32.xlu0 %v912
        %v949 = vpop.xlane.xlu0 %948
        %950 = vadd.xlane.f32.xlu0 %v913
        %v951 = vpop.xlane.xlu0 %950
        %952 = vadd.xlane.f32.xlu0 %v914
        %v953 = vpop.xlane.xlu0 %952
        %954 = vadd.xlane.f32.xlu0 %v915
        %v955 = vpop.xlane.xlu0 %954
        %956 = vadd.xlane.f32.xlu0 %v916
        %v957 = vpop.xlane.xlu0 %956
        %958 = vadd.xlane.f32.xlu0 %v917
        %v959 = vpop.xlane.xlu0 %958
        %960 = vadd.xlane.f32.xlu0 %v918
        %v961 = vpop.xlane.xlu0 %960
        %962 = vadd.xlane.f32.xlu0 %v919
        %v963 = vpop.xlane.xlu0 %962
        %964 = vadd.xlane.f32.xlu0 %v920
        %v965 = vpop.xlane.xlu0 %964
        %966 = vadd.xlane.f32.xlu0 %v921
        %v967 = vpop.xlane.xlu0 %966
        %968 = vadd.xlane.f32.xlu0 %v922
        %v969 = vpop.xlane.xlu0 %968
        %970 = vadd.xlane.f32.xlu0 %v923
        %v971 = vpop.xlane.xlu0 %970
        %972 = vadd.xlane.f32.xlu0 %v924
        %v973 = vpop.xlane.xlu0 %972
        %974 = vadd.xlane.f32.xlu0 %v925
        %v975 = vpop.xlane.xlu0 %974
        %976 = vadd.xlane.f32.xlu0 %v926
        %v977 = vpop.xlane.xlu0 %976
        %978 = vadd.xlane.f32.xlu0 %v927
        %v979 = vpop.xlane.xlu0 %978
        %980 = vadd.xlane.f32.xlu0 %v928
        %v981 = vpop.xlane.xlu0 %980
        %982 = vadd.xlane.f32.xlu0 %v929
        %v983 = vpop.xlane.xlu0 %982
        %984 = vadd.xlane.f32.xlu0 %v930
        %v985 = vpop.xlane.xlu0 %984
        %986 = vadd.xlane.f32.xlu0 %v931
        %v987 = vpop.xlane.xlu0 %986
        %988 = vadd.xlane.f32.xlu0 %v932
        %v989 = vpop.xlane.xlu0 %988
        %990 = vadd.xlane.f32.xlu0 %v933
        %v991 = vpop.xlane.xlu0 %990
        %992 = vadd.xlane.f32.xlu0 %v934
        %v993 = vpop.xlane.xlu0 %992
        %994 = vadd.xlane.f32.xlu0 %v935
        %v995 = vpop.xlane.xlu0 %994
        %996 = vadd.xlane.f32.xlu0 %v936
        %v997 = vpop.xlane.xlu0 %996
        %998 = vadd.xlane.f32.xlu0 %v937
        %v999 = vpop.xlane.xlu0 %998
        %1000 = vadd.xlane.f32.xlu0 %v938
        %v1001 = vpop.xlane.xlu0 %1000
        %1002 = vadd.xlane.f32.xlu0 %v939
        %v1003 = vpop.xlane.xlu0 %1002
        %v1004 = vmul.f32 %v941, 0.015625
        %v1005 = vmul.f32 %v943, 0.015625
        %v1006 = vmul.f32 %v945, 0.015625
        %v1007 = vmul.f32 %v947, 0.015625
        %v1008 = vmul.f32 %v949, 0.015625
        %v1009 = vmul.f32 %v951, 0.015625
        %v1010 = vmul.f32 %v953, 0.015625
        %v1011 = vmul.f32 %v955, 0.015625
        %v1012 = vmul.f32 %v957, 0.015625
        %v1013 = vmul.f32 %v959, 0.015625
        %v1014 = vmul.f32 %v961, 0.015625
        %v1015 = vmul.f32 %v963, 0.015625
        %v1016 = vmul.f32 %v965, 0.015625
        %v1017 = vmul.f32 %v967, 0.015625
        %v1018 = vmul.f32 %v969, 0.015625
        %v1019 = vmul.f32 %v971, 0.015625
        %v1020 = vmul.f32 %v973, 0.015625
        %v1021 = vmul.f32 %v975, 0.015625
        %v1022 = vmul.f32 %v977, 0.015625
        %v1023 = vmul.f32 %v979, 0.015625
        %v1024 = vmul.f32 %v981, 0.015625
        %v1025 = vmul.f32 %v983, 0.015625
        %v1026 = vmul.f32 %v985, 0.015625
        %v1027 = vmul.f32 %v987, 0.015625
        %v1028 = vmul.f32 %v989, 0.015625
        %v1029 = vmul.f32 %v991, 0.015625
        %v1030 = vmul.f32 %v993, 0.015625
        %v1031 = vmul.f32 %v995, 0.015625
        %v1032 = vmul.f32 %v997, 0.015625
        %v1033 = vmul.f32 %v999, 0.015625
        %v1034 = vmul.f32 %v1001, 0.015625
        %v1035 = vmul.f32 %v1003, 0.015625
        %v1036 = vmul.f32 %v876, %v876
        %v1037 = vmul.f32 %v877, %v877
        %v1038 = vmul.f32 %v878, %v878
        %v1039 = vmul.f32 %v879, %v879
        %v1040 = vmul.f32 %v880, %v880
        %v1041 = vmul.f32 %v881, %v881
        %v1042 = vmul.f32 %v882, %v882
        %v1043 = vmul.f32 %v883, %v883
        %v1044 = vmul.f32 %v884, %v884
        %v1045 = vmul.f32 %v885, %v885
        %v1046 = vmul.f32 %v886, %v886
        %v1047 = vmul.f32 %v887, %v887
        %v1048 = vmul.f32 %v888, %v888
        %v1049 = vmul.f32 %v889, %v889
        %v1050 = vmul.f32 %v890, %v890
        %v1051 = vmul.f32 %v891, %v891
        %v1052 = vmul.f32 %v892, %v892
        %v1053 = vmul.f32 %v893, %v893
        %v1054 = vmul.f32 %v894, %v894
        %v1055 = vmul.f32 %v895, %v895
        %v1056 = vmul.f32 %v896, %v896
        %v1057 = vmul.f32 %v897, %v897
        %v1058 = vmul.f32 %v898, %v898
        %v1059 = vmul.f32 %v899, %v899
        %v1060 = vmul.f32 %v900, %v900
        %v1061 = vmul.f32 %v901, %v901
        %v1062 = vmul.f32 %v902, %v902
        %v1063 = vmul.f32 %v903, %v903
        %v1064 = vmul.f32 %v904, %v904
        %v1065 = vmul.f32 %v905, %v905
        %v1066 = vmul.f32 %v906, %v906
        %v1067 = vmul.f32 %v907, %v907
        %v1068 = vsub.f32 %v1004, %v1036
        %v1069 = vsub.f32 %v1005, %v1037
        %v1070 = vsub.f32 %v1006, %v1038
        %v1071 = vsub.f32 %v1007, %v1039
        %v1072 = vsub.f32 %v1008, %v1040
        %v1073 = vsub.f32 %v1009, %v1041
        %v1074 = vsub.f32 %v1010, %v1042
        %v1075 = vsub.f32 %v1011, %v1043
        %v1076 = vsub.f32 %v1012, %v1044
        %v1077 = vsub.f32 %v1013, %v1045
        %v1078 = vsub.f32 %v1014, %v1046
        %v1079 = vsub.f32 %v1015, %v1047
        %v1080 = vsub.f32 %v1016, %v1048
        %v1081 = vsub.f32 %v1017, %v1049
        %v1082 = vsub.f32 %v1018, %v1050
        %v1083 = vsub.f32 %v1019, %v1051
        %v1084 = vsub.f32 %v1020, %v1052
        %v1085 = vsub.f32 %v1021, %v1053
        %v1086 = vsub.f32 %v1022, %v1054
        %v1087 = vsub.f32 %v1023, %v1055
        %v1088 = vsub.f32 %v1024, %v1056
        %v1089 = vsub.f32 %v1025, %v1057
        %v1090 = vsub.f32 %v1026, %v1058
        %v1091 = vsub.f32 %v1027, %v1059
        %v1092 = vsub.f32 %v1028, %v1060
        %v1093 = vsub.f32 %v1029, %v1061
        %v1094 = vsub.f32 %v1030, %v1062
        %v1095 = vsub.f32 %v1031, %v1063
        %v1096 = vsub.f32 %v1032, %v1064
        %v1097 = vsub.f32 %v1033, %v1065
        %v1098 = vsub.f32 %v1034, %v1066
        %v1099 = vsub.f32 %v1035, %v1067
        %v1100 = vmax.f32 %v1068, 0.0
        %v1101 = vmax.f32 %v1069, 0.0
        %v1102 = vmax.f32 %v1070, 0.0
        %v1103 = vmax.f32 %v1071, 0.0
        %v1104 = vmax.f32 %v1072, 0.0
        %v1105 = vmax.f32 %v1073, 0.0
        %v1106 = vmax.f32 %v1074, 0.0
        %v1107 = vmax.f32 %v1075, 0.0
        %v1108 = vmax.f32 %v1076, 0.0
        %v1109 = vmax.f32 %v1077, 0.0
        %v1110 = vmax.f32 %v1078, 0.0
        %v1111 = vmax.f32 %v1079, 0.0
        %v1112 = vmax.f32 %v1080, 0.0
        %v1113 = vmax.f32 %v1081, 0.0
        %v1114 = vmax.f32 %v1082, 0.0
        %v1115 = vmax.f32 %v1083, 0.0
        %v1116 = vmax.f32 %v1084, 0.0
        %v1117 = vmax.f32 %v1085, 0.0
        %v1118 = vmax.f32 %v1086, 0.0
        %v1119 = vmax.f32 %v1087, 0.0
        %v1120 = vmax.f32 %v1088, 0.0
        %v1121 = vmax.f32 %v1089, 0.0
        %v1122 = vmax.f32 %v1090, 0.0
        %v1123 = vmax.f32 %v1091, 0.0
        %v1124 = vmax.f32 %v1092, 0.0
        %v1125 = vmax.f32 %v1093, 0.0
        %v1126 = vmax.f32 %v1094, 0.0
        %v1127 = vmax.f32 %v1095, 0.0
        %v1128 = vmax.f32 %v1096, 0.0
        %v1129 = vmax.f32 %v1097, 0.0
        %v1130 = vmax.f32 %v1098, 0.0
        %v1131 = vmax.f32 %v1099, 0.0
        %v1132 = vsub.f32 %v686, %v876
        %v1133 = vsub.f32 %v689, %v877
        %v1134 = vsub.f32 %v694, %v878
        %v1135 = vsub.f32 %v697, %v879
        %v1136 = vsub.f32 %v702, %v880
        %v1137 = vsub.f32 %v705, %v881
        %v1138 = vsub.f32 %v710, %v882
        %v1139 = vsub.f32 %v713, %v883
        %v1140 = vsub.f32 %v718, %v884
        %v1141 = vsub.f32 %v721, %v885
        %v1142 = vsub.f32 %v726, %v886
        %v1143 = vsub.f32 %v729, %v887
        %v1144 = vsub.f32 %v734, %v888
        %v1145 = vsub.f32 %v737, %v889
        %v1146 = vsub.f32 %v742, %v890
        %v1147 = vsub.f32 %v745, %v891
        %v1148 = vsub.f32 %v750, %v892
        %v1149 = vsub.f32 %v753, %v893
        %v1150 = vsub.f32 %v758, %v894
        %v1151 = vsub.f32 %v761, %v895
        %v1152 = vsub.f32 %v766, %v896
        %v1153 = vsub.f32 %v769, %v897
        %v1154 = vsub.f32 %v774, %v898
        %v1155 = vsub.f32 %v777, %v899
        %v1156 = vsub.f32 %v782, %v900
        %v1157 = vsub.f32 %v785, %v901
        %v1158 = vsub.f32 %v790, %v902
        %v1159 = vsub.f32 %v793, %v903
        %v1160 = vsub.f32 %v798, %v904
        %v1161 = vsub.f32 %v801, %v905
        %v1162 = vsub.f32 %v806, %v906
        %v1163 = vsub.f32 %v809, %v907
        %v1164 = vadd.f32 %v1100, 1e-05
        %v1165 = vadd.f32 %v1101, 1e-05
        %v1166 = vadd.f32 %v1102, 1e-05
        %v1167 = vadd.f32 %v1103, 1e-05
        %v1168 = vadd.f32 %v1104, 1e-05
        %v1169 = vadd.f32 %v1105, 1e-05
        %v1170 = vadd.f32 %v1106, 1e-05
        %v1171 = vadd.f32 %v1107, 1e-05
        %v1172 = vadd.f32 %v1108, 1e-05
        %v1173 = vadd.f32 %v1109, 1e-05
        %v1174 = vadd.f32 %v1110, 1e-05
        %v1175 = vadd.f32 %v1111, 1e-05
        %v1176 = vadd.f32 %v1112, 1e-05
        %v1177 = vadd.f32 %v1113, 1e-05
        %v1178 = vadd.f32 %v1114, 1e-05
        %v1179 = vadd.f32 %v1115, 1e-05
        %v1180 = vadd.f32 %v1116, 1e-05
        %v1181 = vadd.f32 %v1117, 1e-05
        %v1182 = vadd.f32 %v1118, 1e-05
        %v1183 = vadd.f32 %v1119, 1e-05
        %v1184 = vadd.f32 %v1120, 1e-05
        %v1185 = vadd.f32 %v1121, 1e-05
        %v1186 = vadd.f32 %v1122, 1e-05
        %v1187 = vadd.f32 %v1123, 1e-05
        %v1188 = vadd.f32 %v1124, 1e-05
        %v1189 = vadd.f32 %v1125, 1e-05
        %v1190 = vadd.f32 %v1126, 1e-05
        %v1191 = vadd.f32 %v1127, 1e-05
        %v1192 = vadd.f32 %v1128, 1e-05
        %v1193 = vadd.f32 %v1129, 1e-05
        %v1194 = vadd.f32 %v1130, 1e-05
        %v1195 = vadd.f32 %v1131, 1e-05
        %v1196 = vrsqrt.pop %v1164
        %v1197 = vrsqrt.pop %v1165
        %v1198 = vrsqrt.pop %v1166
        %v1199 = vrsqrt.pop %v1167
        %v1200 = vrsqrt.pop %v1168
        %v1201 = vrsqrt.pop %v1169
        %v1202 = vrsqrt.pop %v1170
        %v1203 = vrsqrt.pop %v1171
        %v1204 = vrsqrt.pop %v1172
        %v1205 = vrsqrt.pop %v1173
        %v1206 = vrsqrt.pop %v1174
        %v1207 = vrsqrt.pop %v1175
        %v1208 = vrsqrt.pop %v1176
        %v1209 = vrsqrt.pop %v1177
        %v1210 = vrsqrt.pop %v1178
        %v1211 = vrsqrt.pop %v1179
        %v1212 = vrsqrt.pop %v1180
        %v1213 = vrsqrt.pop %v1181
        %v1214 = vrsqrt.pop %v1182
        %v1215 = vrsqrt.pop %v1183
        %v1216 = vrsqrt.pop %v1184
        %v1217 = vrsqrt.pop %v1185
        %v1218 = vrsqrt.pop %v1186
        %v1219 = vrsqrt.pop %v1187
        %v1220 = vrsqrt.pop %v1188
        %v1221 = vrsqrt.pop %v1189
        %v1222 = vrsqrt.pop %v1190
        %v1223 = vrsqrt.pop %v1191
        %v1224 = vrsqrt.pop %v1192
        %v1225 = vrsqrt.pop %v1193
        %v1226 = vrsqrt.pop %v1194
        %v1227 = vrsqrt.pop %v1195
        %v1228 = vmul.f32 %v1132, %v1196
        %v1229 = vmul.f32 %v1133, %v1197
        %v1230 = vmul.f32 %v1134, %v1198
        %v1231 = vmul.f32 %v1135, %v1199
        %v1232 = vmul.f32 %v1136, %v1200
        %v1233 = vmul.f32 %v1137, %v1201
        %v1234 = vmul.f32 %v1138, %v1202
        %v1235 = vmul.f32 %v1139, %v1203
        %v1236 = vmul.f32 %v1140, %v1204
        %v1237 = vmul.f32 %v1141, %v1205
        %v1238 = vmul.f32 %v1142, %v1206
        %v1239 = vmul.f32 %v1143, %v1207
        %v1240 = vmul.f32 %v1144, %v1208
        %v1241 = vmul.f32 %v1145, %v1209
        %v1242 = vmul.f32 %v1146, %v1210
        %v1243 = vmul.f32 %v1147, %v1211
        %v1244 = vmul.f32 %v1148, %v1212
        %v1245 = vmul.f32 %v1149, %v1213
        %v1246 = vmul.f32 %v1150, %v1214
        %v1247 = vmul.f32 %v1151, %v1215
        %v1248 = vmul.f32 %v1152, %v1216
        %v1249 = vmul.f32 %v1153, %v1217
        %v1250 = vmul.f32 %v1154, %v1218
        %v1251 = vmul.f32 %v1155, %v1219
        %v1252 = vmul.f32 %v1156, %v1220
        %v1253 = vmul.f32 %v1157, %v1221
        %v1254 = vmul.f32 %v1158, %v1222
        %v1255 = vmul.f32 %v1159, %v1223
        %v1256 = vmul.f32 %v1160, %v1224
        %v1257 = vmul.f32 %v1161, %v1225
        %v1258 = vmul.f32 %v1162, %v1226
        %v1259 = vmul.f32 %v1163, %v1227
        %v1260 = vld [vmem:[%s3] sm:$0x1]
        %v1262 = vlaneseq
        %v1263 = vshrl.u32 %v1262, 7
        %v1264 = vsub.s32 0, %v1263
        %v1265 = vrot.slane %v1260, %v1264
        %v1267 = vmul.f32 %v1228, %v1265
        %v1268 = vmul.f32 %v1229, %v1265
        %v1269 = vmul.f32 %v1230, %v1265
        %v1270 = vmul.f32 %v1231, %v1265
        %v1271 = vmul.f32 %v1232, %v1265
        %v1272 = vmul.f32 %v1233, %v1265
        %v1273 = vmul.f32 %v1234, %v1265
        %v1274 = vmul.f32 %v1235, %v1265
        %v1275 = vmul.f32 %v1236, %v1265
        %v1276 = vmul.f32 %v1237, %v1265
        %v1277 = vmul.f32 %v1238, %v1265
        %v1278 = vmul.f32 %v1239, %v1265
        %v1279 = vmul.f32 %v1240, %v1265
        %v1280 = vmul.f32 %v1241, %v1265
        %v1281 = vmul.f32 %v1242, %v1265
        %v1282 = vmul.f32 %v1243, %v1265
        %v1283 = vmul.f32 %v1244, %v1265
        %v1284 = vmul.f32 %v1245, %v1265
        %v1285 = vmul.f32 %v1246, %v1265
        %v1286 = vmul.f32 %v1247, %v1265
        %v1287 = vmul.f32 %v1248, %v1265
        %v1288 = vmul.f32 %v1249, %v1265
        %v1289 = vmul.f32 %v1250, %v1265
        %v1290 = vmul.f32 %v1251, %v1265
        %v1291 = vmul.f32 %v1252, %v1265
        %v1292 = vmul.f32 %v1253, %v1265
        %v1293 = vmul.f32 %v1254, %v1265
        %v1294 = vmul.f32 %v1255, %v1265
        %v1295 = vmul.f32 %v1256, %v1265
        %v1296 = vmul.f32 %v1257, %v1265
        %v1297 = vmul.f32 %v1258, %v1265
        %v1298 = vmul.f32 %v1259, %v1265
        %v1299 = vld [vmem:[%s4] sm:$0x1]
        %v1301 = vlaneseq
        %v1302 = vshrl.u32 %v1301, 7
        %v1303 = vsub.s32 0, %v1302
        %v1304 = vrot.slane %v1299, %v1303
        %v1306 = vadd.f32 %v1267, %v1304
        %v1307 = vadd.f32 %v1268, %v1304
        %v1308 = vadd.f32 %v1269, %v1304
        %v1309 = vadd.f32 %v1270, %v1304
        %v1310 = vadd.f32 %v1271, %v1304
        %v1311 = vadd.f32 %v1272, %v1304
        %v1312 = vadd.f32 %v1273, %v1304
        %v1313 = vadd.f32 %v1274, %v1304
        %v1314 = vadd.f32 %v1275, %v1304
        %v1315 = vadd.f32 %v1276, %v1304
        %v1316 = vadd.f32 %v1277, %v1304
        %v1317 = vadd.f32 %v1278, %v1304
        %v1318 = vadd.f32 %v1279, %v1304
        %v1319 = vadd.f32 %v1280, %v1304
        %v1320 = vadd.f32 %v1281, %v1304
        %v1321 = vadd.f32 %v1282, %v1304
        %v1322 = vadd.f32 %v1283, %v1304
        %v1323 = vadd.f32 %v1284, %v1304
        %v1324 = vadd.f32 %v1285, %v1304
        %v1325 = vadd.f32 %v1286, %v1304
        %v1326 = vadd.f32 %v1287, %v1304
        %v1327 = vadd.f32 %v1288, %v1304
        %v1328 = vadd.f32 %v1289, %v1304
        %v1329 = vadd.f32 %v1290, %v1304
        %v1330 = vadd.f32 %v1291, %v1304
        %v1331 = vadd.f32 %v1292, %v1304
        %v1332 = vadd.f32 %v1293, %v1304
        %v1333 = vadd.f32 %v1294, %v1304
        %v1334 = vadd.f32 %v1295, %v1304
        %v1335 = vadd.f32 %v1296, %v1304
        %v1336 = vadd.f32 %v1297, %v1304
        %v1337 = vadd.f32 %v1298, %v1304
        %vm1338 = vcmp.ge.f32.partialorder %v1306, 0.0
        %vm1339 = vcmp.ge.f32.partialorder %v1307, 0.0
        %vm1340 = vcmp.ge.f32.partialorder %v1308, 0.0
        %vm1341 = vcmp.ge.f32.partialorder %v1309, 0.0
        %vm1342 = vcmp.ge.f32.partialorder %v1310, 0.0
        %vm1343 = vcmp.ge.f32.partialorder %v1311, 0.0
        %vm1344 = vcmp.ge.f32.partialorder %v1312, 0.0
        %vm1345 = vcmp.ge.f32.partialorder %v1313, 0.0
        %vm1346 = vcmp.ge.f32.partialorder %v1314, 0.0
        %vm1347 = vcmp.ge.f32.partialorder %v1315, 0.0
        %vm1348 = vcmp.ge.f32.partialorder %v1316, 0.0
        %vm1349 = vcmp.ge.f32.partialorder %v1317, 0.0
        %vm1350 = vcmp.ge.f32.partialorder %v1318, 0.0
        %vm1351 = vcmp.ge.f32.partialorder %v1319, 0.0
        %vm1352 = vcmp.ge.f32.partialorder %v1320, 0.0
        %vm1353 = vcmp.ge.f32.partialorder %v1321, 0.0
        %vm1354 = vcmp.ge.f32.partialorder %v1322, 0.0
        %vm1355 = vcmp.ge.f32.partialorder %v1323, 0.0
        %vm1356 = vcmp.ge.f32.partialorder %v1324, 0.0
        %vm1357 = vcmp.ge.f32.partialorder %v1325, 0.0
        %vm1358 = vcmp.ge.f32.partialorder %v1326, 0.0
        %vm1359 = vcmp.ge.f32.partialorder %v1327, 0.0
        %vm1360 = vcmp.ge.f32.partialorder %v1328, 0.0
        %vm1361 = vcmp.ge.f32.partialorder %v1329, 0.0
        %vm1362 = vcmp.ge.f32.partialorder %v1330, 0.0
        %vm1363 = vcmp.ge.f32.partialorder %v1331, 0.0
        %vm1364 = vcmp.ge.f32.partialorder %v1332, 0.0
        %vm1365 = vcmp.ge.f32.partialorder %v1333, 0.0
        %vm1366 = vcmp.ge.f32.partialorder %v1334, 0.0
        %vm1367 = vcmp.ge.f32.partialorder %v1335, 0.0
        %vm1368 = vcmp.ge.f32.partialorder %v1336, 0.0
        %vm1369 = vcmp.ge.f32.partialorder %v1337, 0.0
        %v1370 = vmul.f32 %v1306, 0.01
        %v1371 = vmul.f32 %v1307, 0.01
        %v1372 = vmul.f32 %v1308, 0.01
        %v1373 = vmul.f32 %v1309, 0.01
        %v1374 = vmul.f32 %v1310, 0.01
        %v1375 = vmul.f32 %v1311, 0.01
        %v1376 = vmul.f32 %v1312, 0.01
        %v1377 = vmul.f32 %v1313, 0.01
        %v1378 = vmul.f32 %v1314, 0.01
        %v1379 = vmul.f32 %v1315, 0.01
        %v1380 = vmul.f32 %v1316, 0.01
        %v1381 = vmul.f32 %v1317, 0.01
        %v1382 = vmul.f32 %v1318, 0.01
        %v1383 = vmul.f32 %v1319, 0.01
        %v1384 = vmul.f32 %v1320, 0.01
        %v1385 = vmul.f32 %v1321, 0.01
        %v1386 = vmul.f32 %v1322, 0.01
        %v1387 = vmul.f32 %v1323, 0.01
        %v1388 = vmul.f32 %v1324, 0.01
        %v1389 = vmul.f32 %v1325, 0.01
        %v1390 = vmul.f32 %v1326, 0.01
        %v1391 = vmul.f32 %v1327, 0.01
        %v1392 = vmul.f32 %v1328, 0.01
        %v1393 = vmul.f32 %v1329, 0.01
        %v1394 = vmul.f32 %v1330, 0.01
        %v1395 = vmul.f32 %v1331, 0.01
        %v1396 = vmul.f32 %v1332, 0.01
        %v1397 = vmul.f32 %v1333, 0.01
        %v1398 = vmul.f32 %v1334, 0.01
        %v1399 = vmul.f32 %v1335, 0.01
        %v1400 = vmul.f32 %v1336, 0.01
        %v1401 = vmul.f32 %v1337, 0.01
        %v1402 = vsel %vm1338, %v1306, %v1370
        %v1403 = vsel %vm1339, %v1307, %v1371
        %v1404 = vsel %vm1340, %v1308, %v1372
        %v1405 = vsel %vm1341, %v1309, %v1373
        %v1406 = vsel %vm1342, %v1310, %v1374
        %v1407 = vsel %vm1343, %v1311, %v1375
        %v1408 = vsel %vm1344, %v1312, %v1376
        %v1409 = vsel %vm1345, %v1313, %v1377
        %v1410 = vsel %vm1346, %v1314, %v1378
        %v1411 = vsel %vm1347, %v1315, %v1379
        %v1412 = vsel %vm1348, %v1316, %v1380
        %v1413 = vsel %vm1349, %v1317, %v1381
        %v1414 = vsel %vm1350, %v1318, %v1382
        %v1415 = vsel %vm1351, %v1319, %v1383
        %v1416 = vsel %vm1352, %v1320, %v1384
        %v1417 = vsel %vm1353, %v1321, %v1385
        %v1418 = vsel %vm1354, %v1322, %v1386
        %v1419 = vsel %vm1355, %v1323, %v1387
        %v1420 = vsel %vm1356, %v1324, %v1388
        %v1421 = vsel %vm1357, %v1325, %v1389
        %v1422 = vsel %vm1358, %v1326, %v1390
        %v1423 = vsel %vm1359, %v1327, %v1391
        %v1424 = vsel %vm1360, %v1328, %v1392
        %v1425 = vsel %vm1361, %v1329, %v1393
        %v1426 = vsel %vm1362, %v1330, %v1394
        %v1427 = vsel %vm1363, %v1331, %v1395
        %v1428 = vsel %vm1364, %v1332, %v1396
        %v1429 = vsel %vm1365, %v1333, %v1397
        %v1430 = vsel %vm1366, %v1334, %v1398
        %v1431 = vsel %vm1367, %v1335, %v1399
        %v1432 = vsel %vm1368, %v1336, %v1400
        %v1433 = vsel %vm1369, %v1337, %v1401
        %v1434 = vpack.c.bf16 %v1403, %v1402
        %v1435 = vpack.c.bf16 %v1405, %v1404
        %v1436 = vpack.c.bf16 %v1407, %v1406
        %v1437 = vpack.c.bf16 %v1409, %v1408
        %v1438 = vpack.c.bf16 %v1411, %v1410
        %v1439 = vpack.c.bf16 %v1413, %v1412
        %v1440 = vpack.c.bf16 %v1415, %v1414
        %v1441 = vpack.c.bf16 %v1417, %v1416
        %v1442 = vpack.c.bf16 %v1419, %v1418
        %v1443 = vpack.c.bf16 %v1421, %v1420
        %v1444 = vpack.c.bf16 %v1423, %v1422
        %v1445 = vpack.c.bf16 %v1425, %v1424
        %v1446 = vpack.c.bf16 %v1427, %v1426
        %v1447 = vpack.c.bf16 %v1429, %v1428
        %v1448 = vpack.c.bf16 %v1431, %v1430
        %v1449 = vpack.c.bf16 %v1433, %v1432
        %v1450 = vld [vmem:[#allocation7] sm:$0xf]
        %v1451 = vld [vmem:[#allocation7 + $0x4] sm:$0xf]
        %v1452 = vld [vmem:[#allocation7 + $0x8] sm:$0xf]
        %v1453 = vld [vmem:[#allocation7 + $0xc] sm:$0xf]
        %v1454 = vld [vmem:[#allocation7 + $0x10] sm:$0xf]
        %v1455 = vld [vmem:[#allocation7 + $0x14] sm:$0xf]
        %v1456 = vld [vmem:[#allocation7 + $0x18] sm:$0xf]
        %v1457 = vld [vmem:[#allocation7 + $0x1c] sm:$0xf]
        %v1458 = vld [vmem:[#allocation7 + $0x20] sm:$0xf]
        %v1459 = vld [vmem:[#allocation7 + $0x24] sm:$0xf]
        %v1460 = vld [vmem:[#allocation7 + $0x28] sm:$0xf]
        %v1461 = vld [vmem:[#allocation7 + $0x2c] sm:$0xf]
        %v1462 = vld [vmem:[#allocation7 + $0x30] sm:$0xf]
        %v1463 = vld [vmem:[#allocation7 + $0x34] sm:$0xf]
        %v1464 = vld [vmem:[#allocation7 + $0x38] sm:$0xf]
        %v1465 = vld [vmem:[#allocation7 + $0x3c] sm:$0xf]
        %v1466 = vld [vmem:[%s6] sm:$0x1]
        %v1468 = vlaneseq
        %v1469 = vshrl.u32 %v1468, 7
        %v1470 = vsub.s32 0, %v1469
        %v1471 = vrot.slane %v1466, %v1470
        %v1489 = vunpack.c.l.b16 %v1450
        %v1490 = vunpack.c.l.b16 %v1451
        %v1491 = vunpack.c.l.b16 %v1452
        %v1492 = vunpack.c.l.b16 %v1453
        %v1493 = vunpack.c.l.b16 %v1454
        %v1494 = vunpack.c.l.b16 %v1455
        %v1495 = vunpack.c.l.b16 %v1456
        %v1496 = vunpack.c.l.b16 %v1457
        %v1497 = vunpack.c.l.b16 %v1458
        %v1498 = vunpack.c.l.b16 %v1459
        %v1499 = vunpack.c.l.b16 %v1460
        %v1500 = vunpack.c.l.b16 %v1461
        %v1501 = vunpack.c.l.b16 %v1462
        %v1502 = vunpack.c.l.b16 %v1463
        %v1503 = vunpack.c.l.b16 %v1464
        %v1504 = vunpack.c.l.b16 %v1465
        %v1505 = vpack.c.b16 %v1490, %v1489
        %v1506 = vpack.c.b16 %v1492, %v1491
        %v1507 = vpack.c.b16 %v1494, %v1493
        %v1508 = vpack.c.b16 %v1496, %v1495
        %v1509 = vpack.c.b16 %v1498, %v1497
        %v1510 = vpack.c.b16 %v1500, %v1499
        %v1511 = vpack.c.b16 %v1502, %v1501
        %v1512 = vpack.c.b16 %v1504, %v1503
        %1521 = vmatprep.subr.bf16.mxu0 0
        %1522 = vmatpush1.bf16.msra.mxu0 %v1505
        %1523 = vmatprep.subr.bf16.mxu0 0
        %1524 = vmatpush1.bf16.msra.mxu0 %v1506
        %1525 = vmatprep.subr.bf16.mxu0 0
        %1526 = vmatpush1.bf16.msra.mxu0 %v1507
        %1527 = vmatprep.subr.bf16.mxu0 0
        %1528 = vmatpush1.bf16.msra.mxu0 %v1508
        %1529 = vmatprep.subr.bf16.mxu0 0
        %1530 = vmatpush1.bf16.msra.mxu0 %v1509
        %1531 = vmatprep.subr.bf16.mxu0 0
        %1532 = vmatpush1.bf16.msra.mxu0 %v1510
        %1533 = vmatprep.subr.bf16.mxu0 0
        %1534 = vmatpush1.bf16.msra.mxu0 %v1511
        %1535 = vmatprep.subr.bf16.mxu0 0
        %1536 = vmatpush1.bf16.msra.mxu0 %v1512
        %1537 = vmatprep.subr.bf16.mxu0 0
        %1538 = vmatpush1.bf16.msra.mxu0 0
        %1539 = vmatprep.subr.bf16.mxu0 0
        %1540 = vmatpush1.bf16.msra.mxu0 0
        %1541 = vmatprep.subr.bf16.mxu0 0
        %1542 = vmatpush1.bf16.msra.mxu0 0
        %1543 = vmatprep.subr.bf16.mxu0 0
        %1544 = vmatpush1.bf16.msra.mxu0 0
        %1545 = vmatprep.subr.bf16.mxu0 0
        %1546 = vmatpush1.bf16.msra.mxu0 0
        %1547 = vmatprep.subr.bf16.mxu0 0
        %1548 = vmatpush1.bf16.msra.mxu0 0
        %1549 = vmatprep.subr.bf16.mxu0 0
        %1550 = vmatpush1.bf16.msra.mxu0 0
        %1551 = vmatprep.subr.bf16.mxu0 0
        %1552 = vmatpush1.bf16.msra.mxu0 0
        %1553 = vmatprep.mubr.bf16.mxu0 0
        %1554 = vmatmul.mubr.bf16.gmra.mrb[0].mxu0 %v1434
        %v1555 = vpop.f32.mrb[0].mxu0
        %v1556 = vadd.f32 %v1471, %v1555
        %v1557 = vpop.f32.mrb[0].mxu0
        %v1558 = vpop.f32.mrb[0].mxu0
        %v1559 = vadd.f32 %v1471, %v1558
        %v1560 = vpop.f32.mrb[0].mxu0
        %1561 = vmatprep.mubr.bf16.mxu0 0
        %1562 = vmatmul.mubr.bf16.gmra.mrb[0].mxu0 %v1435
        %v1563 = vpop.f32.mrb[0].mxu0
        %v1564 = vadd.f32 %v1471, %v1563
        %v1565 = vpop.f32.mrb[0].mxu0
        %v1566 = vpop.f32.mrb[0].mxu0
        %v1567 = vadd.f32 %v1471, %v1566
        %v1568 = vpop.f32.mrb[0].mxu0
        %1569 = vmatprep.mubr.bf16.mxu0 0
        %1570 = vmatmul.mubr.bf16.gmra.mrb[0].mxu0 %v1436
        %v1571 = vpop.f32.mrb[0].mxu0
        %v1572 = vadd.f32 %v1471, %v1571
        %v1573 = vpop.f32.mrb[0].mxu0
        %v1574 = vpop.f32.mrb[0].mxu0
        %v1575 = vadd.f32 %v1471, %v1574
        %v1576 = vpop.f32.mrb[0].mxu0
        %1577 = vmatprep.mubr.bf16.mxu0 0
        %1578 = vmatmul.mubr.bf16.gmra.mrb[0].mxu0 %v1437
        %v1579 = vpop.f32.mrb[0].mxu0
        %v1580 = vadd.f32 %v1471, %v1579
        %v1581 = vpop.f32.mrb[0].mxu0
        %v1582 = vpop.f32.mrb[0].mxu0
        %v1583 = vadd.f32 %v1471, %v1582
        %v1584 = vpop.f32.mrb[0].mxu0
        %1585 = vmatprep.mubr.bf16.mxu0 0
        %1586 = vmatmul.mubr.bf16.gmra.mrb[0].mxu0 %v1438
        %v1587 = vpop.f32.mrb[0].mxu0
        %v1588 = vadd.f32 %v1471, %v1587
        %v1589 = vpop.f32.mrb[0].mxu0
        %v1590 = vpop.f32.mrb[0].mxu0
        %v1591 = vadd.f32 %v1471, %v1590
        %v1592 = vpop.f32.mrb[0].mxu0
        %1593 = vmatprep.mubr.bf16.mxu0 0
        %1594 = vmatmul.mubr.bf16.gmra.mrb[0].mxu0 %v1439
        %v1595 = vpop.f32.mrb[0].mxu0
        %v1596 = vadd.f32 %v1471, %v1595
        %v1597 = vpop.f32.mrb[0].mxu0
        %v1598 = vpop.f32.mrb[0].mxu0
        %v1599 = vadd.f32 %v1471, %v1598
        %v1600 = vpop.f32.mrb[0].mxu0
        %1601 = vmatprep.mubr.bf16.mxu0 0
        %1602 = vmatmul.mubr.bf16.gmra.mrb[0].mxu0 %v1440
        %v1603 = vpop.f32.mrb[0].mxu0
        %v1604 = vadd.f32 %v1471, %v1603
        %v1605 = vpop.f32.mrb[0].mxu0
        %v1606 = vpop.f32.mrb[0].mxu0
        %v1607 = vadd.f32 %v1471, %v1606
        %v1608 = vpop.f32.mrb[0].mxu0
        %1609 = vmatprep.mubr.bf16.mxu0 0
        %1610 = vmatmul.mubr.bf16.gmra.mrb[0].mxu0 %v1441
        %v1611 = vpop.f32.mrb[0].mxu0
        %v1612 = vadd.f32 %v1471, %v1611
        %v1613 = vpop.f32.mrb[0].mxu0
        %v1614 = vpop.f32.mrb[0].mxu0
        %v1615 = vadd.f32 %v1471, %v1614
        %v1616 = vpop.f32.mrb[0].mxu0
        %1617 = vmatprep.mubr.bf16.mxu0 0
        %1618 = vmatmul.mubr.bf16.gmra.mrb[0].mxu0 %v1442
        %v1619 = vpop.f32.mrb[0].mxu0
        %v1620 = vadd.f32 %v1471, %v1619
        %v1621 = vpop.f32.mrb[0].mxu0
        %v1622 = vpop.f32.mrb[0].mxu0
        %v1623 = vadd.f32 %v1471, %v1622
        %v1624 = vpop.f32.mrb[0].mxu0
        %1625 = vmatprep.mubr.bf16.mxu0 0
        %1626 = vmatmul.mubr.bf16.gmra.mrb[0].mxu0 %v1443
        %v1627 = vpop.f32.mrb[0].mxu0
        %v1628 = vadd.f32 %v1471, %v1627
        %v1629 = vpop.f32.mrb[0].mxu0
        %v1630 = vpop.f32.mrb[0].mxu0
        %v1631 = vadd.f32 %v1471, %v1630
        %v1632 = vpop.f32.mrb[0].mxu0
        %1633 = vmatprep.mubr.bf16.mxu0 0
        %1634 = vmatmul.mubr.bf16.gmra.mrb[0].mxu0 %v1444
        %v1635 = vpop.f32.mrb[0].mxu0
        %v1636 = vadd.f32 %v1471, %v1635
        %v1637 = vpop.f32.mrb[0].mxu0
        %v1638 = vpop.f32.mrb[0].mxu0
        %v1639 = vadd.f32 %v1471, %v1638
        %v1640 = vpop.f32.mrb[0].mxu0
        %1641 = vmatprep.mubr.bf16.mxu0 0
        %1642 = vmatmul.mubr.bf16.gmra.mrb[0].mxu0 %v1445
        %v1643 = vpop.f32.mrb[0].mxu0
        %v1644 = vadd.f32 %v1471, %v1643
        %v1645 = vpop.f32.mrb[0].mxu0
        %v1646 = vpop.f32.mrb[0].mxu0
        %v1647 = vadd.f32 %v1471, %v1646
        %v1648 = vpop.f32.mrb[0].mxu0
        %1649 = vmatprep.mubr.bf16.mxu0 0
        %1650 = vmatmul.mubr.bf16.gmra.mrb[0].mxu0 %v1446
        %v1651 = vpop.f32.mrb[0].mxu0
        %v1652 = vadd.f32 %v1471, %v1651
        %v1653 = vpop.f32.mrb[0].mxu0
        %v1654 = vpop.f32.mrb[0].mxu0
        %v1655 = vadd.f32 %v1471, %v1654
        %v1656 = vpop.f32.mrb[0].mxu0
        %1657 = vmatprep.mubr.bf16.mxu0 0
        %1658 = vmatmul.mubr.bf16.gmra.mrb[0].mxu0 %v1447
        %v1659 = vpop.f32.mrb[0].mxu0
        %v1660 = vadd.f32 %v1471, %v1659
        %v1661 = vpop.f32.mrb[0].mxu0
        %v1662 = vpop.f32.mrb[0].mxu0
        %v1663 = vadd.f32 %v1471, %v1662
        %v1664 = vpop.f32.mrb[0].mxu0
        %1665 = vmatprep.mubr.bf16.mxu0 0
        %1666 = vmatmul.mubr.bf16.gmra.mrb[0].mxu0 %v1448
        %v1667 = vpop.f32.mrb[0].mxu0
        %v1668 = vadd.f32 %v1471, %v1667
        %v1669 = vpop.f32.mrb[0].mxu0
        %v1670 = vpop.f32.mrb[0].mxu0
        %v1671 = vadd.f32 %v1471, %v1670
        %v1672 = vpop.f32.mrb[0].mxu0
        %1673 = vmatprep.mubr.bf16.mxu0 0
        %1674 = vmatmul.mubr.bf16.gmra.mrb[0].mxu0 %v1449
        %v1675 = vpop.f32.mrb[0].mxu0
        %v1676 = vadd.f32 %v1471, %v1675
        %v1677 = vpop.f32.mrb[0].mxu0
        %v1678 = vpop.f32.mrb[0].mxu0
        %v1679 = vadd.f32 %v1471, %v1678
        %v1680 = vpop.f32.mrb[0].mxu0
        %1681 = vdwg.mxu0
        %1682 = vadd.xlane.f32.xlu0 %v1556
        %v1683 = vpop.xlane.xlu0 %1682
        %1684 = vadd.xlane.f32.xlu0 %v1559
        %v1685 = vpop.xlane.xlu0 %1684
        %1686 = vadd.xlane.f32.xlu0 %v1564
        %v1687 = vpop.xlane.xlu0 %1686
        %1688 = vadd.xlane.f32.xlu0 %v1567
        %v1689 = vpop.xlane.xlu0 %1688
        %1690 = vadd.xlane.f32.xlu0 %v1572
        %v1691 = vpop.xlane.xlu0 %1690
        %1692 = vadd.xlane.f32.xlu0 %v1575
        %v1693 = vpop.xlane.xlu0 %1692
        %1694 = vadd.xlane.f32.xlu0 %v1580
        %v1695 = vpop.xlane.xlu0 %1694
        %1696 = vadd.xlane.f32.xlu0 %v1583
        %v1697 = vpop.xlane.xlu0 %1696
        %1698 = vadd.xlane.f32.xlu0 %v1588
        %v1699 = vpop.xlane.xlu0 %1698
        %1700 = vadd.xlane.f32.xlu0 %v1591
        %v1701 = vpop.xlane.xlu0 %1700
        %1702 = vadd.xlane.f32.xlu0 %v1596
        %v1703 = vpop.xlane.xlu0 %1702
        %1704 = vadd.xlane.f32.xlu0 %v1599
        %v1705 = vpop.xlane.xlu0 %1704
        %1706 = vadd.xlane.f32.xlu0 %v1604
        %v1707 = vpop.xlane.xlu0 %1706
        %1708 = vadd.xlane.f32.xlu0 %v1607
        %v1709 = vpop.xlane.xlu0 %1708
        %1710 = vadd.xlane.f32.xlu0 %v1612
        %v1711 = vpop.xlane.xlu0 %1710
        %1712 = vadd.xlane.f32.xlu0 %v1615
        %v1713 = vpop.xlane.xlu0 %1712
        %1714 = vadd.xlane.f32.xlu0 %v1620
        %v1715 = vpop.xlane.xlu0 %1714
        %1716 = vadd.xlane.f32.xlu0 %v1623
        %v1717 = vpop.xlane.xlu0 %1716
        %1718 = vadd.xlane.f32.xlu0 %v1628
        %v1719 = vpop.xlane.xlu0 %1718
        %1720 = vadd.xlane.f32.xlu0 %v1631
        %v1721 = vpop.xlane.xlu0 %1720
        %1722 = vadd.xlane.f32.xlu0 %v1636
        %v1723 = vpop.xlane.xlu0 %1722
        %1724 = vadd.xlane.f32.xlu0 %v1639
        %v1725 = vpop.xlane.xlu0 %1724
        %1726 = vadd.xlane.f32.xlu0 %v1644
        %v1727 = vpop.xlane.xlu0 %1726
        %1728 = vadd.xlane.f32.xlu0 %v1647
        %v1729 = vpop.xlane.xlu0 %1728
        %1730 = vadd.xlane.f32.xlu0 %v1652
        %v1731 = vpop.xlane.xlu0 %1730
        %1732 = vadd.xlane.f32.xlu0 %v1655
        %v1733 = vpop.xlane.xlu0 %1732
        %1734 = vadd.xlane.f32.xlu0 %v1660
        %v1735 = vpop.xlane.xlu0 %1734
        %1736 = vadd.xlane.f32.xlu0 %v1663
        %v1737 = vpop.xlane.xlu0 %1736
        %1738 = vadd.xlane.f32.xlu0 %v1668
        %v1739 = vpop.xlane.xlu0 %1738
        %1740 = vadd.xlane.f32.xlu0 %v1671
        %v1741 = vpop.xlane.xlu0 %1740
        %1742 = vadd.xlane.f32.xlu0 %v1676
        %v1743 = vpop.xlane.xlu0 %1742
        %1744 = vadd.xlane.f32.xlu0 %v1679
        %v1745 = vpop.xlane.xlu0 %1744
        %v1746 = vmul.f32 %v1683, 0.020833334
        %v1747 = vmul.f32 %v1685, 0.020833334
        %v1748 = vmul.f32 %v1687, 0.020833334
        %v1749 = vmul.f32 %v1689, 0.020833334
        %v1750 = vmul.f32 %v1691, 0.020833334
        %v1751 = vmul.f32 %v1693, 0.020833334
        %v1752 = vmul.f32 %v1695, 0.020833334
        %v1753 = vmul.f32 %v1697, 0.020833334
        %v1754 = vmul.f32 %v1699, 0.020833334
        %v1755 = vmul.f32 %v1701, 0.020833334
        %v1756 = vmul.f32 %v1703, 0.020833334
        %v1757 = vmul.f32 %v1705, 0.020833334
        %v1758 = vmul.f32 %v1707, 0.020833334
        %v1759 = vmul.f32 %v1709, 0.020833334
        %v1760 = vmul.f32 %v1711, 0.020833334
        %v1761 = vmul.f32 %v1713, 0.020833334
        %v1762 = vmul.f32 %v1715, 0.020833334
        %v1763 = vmul.f32 %v1717, 0.020833334
        %v1764 = vmul.f32 %v1719, 0.020833334
        %v1765 = vmul.f32 %v1721, 0.020833334
        %v1766 = vmul.f32 %v1723, 0.020833334
        %v1767 = vmul.f32 %v1725, 0.020833334
        %v1768 = vmul.f32 %v1727, 0.020833334
        %v1769 = vmul.f32 %v1729, 0.020833334
        %v1770 = vmul.f32 %v1731, 0.020833334
        %v1771 = vmul.f32 %v1733, 0.020833334
        %v1772 = vmul.f32 %v1735, 0.020833334
        %v1773 = vmul.f32 %v1737, 0.020833334
        %v1774 = vmul.f32 %v1739, 0.020833334
        %v1775 = vmul.f32 %v1741, 0.020833334
        %v1776 = vmul.f32 %v1743, 0.020833334
        %v1777 = vmul.f32 %v1745, 0.020833334
        %v1778 = vmul.f32 %v1556, %v1556
        %v1779 = vmul.f32 %v1559, %v1559
        %v1780 = vmul.f32 %v1564, %v1564
        %v1781 = vmul.f32 %v1567, %v1567
        %v1782 = vmul.f32 %v1572, %v1572
        %v1783 = vmul.f32 %v1575, %v1575
        %v1784 = vmul.f32 %v1580, %v1580
        %v1785 = vmul.f32 %v1583, %v1583
        %v1786 = vmul.f32 %v1588, %v1588
        %v1787 = vmul.f32 %v1591, %v1591
        %v1788 = vmul.f32 %v1596, %v1596
        %v1789 = vmul.f32 %v1599, %v1599
        %v1790 = vmul.f32 %v1604, %v1604
        %v1791 = vmul.f32 %v1607, %v1607
        %v1792 = vmul.f32 %v1612, %v1612
        %v1793 = vmul.f32 %v1615, %v1615
        %v1794 = vmul.f32 %v1620, %v1620
        %v1795 = vmul.f32 %v1623, %v1623
        %v1796 = vmul.f32 %v1628, %v1628
        %v1797 = vmul.f32 %v1631, %v1631
        %v1798 = vmul.f32 %v1636, %v1636
        %v1799 = vmul.f32 %v1639, %v1639
        %v1800 = vmul.f32 %v1644, %v1644
        %v1801 = vmul.f32 %v1647, %v1647
        %v1802 = vmul.f32 %v1652, %v1652
        %v1803 = vmul.f32 %v1655, %v1655
        %v1804 = vmul.f32 %v1660, %v1660
        %v1805 = vmul.f32 %v1663, %v1663
        %v1806 = vmul.f32 %v1668, %v1668
        %v1807 = vmul.f32 %v1671, %v1671
        %v1808 = vmul.f32 %v1676, %v1676
        %v1809 = vmul.f32 %v1679, %v1679
        %1810 = vadd.xlane.f32.xlu0 %v1778
        %v1811 = vpop.xlane.xlu0 %1810
        %1812 = vadd.xlane.f32.xlu0 %v1779
        %v1813 = vpop.xlane.xlu0 %1812
        %1814 = vadd.xlane.f32.xlu0 %v1780
        %v1815 = vpop.xlane.xlu0 %1814
        %1816 = vadd.xlane.f32.xlu0 %v1781
        %v1817 = vpop.xlane.xlu0 %1816
        %1818 = vadd.xlane.f32.xlu0 %v1782
        %v1819 = vpop.xlane.xlu0 %1818
        %1820 = vadd.xlane.f32.xlu0 %v1783
        %v1821 = vpop.xlane.xlu0 %1820
        %1822 = vadd.xlane.f32.xlu0 %v1784
        %v1823 = vpop.xlane.xlu0 %1822
        %1824 = vadd.xlane.f32.xlu0 %v1785
        %v1825 = vpop.xlane.xlu0 %1824
        %1826 = vadd.xlane.f32.xlu0 %v1786
        %v1827 = vpop.xlane.xlu0 %1826
        %1828 = vadd.xlane.f32.xlu0 %v1787
        %v1829 = vpop.xlane.xlu0 %1828
        %1830 = vadd.xlane.f32.xlu0 %v1788
        %v1831 = vpop.xlane.xlu0 %1830
        %1832 = vadd.xlane.f32.xlu0 %v1789
        %v1833 = vpop.xlane.xlu0 %1832
        %1834 = vadd.xlane.f32.xlu0 %v1790
        %v1835 = vpop.xlane.xlu0 %1834
        %1836 = vadd.xlane.f32.xlu0 %v1791
        %v1837 = vpop.xlane.xlu0 %1836
        %1838 = vadd.xlane.f32.xlu0 %v1792
        %v1839 = vpop.xlane.xlu0 %1838
        %1840 = vadd.xlane.f32.xlu0 %v1793
        %v1841 = vpop.xlane.xlu0 %1840
        %1842 = vadd.xlane.f32.xlu0 %v1794
        %v1843 = vpop.xlane.xlu0 %1842
        %1844 = vadd.xlane.f32.xlu0 %v1795
        %v1845 = vpop.xlane.xlu0 %1844
        %1846 = vadd.xlane.f32.xlu0 %v1796
        %v1847 = vpop.xlane.xlu0 %1846
        %1848 = vadd.xlane.f32.xlu0 %v1797
        %v1849 = vpop.xlane.xlu0 %1848
        %1850 = vadd.xlane.f32.xlu0 %v1798
        %v1851 = vpop.xlane.xlu0 %1850
        %1852 = vadd.xlane.f32.xlu0 %v1799
        %v1853 = vpop.xlane.xlu0 %1852
        %1854 = vadd.xlane.f32.xlu0 %v1800
        %v1855 = vpop.xlane.xlu0 %1854
        %1856 = vadd.xlane.f32.xlu0 %v1801
        %v1857 = vpop.xlane.xlu0 %1856
        %1858 = vadd.xlane.f32.xlu0 %v1802
        %v1859 = vpop.xlane.xlu0 %1858
        %1860 = vadd.xlane.f32.xlu0 %v1803
        %v1861 = vpop.xlane.xlu0 %1860
        %1862 = vadd.xlane.f32.xlu0 %v1804
        %v1863 = vpop.xlane.xlu0 %1862
        %1864 = vadd.xlane.f32.xlu0 %v1805
        %v1865 = vpop.xlane.xlu0 %1864
        %1866 = vadd.xlane.f32.xlu0 %v1806
        %v1867 = vpop.xlane.xlu0 %1866
        %1868 = vadd.xlane.f32.xlu0 %v1807
        %v1869 = vpop.xlane.xlu0 %1868
        %1870 = vadd.xlane.f32.xlu0 %v1808
        %v1871 = vpop.xlane.xlu0 %1870
        %1872 = vadd.xlane.f32.xlu0 %v1809
        %v1873 = vpop.xlane.xlu0 %1872
        %v1874 = vmul.f32 %v1811, 0.020833334
        %v1875 = vmul.f32 %v1813, 0.020833334
        %v1876 = vmul.f32 %v1815, 0.020833334
        %v1877 = vmul.f32 %v1817, 0.020833334
        %v1878 = vmul.f32 %v1819, 0.020833334
        %v1879 = vmul.f32 %v1821, 0.020833334
        %v1880 = vmul.f32 %v1823, 0.020833334
        %v1881 = vmul.f32 %v1825, 0.020833334
        %v1882 = vmul.f32 %v1827, 0.020833334
        %v1883 = vmul.f32 %v1829, 0.020833334
        %v1884 = vmul.f32 %v1831, 0.020833334
        %v1885 = vmul.f32 %v1833, 0.020833334
        %v1886 = vmul.f32 %v1835, 0.020833334
        %v1887 = vmul.f32 %v1837, 0.020833334
        %v1888 = vmul.f32 %v1839, 0.020833334
        %v1889 = vmul.f32 %v1841, 0.020833334
        %v1890 = vmul.f32 %v1843, 0.020833334
        %v1891 = vmul.f32 %v1845, 0.020833334
        %v1892 = vmul.f32 %v1847, 0.020833334
        %v1893 = vmul.f32 %v1849, 0.020833334
        %v1894 = vmul.f32 %v1851, 0.020833334
        %v1895 = vmul.f32 %v1853, 0.020833334
        %v1896 = vmul.f32 %v1855, 0.020833334
        %v1897 = vmul.f32 %v1857, 0.020833334
        %v1898 = vmul.f32 %v1859, 0.020833334
        %v1899 = vmul.f32 %v1861, 0.020833334
        %v1900 = vmul.f32 %v1863, 0.020833334
        %v1901 = vmul.f32 %v1865, 0.020833334
        %v1902 = vmul.f32 %v1867, 0.020833334
        %v1903 = vmul.f32 %v1869, 0.020833334
        %v1904 = vmul.f32 %v1871, 0.020833334
        %v1905 = vmul.f32 %v1873, 0.020833334
        %v1906 = vmul.f32 %v1746, %v1746
        %v1907 = vmul.f32 %v1747, %v1747
        %v1908 = vmul.f32 %v1748, %v1748
        %v1909 = vmul.f32 %v1749, %v1749
        %v1910 = vmul.f32 %v1750, %v1750
        %v1911 = vmul.f32 %v1751, %v1751
        %v1912 = vmul.f32 %v1752, %v1752
        %v1913 = vmul.f32 %v1753, %v1753
        %v1914 = vmul.f32 %v1754, %v1754
        %v1915 = vmul.f32 %v1755, %v1755
        %v1916 = vmul.f32 %v1756, %v1756
        %v1917 = vmul.f32 %v1757, %v1757
        %v1918 = vmul.f32 %v1758, %v1758
        %v1919 = vmul.f32 %v1759, %v1759
        %v1920 = vmul.f32 %v1760, %v1760
        %v1921 = vmul.f32 %v1761, %v1761
        %v1922 = vmul.f32 %v1762, %v1762
        %v1923 = vmul.f32 %v1763, %v1763
        %v1924 = vmul.f32 %v1764, %v1764
        %v1925 = vmul.f32 %v1765, %v1765
        %v1926 = vmul.f32 %v1766, %v1766
        %v1927 = vmul.f32 %v1767, %v1767
        %v1928 = vmul.f32 %v1768, %v1768
        %v1929 = vmul.f32 %v1769, %v1769
        %v1930 = vmul.f32 %v1770, %v1770
        %v1931 = vmul.f32 %v1771, %v1771
        %v1932 = vmul.f32 %v1772, %v1772
        %v1933 = vmul.f32 %v1773, %v1773
        %v1934 = vmul.f32 %v1774, %v1774
        %v1935 = vmul.f32 %v1775, %v1775
        %v1936 = vmul.f32 %v1776, %v1776
        %v1937 = vmul.f32 %v1777, %v1777
        %v1938 = vsub.f32 %v1874, %v1906
        %v1939 = vsub.f32 %v1875, %v1907
        %v1940 = vsub.f32 %v1876, %v1908
        %v1941 = vsub.f32 %v1877, %v1909
        %v1942 = vsub.f32 %v1878, %v1910
        %v1943 = vsub.f32 %v1879, %v1911
        %v1944 = vsub.f32 %v1880, %v1912
        %v1945 = vsub.f32 %v1881, %v1913
        %v1946 = vsub.f32 %v1882, %v1914
        %v1947 = vsub.f32 %v1883, %v1915
        %v1948 = vsub.f32 %v1884, %v1916
        %v1949 = vsub.f32 %v1885, %v1917
        %v1950 = vsub.f32 %v1886, %v1918
        %v1951 = vsub.f32 %v1887, %v1919
        %v1952 = vsub.f32 %v1888, %v1920
        %v1953 = vsub.f32 %v1889, %v1921
        %v1954 = vsub.f32 %v1890, %v1922
        %v1955 = vsub.f32 %v1891, %v1923
        %v1956 = vsub.f32 %v1892, %v1924
        %v1957 = vsub.f32 %v1893, %v1925
        %v1958 = vsub.f32 %v1894, %v1926
        %v1959 = vsub.f32 %v1895, %v1927
        %v1960 = vsub.f32 %v1896, %v1928
        %v1961 = vsub.f32 %v1897, %v1929
        %v1962 = vsub.f32 %v1898, %v1930
        %v1963 = vsub.f32 %v1899, %v1931
        %v1964 = vsub.f32 %v1900, %v1932
        %v1965 = vsub.f32 %v1901, %v1933
        %v1966 = vsub.f32 %v1902, %v1934
        %v1967 = vsub.f32 %v1903, %v1935
        %v1968 = vsub.f32 %v1904, %v1936
        %v1969 = vsub.f32 %v1905, %v1937
        %v1970 = vmax.f32 %v1938, 0.0
        %v1971 = vmax.f32 %v1939, 0.0
        %v1972 = vmax.f32 %v1940, 0.0
        %v1973 = vmax.f32 %v1941, 0.0
        %v1974 = vmax.f32 %v1942, 0.0
        %v1975 = vmax.f32 %v1943, 0.0
        %v1976 = vmax.f32 %v1944, 0.0
        %v1977 = vmax.f32 %v1945, 0.0
        %v1978 = vmax.f32 %v1946, 0.0
        %v1979 = vmax.f32 %v1947, 0.0
        %v1980 = vmax.f32 %v1948, 0.0
        %v1981 = vmax.f32 %v1949, 0.0
        %v1982 = vmax.f32 %v1950, 0.0
        %v1983 = vmax.f32 %v1951, 0.0
        %v1984 = vmax.f32 %v1952, 0.0
        %v1985 = vmax.f32 %v1953, 0.0
        %v1986 = vmax.f32 %v1954, 0.0
        %v1987 = vmax.f32 %v1955, 0.0
        %v1988 = vmax.f32 %v1956, 0.0
        %v1989 = vmax.f32 %v1957, 0.0
        %v1990 = vmax.f32 %v1958, 0.0
        %v1991 = vmax.f32 %v1959, 0.0
        %v1992 = vmax.f32 %v1960, 0.0
        %v1993 = vmax.f32 %v1961, 0.0
        %v1994 = vmax.f32 %v1962, 0.0
        %v1995 = vmax.f32 %v1963, 0.0
        %v1996 = vmax.f32 %v1964, 0.0
        %v1997 = vmax.f32 %v1965, 0.0
        %v1998 = vmax.f32 %v1966, 0.0
        %v1999 = vmax.f32 %v1967, 0.0
        %v2000 = vmax.f32 %v1968, 0.0
        %v2001 = vmax.f32 %v1969, 0.0
        %v2002 = vsub.f32 %v1556, %v1746
        %v2003 = vsub.f32 %v1559, %v1747
        %v2004 = vsub.f32 %v1564, %v1748
        %v2005 = vsub.f32 %v1567, %v1749
        %v2006 = vsub.f32 %v1572, %v1750
        %v2007 = vsub.f32 %v1575, %v1751
        %v2008 = vsub.f32 %v1580, %v1752
        %v2009 = vsub.f32 %v1583, %v1753
        %v2010 = vsub.f32 %v1588, %v1754
        %v2011 = vsub.f32 %v1591, %v1755
        %v2012 = vsub.f32 %v1596, %v1756
        %v2013 = vsub.f32 %v1599, %v1757
        %v2014 = vsub.f32 %v1604, %v1758
        %v2015 = vsub.f32 %v1607, %v1759
        %v2016 = vsub.f32 %v1612, %v1760
        %v2017 = vsub.f32 %v1615, %v1761
        %v2018 = vsub.f32 %v1620, %v1762
        %v2019 = vsub.f32 %v1623, %v1763
        %v2020 = vsub.f32 %v1628, %v1764
        %v2021 = vsub.f32 %v1631, %v1765
        %v2022 = vsub.f32 %v1636, %v1766
        %v2023 = vsub.f32 %v1639, %v1767
        %v2024 = vsub.f32 %v1644, %v1768
        %v2025 = vsub.f32 %v1647, %v1769
        %v2026 = vsub.f32 %v1652, %v1770
        %v2027 = vsub.f32 %v1655, %v1771
        %v2028 = vsub.f32 %v1660, %v1772
        %v2029 = vsub.f32 %v1663, %v1773
        %v2030 = vsub.f32 %v1668, %v1774
        %v2031 = vsub.f32 %v1671, %v1775
        %v2032 = vsub.f32 %v1676, %v1776
        %v2033 = vsub.f32 %v1679, %v1777
        %v2034 = vadd.f32 %v1970, 1e-05
        %v2035 = vadd.f32 %v1971, 1e-05
        %v2036 = vadd.f32 %v1972, 1e-05
        %v2037 = vadd.f32 %v1973, 1e-05
        %v2038 = vadd.f32 %v1974, 1e-05
        %v2039 = vadd.f32 %v1975, 1e-05
        %v2040 = vadd.f32 %v1976, 1e-05
        %v2041 = vadd.f32 %v1977, 1e-05
        %v2042 = vadd.f32 %v1978, 1e-05
        %v2043 = vadd.f32 %v1979, 1e-05
        %v2044 = vadd.f32 %v1980, 1e-05
        %v2045 = vadd.f32 %v1981, 1e-05
        %v2046 = vadd.f32 %v1982, 1e-05
        %v2047 = vadd.f32 %v1983, 1e-05
        %v2048 = vadd.f32 %v1984, 1e-05
        %v2049 = vadd.f32 %v1985, 1e-05
        %v2050 = vadd.f32 %v1986, 1e-05
        %v2051 = vadd.f32 %v1987, 1e-05
        %v2052 = vadd.f32 %v1988, 1e-05
        %v2053 = vadd.f32 %v1989, 1e-05
        %v2054 = vadd.f32 %v1990, 1e-05
        %v2055 = vadd.f32 %v1991, 1e-05
        %v2056 = vadd.f32 %v1992, 1e-05
        %v2057 = vadd.f32 %v1993, 1e-05
        %v2058 = vadd.f32 %v1994, 1e-05
        %v2059 = vadd.f32 %v1995, 1e-05
        %v2060 = vadd.f32 %v1996, 1e-05
        %v2061 = vadd.f32 %v1997, 1e-05
        %v2062 = vadd.f32 %v1998, 1e-05
        %v2063 = vadd.f32 %v1999, 1e-05
        %v2064 = vadd.f32 %v2000, 1e-05
        %v2065 = vadd.f32 %v2001, 1e-05
        %v2066 = vrsqrt.pop %v2034
        %v2067 = vrsqrt.pop %v2035
        %v2068 = vrsqrt.pop %v2036
        %v2069 = vrsqrt.pop %v2037
        %v2070 = vrsqrt.pop %v2038
        %v2071 = vrsqrt.pop %v2039
        %v2072 = vrsqrt.pop %v2040
        %v2073 = vrsqrt.pop %v2041
        %v2074 = vrsqrt.pop %v2042
        %v2075 = vrsqrt.pop %v2043
        %v2076 = vrsqrt.pop %v2044
        %v2077 = vrsqrt.pop %v2045
        %v2078 = vrsqrt.pop %v2046
        %v2079 = vrsqrt.pop %v2047
        %v2080 = vrsqrt.pop %v2048
        %v2081 = vrsqrt.pop %v2049
        %v2082 = vrsqrt.pop %v2050
        %v2083 = vrsqrt.pop %v2051
        %v2084 = vrsqrt.pop %v2052
        %v2085 = vrsqrt.pop %v2053
        %v2086 = vrsqrt.pop %v2054
        %v2087 = vrsqrt.pop %v2055
        %v2088 = vrsqrt.pop %v2056
        %v2089 = vrsqrt.pop %v2057
        %v2090 = vrsqrt.pop %v2058
        %v2091 = vrsqrt.pop %v2059
        %v2092 = vrsqrt.pop %v2060
        %v2093 = vrsqrt.pop %v2061
        %v2094 = vrsqrt.pop %v2062
        %v2095 = vrsqrt.pop %v2063
        %v2096 = vrsqrt.pop %v2064
        %v2097 = vrsqrt.pop %v2065
        %v2098 = vmul.f32 %v2002, %v2066
        %v2099 = vmul.f32 %v2003, %v2067
        %v2100 = vmul.f32 %v2004, %v2068
        %v2101 = vmul.f32 %v2005, %v2069
        %v2102 = vmul.f32 %v2006, %v2070
        %v2103 = vmul.f32 %v2007, %v2071
        %v2104 = vmul.f32 %v2008, %v2072
        %v2105 = vmul.f32 %v2009, %v2073
        %v2106 = vmul.f32 %v2010, %v2074
        %v2107 = vmul.f32 %v2011, %v2075
        %v2108 = vmul.f32 %v2012, %v2076
        %v2109 = vmul.f32 %v2013, %v2077
        %v2110 = vmul.f32 %v2014, %v2078
        %v2111 = vmul.f32 %v2015, %v2079
        %v2112 = vmul.f32 %v2016, %v2080
        %v2113 = vmul.f32 %v2017, %v2081
        %v2114 = vmul.f32 %v2018, %v2082
        %v2115 = vmul.f32 %v2019, %v2083
        %v2116 = vmul.f32 %v2020, %v2084
        %v2117 = vmul.f32 %v2021, %v2085
        %v2118 = vmul.f32 %v2022, %v2086
        %v2119 = vmul.f32 %v2023, %v2087
        %v2120 = vmul.f32 %v2024, %v2088
        %v2121 = vmul.f32 %v2025, %v2089
        %v2122 = vmul.f32 %v2026, %v2090
        %v2123 = vmul.f32 %v2027, %v2091
        %v2124 = vmul.f32 %v2028, %v2092
        %v2125 = vmul.f32 %v2029, %v2093
        %v2126 = vmul.f32 %v2030, %v2094
        %v2127 = vmul.f32 %v2031, %v2095
        %v2128 = vmul.f32 %v2032, %v2096
        %v2129 = vmul.f32 %v2033, %v2097
        %v2130 = vld [vmem:[%s7] sm:$0x1]
        %v2132 = vlaneseq
        %v2133 = vshrl.u32 %v2132, 7
        %v2134 = vsub.s32 0, %v2133
        %v2135 = vrot.slane %v2130, %v2134
        %v2137 = vmul.f32 %v2098, %v2135
        %v2138 = vmul.f32 %v2099, %v2135
        %v2139 = vmul.f32 %v2100, %v2135
        %v2140 = vmul.f32 %v2101, %v2135
        %v2141 = vmul.f32 %v2102, %v2135
        %v2142 = vmul.f32 %v2103, %v2135
        %v2143 = vmul.f32 %v2104, %v2135
        %v2144 = vmul.f32 %v2105, %v2135
        %v2145 = vmul.f32 %v2106, %v2135
        %v2146 = vmul.f32 %v2107, %v2135
        %v2147 = vmul.f32 %v2108, %v2135
        %v2148 = vmul.f32 %v2109, %v2135
        %v2149 = vmul.f32 %v2110, %v2135
        %v2150 = vmul.f32 %v2111, %v2135
        %v2151 = vmul.f32 %v2112, %v2135
        %v2152 = vmul.f32 %v2113, %v2135
        %v2153 = vmul.f32 %v2114, %v2135
        %v2154 = vmul.f32 %v2115, %v2135
        %v2155 = vmul.f32 %v2116, %v2135
        %v2156 = vmul.f32 %v2117, %v2135
        %v2157 = vmul.f32 %v2118, %v2135
        %v2158 = vmul.f32 %v2119, %v2135
        %v2159 = vmul.f32 %v2120, %v2135
        %v2160 = vmul.f32 %v2121, %v2135
        %v2161 = vmul.f32 %v2122, %v2135
        %v2162 = vmul.f32 %v2123, %v2135
        %v2163 = vmul.f32 %v2124, %v2135
        %v2164 = vmul.f32 %v2125, %v2135
        %v2165 = vmul.f32 %v2126, %v2135
        %v2166 = vmul.f32 %v2127, %v2135
        %v2167 = vmul.f32 %v2128, %v2135
        %v2168 = vmul.f32 %v2129, %v2135
        %v2169 = vld [vmem:[%s8] sm:$0x1]
        %v2171 = vlaneseq
        %v2172 = vshrl.u32 %v2171, 7
        %v2173 = vsub.s32 0, %v2172
        %v2174 = vrot.slane %v2169, %v2173
        %v2176 = vadd.f32 %v2137, %v2174
        %v2177 = vadd.f32 %v2138, %v2174
        %v2178 = vadd.f32 %v2139, %v2174
        %v2179 = vadd.f32 %v2140, %v2174
        %v2180 = vadd.f32 %v2141, %v2174
        %v2181 = vadd.f32 %v2142, %v2174
        %v2182 = vadd.f32 %v2143, %v2174
        %v2183 = vadd.f32 %v2144, %v2174
        %v2184 = vadd.f32 %v2145, %v2174
        %v2185 = vadd.f32 %v2146, %v2174
        %v2186 = vadd.f32 %v2147, %v2174
        %v2187 = vadd.f32 %v2148, %v2174
        %v2188 = vadd.f32 %v2149, %v2174
        %v2189 = vadd.f32 %v2150, %v2174
        %v2190 = vadd.f32 %v2151, %v2174
        %v2191 = vadd.f32 %v2152, %v2174
        %v2192 = vadd.f32 %v2153, %v2174
        %v2193 = vadd.f32 %v2154, %v2174
        %v2194 = vadd.f32 %v2155, %v2174
        %v2195 = vadd.f32 %v2156, %v2174
        %v2196 = vadd.f32 %v2157, %v2174
        %v2197 = vadd.f32 %v2158, %v2174
        %v2198 = vadd.f32 %v2159, %v2174
        %v2199 = vadd.f32 %v2160, %v2174
        %v2200 = vadd.f32 %v2161, %v2174
        %v2201 = vadd.f32 %v2162, %v2174
        %v2202 = vadd.f32 %v2163, %v2174
        %v2203 = vadd.f32 %v2164, %v2174
        %v2204 = vadd.f32 %v2165, %v2174
        %v2205 = vadd.f32 %v2166, %v2174
        %v2206 = vadd.f32 %v2167, %v2174
        %v2207 = vadd.f32 %v2168, %v2174
        %vm2208 = vcmp.ge.f32.partialorder %v2176, 0.0
        %vm2209 = vcmp.ge.f32.partialorder %v2177, 0.0
        %vm2210 = vcmp.ge.f32.partialorder %v2178, 0.0
        %vm2211 = vcmp.ge.f32.partialorder %v2179, 0.0
        %vm2212 = vcmp.ge.f32.partialorder %v2180, 0.0
        %vm2213 = vcmp.ge.f32.partialorder %v2181, 0.0
        %vm2214 = vcmp.ge.f32.partialorder %v2182, 0.0
        %vm2215 = vcmp.ge.f32.partialorder %v2183, 0.0
        %vm2216 = vcmp.ge.f32.partialorder %v2184, 0.0
        %vm2217 = vcmp.ge.f32.partialorder %v2185, 0.0
        %vm2218 = vcmp.ge.f32.partialorder %v2186, 0.0
        %vm2219 = vcmp.ge.f32.partialorder %v2187, 0.0
        %vm2220 = vcmp.ge.f32.partialorder %v2188, 0.0
        %vm2221 = vcmp.ge.f32.partialorder %v2189, 0.0
        %vm2222 = vcmp.ge.f32.partialorder %v2190, 0.0
        %vm2223 = vcmp.ge.f32.partialorder %v2191, 0.0
        %vm2224 = vcmp.ge.f32.partialorder %v2192, 0.0
        %vm2225 = vcmp.ge.f32.partialorder %v2193, 0.0
        %vm2226 = vcmp.ge.f32.partialorder %v2194, 0.0
        %vm2227 = vcmp.ge.f32.partialorder %v2195, 0.0
        %vm2228 = vcmp.ge.f32.partialorder %v2196, 0.0
        %vm2229 = vcmp.ge.f32.partialorder %v2197, 0.0
        %vm2230 = vcmp.ge.f32.partialorder %v2198, 0.0
        %vm2231 = vcmp.ge.f32.partialorder %v2199, 0.0
        %vm2232 = vcmp.ge.f32.partialorder %v2200, 0.0
        %vm2233 = vcmp.ge.f32.partialorder %v2201, 0.0
        %vm2234 = vcmp.ge.f32.partialorder %v2202, 0.0
        %vm2235 = vcmp.ge.f32.partialorder %v2203, 0.0
        %vm2236 = vcmp.ge.f32.partialorder %v2204, 0.0
        %vm2237 = vcmp.ge.f32.partialorder %v2205, 0.0
        %vm2238 = vcmp.ge.f32.partialorder %v2206, 0.0
        %vm2239 = vcmp.ge.f32.partialorder %v2207, 0.0
        %v2240 = vmul.f32 %v2176, 0.01
        %v2241 = vmul.f32 %v2177, 0.01
        %v2242 = vmul.f32 %v2178, 0.01
        %v2243 = vmul.f32 %v2179, 0.01
        %v2244 = vmul.f32 %v2180, 0.01
        %v2245 = vmul.f32 %v2181, 0.01
        %v2246 = vmul.f32 %v2182, 0.01
        %v2247 = vmul.f32 %v2183, 0.01
        %v2248 = vmul.f32 %v2184, 0.01
        %v2249 = vmul.f32 %v2185, 0.01
        %v2250 = vmul.f32 %v2186, 0.01
        %v2251 = vmul.f32 %v2187, 0.01
        %v2252 = vmul.f32 %v2188, 0.01
        %v2253 = vmul.f32 %v2189, 0.01
        %v2254 = vmul.f32 %v2190, 0.01
        %v2255 = vmul.f32 %v2191, 0.01
        %v2256 = vmul.f32 %v2192, 0.01
        %v2257 = vmul.f32 %v2193, 0.01
        %v2258 = vmul.f32 %v2194, 0.01
        %v2259 = vmul.f32 %v2195, 0.01
        %v2260 = vmul.f32 %v2196, 0.01
        %v2261 = vmul.f32 %v2197, 0.01
        %v2262 = vmul.f32 %v2198, 0.01
        %v2263 = vmul.f32 %v2199, 0.01
        %v2264 = vmul.f32 %v2200, 0.01
        %v2265 = vmul.f32 %v2201, 0.01
        %v2266 = vmul.f32 %v2202, 0.01
        %v2267 = vmul.f32 %v2203, 0.01
        %v2268 = vmul.f32 %v2204, 0.01
        %v2269 = vmul.f32 %v2205, 0.01
        %v2270 = vmul.f32 %v2206, 0.01
        %v2271 = vmul.f32 %v2207, 0.01
        %v2272 = vsel %vm2208, %v2176, %v2240
        %v2273 = vsel %vm2209, %v2177, %v2241
        %v2274 = vsel %vm2210, %v2178, %v2242
        %v2275 = vsel %vm2211, %v2179, %v2243
        %v2276 = vsel %vm2212, %v2180, %v2244
        %v2277 = vsel %vm2213, %v2181, %v2245
        %v2278 = vsel %vm2214, %v2182, %v2246
        %v2279 = vsel %vm2215, %v2183, %v2247
        %v2280 = vsel %vm2216, %v2184, %v2248
        %v2281 = vsel %vm2217, %v2185, %v2249
        %v2282 = vsel %vm2218, %v2186, %v2250
        %v2283 = vsel %vm2219, %v2187, %v2251
        %v2284 = vsel %vm2220, %v2188, %v2252
        %v2285 = vsel %vm2221, %v2189, %v2253
        %v2286 = vsel %vm2222, %v2190, %v2254
        %v2287 = vsel %vm2223, %v2191, %v2255
        %v2288 = vsel %vm2224, %v2192, %v2256
        %v2289 = vsel %vm2225, %v2193, %v2257
        %v2290 = vsel %vm2226, %v2194, %v2258
        %v2291 = vsel %vm2227, %v2195, %v2259
        %v2292 = vsel %vm2228, %v2196, %v2260
        %v2293 = vsel %vm2229, %v2197, %v2261
        %v2294 = vsel %vm2230, %v2198, %v2262
        %v2295 = vsel %vm2231, %v2199, %v2263
        %v2296 = vsel %vm2232, %v2200, %v2264
        %v2297 = vsel %vm2233, %v2201, %v2265
        %v2298 = vsel %vm2234, %v2202, %v2266
        %v2299 = vsel %vm2235, %v2203, %v2267
        %v2300 = vsel %vm2236, %v2204, %v2268
        %v2301 = vsel %vm2237, %v2205, %v2269
        %v2302 = vsel %vm2238, %v2206, %v2270
        %v2303 = vsel %vm2239, %v2207, %v2271
        %v2304 = vpack.c.bf16 %v2273, %v2272
        %v2305 = vpack.c.bf16 %v2275, %v2274
        %v2306 = vpack.c.bf16 %v2277, %v2276
        %v2307 = vpack.c.bf16 %v2279, %v2278
        %v2308 = vpack.c.bf16 %v2281, %v2280
        %v2309 = vpack.c.bf16 %v2283, %v2282
        %v2310 = vpack.c.bf16 %v2285, %v2284
        %v2311 = vpack.c.bf16 %v2287, %v2286
        %v2312 = vpack.c.bf16 %v2289, %v2288
        %v2313 = vpack.c.bf16 %v2291, %v2290
        %v2314 = vpack.c.bf16 %v2293, %v2292
        %v2315 = vpack.c.bf16 %v2295, %v2294
        %v2316 = vpack.c.bf16 %v2297, %v2296
        %v2317 = vpack.c.bf16 %v2299, %v2298
        %v2318 = vpack.c.bf16 %v2301, %v2300
        %v2319 = vpack.c.bf16 %v2303, %v2302
        %v2320 = vld [vmem:[#allocation8] sm:$0xf]
        %v2321 = vld [vmem:[#allocation8 + $0x4] sm:$0xf]
        %v2322 = vld [vmem:[#allocation8 + $0x8] sm:$0xf]
        %v2323 = vld [vmem:[#allocation8 + $0xc] sm:$0xf]
        %v2324 = vld [vmem:[#allocation8 + $0x10] sm:$0xf]
        %v2325 = vld [vmem:[#allocation8 + $0x14] sm:$0xf]
        %v2326 = vld [vmem:[#allocation8 + $0x18] sm:$0xf]
        %v2327 = vld [vmem:[#allocation8 + $0x1c] sm:$0xf]
        %v2328 = vld [vmem:[#allocation8 + $0x20] sm:$0xf]
        %v2329 = vld [vmem:[#allocation8 + $0x24] sm:$0xf]
        %v2330 = vld [vmem:[#allocation8 + $0x28] sm:$0xf]
        %v2331 = vld [vmem:[#allocation8 + $0x2c] sm:$0xf]
        %v2332 = vld [vmem:[#allocation8 + $0x30] sm:$0xf]
        %v2333 = vld [vmem:[#allocation8 + $0x34] sm:$0xf]
        %v2334 = vld [vmem:[#allocation8 + $0x38] sm:$0xf]
        %v2335 = vld [vmem:[#allocation8 + $0x3c] sm:$0xf]
        %v2336 = vld [vmem:[%s10] sm:$0x1]
        %v2338 = vlaneseq
        %v2339 = vshrl.u32 %v2338, 7
        %v2340 = vsub.s32 0, %v2339
        %v2341 = vrot.slane %v2336, %v2340
        %v2359 = vunpack.c.l.b16 %v2320
        %v2360 = vunpack.c.l.b16 %v2321
        %v2361 = vunpack.c.l.b16 %v2322
        %v2362 = vunpack.c.l.b16 %v2323
        %v2363 = vunpack.c.l.b16 %v2324
        %v2364 = vunpack.c.l.b16 %v2325
        %v2365 = vunpack.c.l.b16 %v2326
        %v2366 = vunpack.c.l.b16 %v2327
        %v2367 = vunpack.c.l.b16 %v2328
        %v2368 = vunpack.c.l.b16 %v2329
        %v2369 = vunpack.c.l.b16 %v2330
        %v2370 = vunpack.c.l.b16 %v2331
        %v2371 = vunpack.c.l.b16 %v2332
        %v2372 = vunpack.c.l.b16 %v2333
        %v2373 = vunpack.c.l.b16 %v2334
        %v2374 = vunpack.c.l.b16 %v2335
        %v2375 = vpack.c.b16 %v2360, %v2359
        %v2376 = vpack.c.b16 %v2362, %v2361
        %v2377 = vpack.c.b16 %v2364, %v2363
        %v2378 = vpack.c.b16 %v2366, %v2365
        %v2379 = vpack.c.b16 %v2368, %v2367
        %v2380 = vpack.c.b16 %v2370, %v2369
        %v2381 = vpack.c.b16 %v2372, %v2371
        %v2382 = vpack.c.b16 %v2374, %v2373
        %2391 = vmatprep.subr.bf16.mxu0 0
        %2392 = vmatpush1.bf16.msra.mxu0 %v2375
        %2393 = vmatprep.subr.bf16.mxu0 0
        %2394 = vmatpush1.bf16.msra.mxu0 %v2376
        %2395 = vmatprep.subr.bf16.mxu0 0
        %2396 = vmatpush1.bf16.msra.mxu0 %v2377
        %2397 = vmatprep.subr.bf16.mxu0 0
        %2398 = vmatpush1.bf16.msra.mxu0 %v2378
        %2399 = vmatprep.subr.bf16.mxu0 0
        %2400 = vmatpush1.bf16.msra.mxu0 %v2379
        %2401 = vmatprep.subr.bf16.mxu0 0
        %2402 = vmatpush1.bf16.msra.mxu0 %v2380
        %2403 = vmatprep.subr.bf16.mxu0 0
        %2404 = vmatpush1.bf16.msra.mxu0 %v2381
        %2405 = vmatprep.subr.bf16.mxu0 0
        %2406 = vmatpush1.bf16.msra.mxu0 %v2382
        %2407 = vmatprep.subr.bf16.mxu0 0
        %2408 = vmatpush1.bf16.msra.mxu0 0
        %2409 = vmatprep.subr.bf16.mxu0 0
        %2410 = vmatpush1.bf16.msra.mxu0 0
        %2411 = vmatprep.subr.bf16.mxu0 0
        %2412 = vmatpush1.bf16.msra.mxu0 0
        %2413 = vmatprep.subr.bf16.mxu0 0
        %2414 = vmatpush1.bf16.msra.mxu0 0
        %2415 = vmatprep.subr.bf16.mxu0 0
        %2416 = vmatpush1.bf16.msra.mxu0 0
        %2417 = vmatprep.subr.bf16.mxu0 0
        %2418 = vmatpush1.bf16.msra.mxu0 0
        %2419 = vmatprep.subr.bf16.mxu0 0
        %2420 = vmatpush1.bf16.msra.mxu0 0
        %2421 = vmatprep.subr.bf16.mxu0 0
        %2422 = vmatpush1.bf16.msra.mxu0 0
        %2423 = vmatprep.mubr.bf16.mxu0 0
        %2424 = vmatmul.mubr.bf16.gmra.mrb[0].mxu0 %v2304
        %v2425 = vpop.f32.mrb[0].mxu0
        %v2426 = vadd.f32 %v2341, %v2425
        %v2427 = vpop.f32.mrb[0].mxu0
        %v2428 = vpop.f32.mrb[0].mxu0
        %v2429 = vadd.f32 %v2341, %v2428
        %v2430 = vpop.f32.mrb[0].mxu0
        %2431 = vmatprep.mubr.bf16.mxu0 0
        %2432 = vmatmul.mubr.bf16.gmra.mrb[0].mxu0 %v2305
        %v2433 = vpop.f32.mrb[0].mxu0
        %v2434 = vadd.f32 %v2341, %v2433
        %v2435 = vpop.f32.mrb[0].mxu0
        %v2436 = vpop.f32.mrb[0].mxu0
        %v2437 = vadd.f32 %v2341, %v2436
        %v2438 = vpop.f32.mrb[0].mxu0
        %2439 = vmatprep.mubr.bf16.mxu0 0
        %2440 = vmatmul.mubr.bf16.gmra.mrb[0].mxu0 %v2306
        %v2441 = vpop.f32.mrb[0].mxu0
        %v2442 = vadd.f32 %v2341, %v2441
        %v2443 = vpop.f32.mrb[0].mxu0
        %v2444 = vpop.f32.mrb[0].mxu0
        %v2445 = vadd.f32 %v2341, %v2444
        %v2446 = vpop.f32.mrb[0].mxu0
        %2447 = vmatprep.mubr.bf16.mxu0 0
        %2448 = vmatmul.mubr.bf16.gmra.mrb[0].mxu0 %v2307
        %v2449 = vpop.f32.mrb[0].mxu0
        %v2450 = vadd.f32 %v2341, %v2449
        %v2451 = vpop.f32.mrb[0].mxu0
        %v2452 = vpop.f32.mrb[0].mxu0
        %v2453 = vadd.f32 %v2341, %v2452
        %v2454 = vpop.f32.mrb[0].mxu0
        %2455 = vmatprep.mubr.bf16.mxu0 0
        %2456 = vmatmul.mubr.bf16.gmra.mrb[0].mxu0 %v2308
        %v2457 = vpop.f32.mrb[0].mxu0
        %v2458 = vadd.f32 %v2341, %v2457
        %v2459 = vpop.f32.mrb[0].mxu0
        %v2460 = vpop.f32.mrb[0].mxu0
        %v2461 = vadd.f32 %v2341, %v2460
        %v2462 = vpop.f32.mrb[0].mxu0
        %2463 = vmatprep.mubr.bf16.mxu0 0
        %2464 = vmatmul.mubr.bf16.gmra.mrb[0].mxu0 %v2309
        %v2465 = vpop.f32.mrb[0].mxu0
        %v2466 = vadd.f32 %v2341, %v2465
        %v2467 = vpop.f32.mrb[0].mxu0
        %v2468 = vpop.f32.mrb[0].mxu0
        %v2469 = vadd.f32 %v2341, %v2468
        %v2470 = vpop.f32.mrb[0].mxu0
        %2471 = vmatprep.mubr.bf16.mxu0 0
        %2472 = vmatmul.mubr.bf16.gmra.mrb[0].mxu0 %v2310
        %v2473 = vpop.f32.mrb[0].mxu0
        %v2474 = vadd.f32 %v2341, %v2473
        %v2475 = vpop.f32.mrb[0].mxu0
        %v2476 = vpop.f32.mrb[0].mxu0
        %v2477 = vadd.f32 %v2341, %v2476
        %v2478 = vpop.f32.mrb[0].mxu0
        %2479 = vmatprep.mubr.bf16.mxu0 0
        %2480 = vmatmul.mubr.bf16.gmra.mrb[0].mxu0 %v2311
        %v2481 = vpop.f32.mrb[0].mxu0
        %v2482 = vadd.f32 %v2341, %v2481
        %v2483 = vpop.f32.mrb[0].mxu0
        %v2484 = vpop.f32.mrb[0].mxu0
        %v2485 = vadd.f32 %v2341, %v2484
        %v2486 = vpop.f32.mrb[0].mxu0
        %2487 = vmatprep.mubr.bf16.mxu0 0
        %2488 = vmatmul.mubr.bf16.gmra.mrb[0].mxu0 %v2312
        %v2489 = vpop.f32.mrb[0].mxu0
        %v2490 = vadd.f32 %v2341, %v2489
        %v2491 = vpop.f32.mrb[0].mxu0
        %v2492 = vpop.f32.mrb[0].mxu0
        %v2493 = vadd.f32 %v2341, %v2492
        %v2494 = vpop.f32.mrb[0].mxu0
        %2495 = vmatprep.mubr.bf16.mxu0 0
        %2496 = vmatmul.mubr.bf16.gmra.mrb[0].mxu0 %v2313
        %v2497 = vpop.f32.mrb[0].mxu0
        %v2498 = vadd.f32 %v2341, %v2497
        %v2499 = vpop.f32.mrb[0].mxu0
        %v2500 = vpop.f32.mrb[0].mxu0
        %v2501 = vadd.f32 %v2341, %v2500
        %v2502 = vpop.f32.mrb[0].mxu0
        %2503 = vmatprep.mubr.bf16.mxu0 0
        %2504 = vmatmul.mubr.bf16.gmra.mrb[0].mxu0 %v2314
        %v2505 = vpop.f32.mrb[0].mxu0
        %v2506 = vadd.f32 %v2341, %v2505
        %v2507 = vpop.f32.mrb[0].mxu0
        %v2508 = vpop.f32.mrb[0].mxu0
        %v2509 = vadd.f32 %v2341, %v2508
        %v2510 = vpop.f32.mrb[0].mxu0
        %2511 = vmatprep.mubr.bf16.mxu0 0
        %2512 = vmatmul.mubr.bf16.gmra.mrb[0].mxu0 %v2315
        %v2513 = vpop.f32.mrb[0].mxu0
        %v2514 = vadd.f32 %v2341, %v2513
        %v2515 = vpop.f32.mrb[0].mxu0
        %v2516 = vpop.f32.mrb[0].mxu0
        %v2517 = vadd.f32 %v2341, %v2516
        %v2518 = vpop.f32.mrb[0].mxu0
        %2519 = vmatprep.mubr.bf16.mxu0 0
        %2520 = vmatmul.mubr.bf16.gmra.mrb[0].mxu0 %v2316
        %v2521 = vpop.f32.mrb[0].mxu0
        %v2522 = vadd.f32 %v2341, %v2521
        %v2523 = vpop.f32.mrb[0].mxu0
        %v2524 = vpop.f32.mrb[0].mxu0
        %v2525 = vadd.f32 %v2341, %v2524
        %v2526 = vpop.f32.mrb[0].mxu0
        %2527 = vmatprep.mubr.bf16.mxu0 0
        %2528 = vmatmul.mubr.bf16.gmra.mrb[0].mxu0 %v2317
        %v2529 = vpop.f32.mrb[0].mxu0
        %v2530 = vadd.f32 %v2341, %v2529
        %v2531 = vpop.f32.mrb[0].mxu0
        %v2532 = vpop.f32.mrb[0].mxu0
        %v2533 = vadd.f32 %v2341, %v2532
        %v2534 = vpop.f32.mrb[0].mxu0
        %2535 = vmatprep.mubr.bf16.mxu0 0
        %2536 = vmatmul.mubr.bf16.gmra.mrb[0].mxu0 %v2318
        %v2537 = vpop.f32.mrb[0].mxu0
        %v2538 = vadd.f32 %v2341, %v2537
        %v2539 = vpop.f32.mrb[0].mxu0
        %v2540 = vpop.f32.mrb[0].mxu0
        %v2541 = vadd.f32 %v2341, %v2540
        %v2542 = vpop.f32.mrb[0].mxu0
        %2543 = vmatprep.mubr.bf16.mxu0 0
        %2544 = vmatmul.mubr.bf16.gmra.mrb[0].mxu0 %v2319
        %v2545 = vpop.f32.mrb[0].mxu0
        %v2546 = vadd.f32 %v2341, %v2545
        %v2547 = vpop.f32.mrb[0].mxu0
        %v2548 = vpop.f32.mrb[0].mxu0
        %v2549 = vadd.f32 %v2341, %v2548
        %v2550 = vpop.f32.mrb[0].mxu0
        %2551 = vdwg.mxu0
        %v2552 = vlaneseq
        %v2553 = vand.u32 %v2552, 127
        %vm2554 = vcmp.lt.s32.totalorder %v2553, 16
        %v2555 = vsel %vm2554, %v2426, -1e+30
        %v2556 = vsel %vm2554, %v2429, -1e+30
        %v2557 = vsel %vm2554, %v2434, -1e+30
        %v2558 = vsel %vm2554, %v2437, -1e+30
        %v2559 = vsel %vm2554, %v2442, -1e+30
        %v2560 = vsel %vm2554, %v2445, -1e+30
        %v2561 = vsel %vm2554, %v2450, -1e+30
        %v2562 = vsel %vm2554, %v2453, -1e+30
        %v2563 = vsel %vm2554, %v2458, -1e+30
        %v2564 = vsel %vm2554, %v2461, -1e+30
        %v2565 = vsel %vm2554, %v2466, -1e+30
        %v2566 = vsel %vm2554, %v2469, -1e+30
        %v2567 = vsel %vm2554, %v2474, -1e+30
        %v2568 = vsel %vm2554, %v2477, -1e+30
        %v2569 = vsel %vm2554, %v2482, -1e+30
        %v2570 = vsel %vm2554, %v2485, -1e+30
        %v2571 = vsel %vm2554, %v2490, -1e+30
        %v2572 = vsel %vm2554, %v2493, -1e+30
        %v2573 = vsel %vm2554, %v2498, -1e+30
        %v2574 = vsel %vm2554, %v2501, -1e+30
        %v2575 = vsel %vm2554, %v2506, -1e+30
        %v2576 = vsel %vm2554, %v2509, -1e+30
        %v2577 = vsel %vm2554, %v2514, -1e+30
        %v2578 = vsel %vm2554, %v2517, -1e+30
        %v2579 = vsel %vm2554, %v2522, -1e+30
        %v2580 = vsel %vm2554, %v2525, -1e+30
        %v2581 = vsel %vm2554, %v2530, -1e+30
        %v2582 = vsel %vm2554, %v2533, -1e+30
        %v2583 = vsel %vm2554, %v2538, -1e+30
        %v2584 = vsel %vm2554, %v2541, -1e+30
        %v2585 = vsel %vm2554, %v2546, -1e+30
        %v2586 = vsel %vm2554, %v2549, -1e+30
        %2587 = vmax.xlane.f32.xlu0 %v2555
        %v2588 = vpop.xlane.xlu0 %2587
        %2589 = vmax.xlane.f32.xlu0 %v2556
        %v2590 = vpop.xlane.xlu0 %2589
        %2591 = vmax.xlane.f32.xlu0 %v2557
        %v2592 = vpop.xlane.xlu0 %2591
        %2593 = vmax.xlane.f32.xlu0 %v2558
        %v2594 = vpop.xlane.xlu0 %2593
        %2595 = vmax.xlane.f32.xlu0 %v2559
        %v2596 = vpop.xlane.xlu0 %2595
        %2597 = vmax.xlane.f32.xlu0 %v2560
        %v2598 = vpop.xlane.xlu0 %2597
        %2599 = vmax.xlane.f32.xlu0 %v2561
        %v2600 = vpop.xlane.xlu0 %2599
        %2601 = vmax.xlane.f32.xlu0 %v2562
        %v2602 = vpop.xlane.xlu0 %2601
        %2603 = vmax.xlane.f32.xlu0 %v2563
        %v2604 = vpop.xlane.xlu0 %2603
        %2605 = vmax.xlane.f32.xlu0 %v2564
        %v2606 = vpop.xlane.xlu0 %2605
        %2607 = vmax.xlane.f32.xlu0 %v2565
        %v2608 = vpop.xlane.xlu0 %2607
        %2609 = vmax.xlane.f32.xlu0 %v2566
        %v2610 = vpop.xlane.xlu0 %2609
        %2611 = vmax.xlane.f32.xlu0 %v2567
        %v2612 = vpop.xlane.xlu0 %2611
        %2613 = vmax.xlane.f32.xlu0 %v2568
        %v2614 = vpop.xlane.xlu0 %2613
        %2615 = vmax.xlane.f32.xlu0 %v2569
        %v2616 = vpop.xlane.xlu0 %2615
        %2617 = vmax.xlane.f32.xlu0 %v2570
        %v2618 = vpop.xlane.xlu0 %2617
        %2619 = vmax.xlane.f32.xlu0 %v2571
        %v2620 = vpop.xlane.xlu0 %2619
        %2621 = vmax.xlane.f32.xlu0 %v2572
        %v2622 = vpop.xlane.xlu0 %2621
        %2623 = vmax.xlane.f32.xlu0 %v2573
        %v2624 = vpop.xlane.xlu0 %2623
        %2625 = vmax.xlane.f32.xlu0 %v2574
        %v2626 = vpop.xlane.xlu0 %2625
        %2627 = vmax.xlane.f32.xlu0 %v2575
        %v2628 = vpop.xlane.xlu0 %2627
        %2629 = vmax.xlane.f32.xlu0 %v2576
        %v2630 = vpop.xlane.xlu0 %2629
        %2631 = vmax.xlane.f32.xlu0 %v2577
        %v2632 = vpop.xlane.xlu0 %2631
        %2633 = vmax.xlane.f32.xlu0 %v2578
        %v2634 = vpop.xlane.xlu0 %2633
        %2635 = vmax.xlane.f32.xlu0 %v2579
        %v2636 = vpop.xlane.xlu0 %2635
        %2637 = vmax.xlane.f32.xlu0 %v2580
        %v2638 = vpop.xlane.xlu0 %2637
        %2639 = vmax.xlane.f32.xlu0 %v2581
        %v2640 = vpop.xlane.xlu0 %2639
        %2641 = vmax.xlane.f32.xlu0 %v2582
        %v2642 = vpop.xlane.xlu0 %2641
        %2643 = vmax.xlane.f32.xlu0 %v2583
        %v2644 = vpop.xlane.xlu0 %2643
        %2645 = vmax.xlane.f32.xlu0 %v2584
        %v2646 = vpop.xlane.xlu0 %2645
        %2647 = vmax.xlane.f32.xlu0 %v2585
        %v2648 = vpop.xlane.xlu0 %2647
        %2649 = vmax.xlane.f32.xlu0 %v2586
        %v2650 = vpop.xlane.xlu0 %2649
        %v2651 = vsub.f32 %v2555, %v2588
        %v2652 = vsub.f32 %v2556, %v2590
        %v2653 = vsub.f32 %v2557, %v2592
        %v2654 = vsub.f32 %v2558, %v2594
        %v2655 = vsub.f32 %v2559, %v2596
        %v2656 = vsub.f32 %v2560, %v2598
        %v2657 = vsub.f32 %v2561, %v2600
        %v2658 = vsub.f32 %v2562, %v2602
        %v2659 = vsub.f32 %v2563, %v2604
        %v2660 = vsub.f32 %v2564, %v2606
        %v2661 = vsub.f32 %v2565, %v2608
        %v2662 = vsub.f32 %v2566, %v2610
        %v2663 = vsub.f32 %v2567, %v2612
        %v2664 = vsub.f32 %v2568, %v2614
        %v2665 = vsub.f32 %v2569, %v2616
        %v2666 = vsub.f32 %v2570, %v2618
        %v2667 = vsub.f32 %v2571, %v2620
        %v2668 = vsub.f32 %v2572, %v2622
        %v2669 = vsub.f32 %v2573, %v2624
        %v2670 = vsub.f32 %v2574, %v2626
        %v2671 = vsub.f32 %v2575, %v2628
        %v2672 = vsub.f32 %v2576, %v2630
        %v2673 = vsub.f32 %v2577, %v2632
        %v2674 = vsub.f32 %v2578, %v2634
        %v2675 = vsub.f32 %v2579, %v2636
        %v2676 = vsub.f32 %v2580, %v2638
        %v2677 = vsub.f32 %v2581, %v2640
        %v2678 = vsub.f32 %v2582, %v2642
        %v2679 = vsub.f32 %v2583, %v2644
        %v2680 = vsub.f32 %v2584, %v2646
        %v2681 = vsub.f32 %v2585, %v2648
        %v2682 = vsub.f32 %v2586, %v2650
        %v2683 = vmul.f32 %v2651, 1.442695
        %v2684 = vpow.pop %v2683
        %v2685 = vmul.f32 %v2652, 1.442695
        %v2686 = vpow.pop %v2685
        %v2687 = vmul.f32 %v2653, 1.442695
        %v2688 = vpow.pop %v2687
        %v2689 = vmul.f32 %v2654, 1.442695
        %v2690 = vpow.pop %v2689
        %v2691 = vmul.f32 %v2655, 1.442695
        %v2692 = vpow.pop %v2691
        %v2693 = vmul.f32 %v2656, 1.442695
        %v2694 = vpow.pop %v2693
        %v2695 = vmul.f32 %v2657, 1.442695
        %v2696 = vpow.pop %v2695
        %v2697 = vmul.f32 %v2658, 1.442695
        %v2698 = vpow.pop %v2697
        %v2699 = vmul.f32 %v2659, 1.442695
        %v2700 = vpow.pop %v2699
        %v2701 = vmul.f32 %v2660, 1.442695
        %v2702 = vpow.pop %v2701
        %v2703 = vmul.f32 %v2661, 1.442695
        %v2704 = vpow.pop %v2703
        %v2705 = vmul.f32 %v2662, 1.442695
        %v2706 = vpow.pop %v2705
        %v2707 = vmul.f32 %v2663, 1.442695
        %v2708 = vpow.pop %v2707
        %v2709 = vmul.f32 %v2664, 1.442695
        %v2710 = vpow.pop %v2709
        %v2711 = vmul.f32 %v2665, 1.442695
        %v2712 = vpow.pop %v2711
        %v2713 = vmul.f32 %v2666, 1.442695
        %v2714 = vpow.pop %v2713
        %v2715 = vmul.f32 %v2667, 1.442695
        %v2716 = vpow.pop %v2715
        %v2717 = vmul.f32 %v2668, 1.442695
        %v2718 = vpow.pop %v2717
        %v2719 = vmul.f32 %v2669, 1.442695
        %v2720 = vpow.pop %v2719
        %v2721 = vmul.f32 %v2670, 1.442695
        %v2722 = vpow.pop %v2721
        %v2723 = vmul.f32 %v2671, 1.442695
        %v2724 = vpow.pop %v2723
        %v2725 = vmul.f32 %v2672, 1.442695
        %v2726 = vpow.pop %v2725
        %v2727 = vmul.f32 %v2673, 1.442695
        %v2728 = vpow.pop %v2727
        %v2729 = vmul.f32 %v2674, 1.442695
        %v2730 = vpow.pop %v2729
        %v2731 = vmul.f32 %v2675, 1.442695
        %v2732 = vpow.pop %v2731
        %v2733 = vmul.f32 %v2676, 1.442695
        %v2734 = vpow.pop %v2733
        %v2735 = vmul.f32 %v2677, 1.442695
        %v2736 = vpow.pop %v2735
        %v2737 = vmul.f32 %v2678, 1.442695
        %v2738 = vpow.pop %v2737
        %v2739 = vmul.f32 %v2679, 1.442695
        %v2740 = vpow.pop %v2739
        %v2741 = vmul.f32 %v2680, 1.442695
        %v2742 = vpow.pop %v2741
        %v2743 = vmul.f32 %v2681, 1.442695
        %v2744 = vpow.pop %v2743
        %v2745 = vmul.f32 %v2682, 1.442695
        %v2746 = vpow.pop %v2745
        %2747 = vadd.xlane.f32.xlu0 %v2684
        %v2748 = vpop.xlane.xlu0 %2747
        %2749 = vadd.xlane.f32.xlu0 %v2686
        %v2750 = vpop.xlane.xlu0 %2749
        %2751 = vadd.xlane.f32.xlu0 %v2688
        %v2752 = vpop.xlane.xlu0 %2751
        %2753 = vadd.xlane.f32.xlu0 %v2690
        %v2754 = vpop.xlane.xlu0 %2753
        %2755 = vadd.xlane.f32.xlu0 %v2692
        %v2756 = vpop.xlane.xlu0 %2755
        %2757 = vadd.xlane.f32.xlu0 %v2694
        %v2758 = vpop.xlane.xlu0 %2757
        %2759 = vadd.xlane.f32.xlu0 %v2696
        %v2760 = vpop.xlane.xlu0 %2759
        %2761 = vadd.xlane.f32.xlu0 %v2698
        %v2762 = vpop.xlane.xlu0 %2761
        %2763 = vadd.xlane.f32.xlu0 %v2700
        %v2764 = vpop.xlane.xlu0 %2763
        %2765 = vadd.xlane.f32.xlu0 %v2702
        %v2766 = vpop.xlane.xlu0 %2765
        %2767 = vadd.xlane.f32.xlu0 %v2704
        %v2768 = vpop.xlane.xlu0 %2767
        %2769 = vadd.xlane.f32.xlu0 %v2706
        %v2770 = vpop.xlane.xlu0 %2769
        %2771 = vadd.xlane.f32.xlu0 %v2708
        %v2772 = vpop.xlane.xlu0 %2771
        %2773 = vadd.xlane.f32.xlu0 %v2710
        %v2774 = vpop.xlane.xlu0 %2773
        %2775 = vadd.xlane.f32.xlu0 %v2712
        %v2776 = vpop.xlane.xlu0 %2775
        %2777 = vadd.xlane.f32.xlu0 %v2714
        %v2778 = vpop.xlane.xlu0 %2777
        %2779 = vadd.xlane.f32.xlu0 %v2716
        %v2780 = vpop.xlane.xlu0 %2779
        %2781 = vadd.xlane.f32.xlu0 %v2718
        %v2782 = vpop.xlane.xlu0 %2781
        %2783 = vadd.xlane.f32.xlu0 %v2720
        %v2784 = vpop.xlane.xlu0 %2783
        %2785 = vadd.xlane.f32.xlu0 %v2722
        %v2786 = vpop.xlane.xlu0 %2785
        %2787 = vadd.xlane.f32.xlu0 %v2724
        %v2788 = vpop.xlane.xlu0 %2787
        %2789 = vadd.xlane.f32.xlu0 %v2726
        %v2790 = vpop.xlane.xlu0 %2789
        %2791 = vadd.xlane.f32.xlu0 %v2728
        %v2792 = vpop.xlane.xlu0 %2791
        %2793 = vadd.xlane.f32.xlu0 %v2730
        %v2794 = vpop.xlane.xlu0 %2793
        %2795 = vadd.xlane.f32.xlu0 %v2732
        %v2796 = vpop.xlane.xlu0 %2795
        %2797 = vadd.xlane.f32.xlu0 %v2734
        %v2798 = vpop.xlane.xlu0 %2797
        %2799 = vadd.xlane.f32.xlu0 %v2736
        %v2800 = vpop.xlane.xlu0 %2799
        %2801 = vadd.xlane.f32.xlu0 %v2738
        %v2802 = vpop.xlane.xlu0 %2801
        %2803 = vadd.xlane.f32.xlu0 %v2740
        %v2804 = vpop.xlane.xlu0 %2803
        %2805 = vadd.xlane.f32.xlu0 %v2742
        %v2806 = vpop.xlane.xlu0 %2805
        %2807 = vadd.xlane.f32.xlu0 %v2744
        %v2808 = vpop.xlane.xlu0 %2807
        %2809 = vadd.xlane.f32.xlu0 %v2746
        %v2810 = vpop.xlane.xlu0 %2809
        %v2811 = vrcp.pop %v2748
        %v2812 = vmul.f32 %v2684, %v2811
        %v2813 = vrcp.pop %v2750
        %v2814 = vmul.f32 %v2686, %v2813
        %v2815 = vrcp.pop %v2752
        %v2816 = vmul.f32 %v2688, %v2815
        %v2817 = vrcp.pop %v2754
        %v2818 = vmul.f32 %v2690, %v2817
        %v2819 = vrcp.pop %v2756
        %v2820 = vmul.f32 %v2692, %v2819
        %v2821 = vrcp.pop %v2758
        %v2822 = vmul.f32 %v2694, %v2821
        %v2823 = vrcp.pop %v2760
        %v2824 = vmul.f32 %v2696, %v2823
        %v2825 = vrcp.pop %v2762
        %v2826 = vmul.f32 %v2698, %v2825
        %v2827 = vrcp.pop %v2764
        %v2828 = vmul.f32 %v2700, %v2827
        %v2829 = vrcp.pop %v2766
        %v2830 = vmul.f32 %v2702, %v2829
        %v2831 = vrcp.pop %v2768
        %v2832 = vmul.f32 %v2704, %v2831
        %v2833 = vrcp.pop %v2770
        %v2834 = vmul.f32 %v2706, %v2833
        %v2835 = vrcp.pop %v2772
        %v2836 = vmul.f32 %v2708, %v2835
        %v2837 = vrcp.pop %v2774
        %v2838 = vmul.f32 %v2710, %v2837
        %v2839 = vrcp.pop %v2776
        %v2840 = vmul.f32 %v2712, %v2839
        %v2841 = vrcp.pop %v2778
        %v2842 = vmul.f32 %v2714, %v2841
        %v2843 = vrcp.pop %v2780
        %v2844 = vmul.f32 %v2716, %v2843
        %v2845 = vrcp.pop %v2782
        %v2846 = vmul.f32 %v2718, %v2845
        %v2847 = vrcp.pop %v2784
        %v2848 = vmul.f32 %v2720, %v2847
        %v2849 = vrcp.pop %v2786
        %v2850 = vmul.f32 %v2722, %v2849
        %v2851 = vrcp.pop %v2788
        %v2852 = vmul.f32 %v2724, %v2851
        %v2853 = vrcp.pop %v2790
        %v2854 = vmul.f32 %v2726, %v2853
        %v2855 = vrcp.pop %v2792
        %v2856 = vmul.f32 %v2728, %v2855
        %v2857 = vrcp.pop %v2794
        %v2858 = vmul.f32 %v2730, %v2857
        %v2859 = vrcp.pop %v2796
        %v2860 = vmul.f32 %v2732, %v2859
        %v2861 = vrcp.pop %v2798
        %v2862 = vmul.f32 %v2734, %v2861
        %v2863 = vrcp.pop %v2800
        %v2864 = vmul.f32 %v2736, %v2863
        %v2865 = vrcp.pop %v2802
        %v2866 = vmul.f32 %v2738, %v2865
        %v2867 = vrcp.pop %v2804
        %v2868 = vmul.f32 %v2740, %v2867
        %v2869 = vrcp.pop %v2806
        %v2870 = vmul.f32 %v2742, %v2869
        %v2871 = vrcp.pop %v2808
        %v2872 = vmul.f32 %v2744, %v2871
        %v2873 = vrcp.pop %v2810
        %v2874 = vmul.f32 %v2746, %v2873
        %2875 = vst [vmem:[%s448] sm:$0xff] %v2812
        %2876 = vst [vmem:[%s448 + $0x8] sm:$0xff] %v2814
        %2877 = vst [vmem:[%s448 + $0x10] sm:$0xff] %v2816
        %2878 = vst [vmem:[%s448 + $0x18] sm:$0xff] %v2818
        %2879 = vst [vmem:[%s448 + $0x20] sm:$0xff] %v2820
        %2880 = vst [vmem:[%s448 + $0x28] sm:$0xff] %v2822
        %2881 = vst [vmem:[%s448 + $0x30] sm:$0xff] %v2824
        %2882 = vst [vmem:[%s448 + $0x38] sm:$0xff] %v2826
        %2883 = vst [vmem:[%s448 + $0x40] sm:$0xff] %v2828
        %2884 = vst [vmem:[%s448 + $0x48] sm:$0xff] %v2830
        %2885 = vst [vmem:[%s448 + $0x50] sm:$0xff] %v2832
        %2886 = vst [vmem:[%s448 + $0x58] sm:$0xff] %v2834
        %2887 = vst [vmem:[%s448 + $0x60] sm:$0xff] %v2836
        %2888 = vst [vmem:[%s448 + $0x68] sm:$0xff] %v2838
        %2889 = vst [vmem:[%s448 + $0x70] sm:$0xff] %v2840
        %2890 = vst [vmem:[%s448 + $0x78] sm:$0xff] %v2842
        %2891 = vst [vmem:[%s448 + $0x80] sm:$0xff] %v2844
        %2892 = vst [vmem:[%s448 + $0x88] sm:$0xff] %v2846
        %2893 = vst [vmem:[%s448 + $0x90] sm:$0xff] %v2848
        %2894 = vst [vmem:[%s448 + $0x98] sm:$0xff] %v2850
        %2895 = vst [vmem:[%s448 + $0xa0] sm:$0xff] %v2852
        %2896 = vst [vmem:[%s448 + $0xa8] sm:$0xff] %v2854
        %2897 = vst [vmem:[%s448 + $0xb0] sm:$0xff] %v2856
        %2898 = vst [vmem:[%s448 + $0xb8] sm:$0xff] %v2858
        %2899 = vst [vmem:[%s448 + $0xc0] sm:$0xff] %v2860
        %2900 = vst [vmem:[%s448 + $0xc8] sm:$0xff] %v2862
        %2901 = vst [vmem:[%s448 + $0xd0] sm:$0xff] %v2864
        %2902 = vst [vmem:[%s448 + $0xd8] sm:$0xff] %v2866
        %2903 = vst [vmem:[%s448 + $0xe0] sm:$0xff] %v2868
        %2904 = vst [vmem:[%s448 + $0xe8] sm:$0xff] %v2870
        %2905 = vst [vmem:[%s448 + $0xf0] sm:$0xff] %v2872
        %2906 = vst [vmem:[%s448 + $0xf8] sm:$0xff] %v2874
        %s2907 = sand.u32 %s274, 1
        %s2908 = scalar_lea.sflag [#allocation4], %s2907
        %s2909 = sand.u32 %s274, 1
        %s2910 = smul.addr %s2909, 256
        %s2911 = scalar_lea.vmem [#allocation10], %s2910
        // Predicated region
        $region81: #{tpu_custom_call.1} parent=63 // pred_check
          %p2912 = pneg %p284
        $region82: #{tpu_custom_call.1} parent=63 // pred_check_branch
          %2914 = sbr.rel (%p2912) target = $region84
        $region83: #{tpu_custom_call.1} parent=63 // pred_region
          %s2915 = smul.u32 32, %s30
          %s2917 = ssub.s32 4096, 4096
          %2918 = vsyncadd %s2908, %s2917
          %s2919 = smul.addr %s2915, 128
          %s2920 = scalar_lea.hbm %s11, %s2919
          %s2921 = sshll.u32 %s2911, 4
          %s2922 = int_to_ptr.vmem [resolvable:$true] %s2921
          %2927 = dma.vmem_to_hbm [thread:$0]  %s2922, 4096, %s2920, %s2908, 128, 128, 8
        $region84: #{tpu_custom_call.1} parent=63 // pred_fallthru
          _
      $region64: #{tpu_custom_call.1} parent=5 // pred_fallthru
        _
      %p2928 = scmp.le.s32.totalorder 2, %s25
      // Predicated region
      $region85: #{tpu_custom_call.1} parent=5 // pred_check
        %p2929 = pneg %p2928
      $region86: #{tpu_custom_call.1} parent=5 // pred_check_branch
        %2931 = sbr.rel (%p2929) target = $region88
      $region87: #{tpu_custom_call.1} parent=5 // pred_region
        %s2932 = ssub.s32 %s25, 2
        // Predicated region
        $region89: #{tpu_custom_call.1} parent=87 // pred_check
          %p2933 = pneg %p290
        $region90: #{tpu_custom_call.1} parent=87 // pred_check_branch
          %2935 = sbr.rel (%p2933) target = $region92
        $region91: #{tpu_custom_call.1} parent=87 // pred_region
          %s2936 = sand.u32 %s275, 1
          %s2937 = scalar_lea.sflag [#allocation4], %s2936
          %s2938 = sand.u32 %s275, 1
          %s2939 = smul.addr %s2938, 256
          %s2940 = scalar_lea.vmem [#allocation10], %s2939
          %2941 = dma.done %s2937, 4096
        $region92: #{tpu_custom_call.1} parent=87 // pred_fallthru
          _
      $region88: #{tpu_custom_call.1} parent=5 // pred_fallthru
        _
    $region6: #{tpu_custom_call.1} parent=1 // loop_footer
      %s29 = sadd.s32 1, %s25
    $region7: #{tpu_custom_call.1} parent=1 // loop_footer_branch
      %24 = sbr.rel target = $region3
    $region8: #{tpu_custom_call.1} parent=1 // loop_exit
      _
    %2942 = vsyncpa [#allocation3], 1
    %s2943 = scalar_lea.sflag [#allocation3], 1
    %2944 = vsyncpa %s2943, 1
    %2945 = vsyncpa [#allocation6], 1
    %2946 = vsyncpa [#allocation9], 1
    %2947 = vsyncpa [#allocation4], 1
    %s2948 = scalar_lea.sflag [#allocation4], 1
    %2949 = vsyncpa %s2948, 1

</llo_original>
